<compile_context>
chip_gen: v7x
topology: tpu7x:2x2x1
jax: 0.10.0
libtpu: 0.0.40
codegen_flags: <defaults>
</compile_context>

<pallas_src>
import functools

import jax
import jax.numpy as jnp
from jax import lax
from jax.experimental import pallas as pl
from jax.experimental.pallas import tpu as pltpu

EPS = 1e-5
LANE = 128


# --------------------------- VMEM limit (per chip) ---------------------------

@functools.lru_cache(maxsize=None)
def _vmem_limit_bytes():
    """Generation-aware scoped-VMEM request: ~96 MiB on v5e/v6e (128 MiB
    physical), 48 MiB on v7x (64 MiB physical); safe 48 MiB fallback."""
    try:
        cap = int(getattr(pltpu.get_tpu_info(), "vmem_capacity_bytes", 0) or 0)
        if cap > 0:
            return int(max(32 << 20, min(cap * 3 // 4, 112 << 20)))
    except Exception:
        pass
    return 48 << 20


def _cparams(sem):
    return pltpu.CompilerParams(dimension_semantics=sem,
                                vmem_limit_bytes=_vmem_limit_bytes())


# ------------------------------ kernel helpers -------------------------------

def _bn_terms(st, g, b, inv_count):
    """Per-channel (scale, shift) so bn(y) = y*scale + shift, computed from the
    (16, C) sublane-partial stats (rows 0:8 = sum partials, 8:16 = sumsq)."""
    s1 = jnp.sum(st[0:8, :], axis=0, keepdims=True)
    s2 = jnp.sum(st[8:16, :], axis=0, keepdims=True)
    mean = s1 * inv_count
    var = jnp.maximum(s2 * inv_count - mean * mean, 0.0)
    scale = g * lax.rsqrt(var + EPS)            # rsqrt -> EUP slot
    shift = b - mean * scale
    return scale, shift


def _accumulate_stats(acc_ref, y):
    """Accumulate per-channel sum / sumsq of y (f32) as (8, C) sublane
    partials: pure VPU vreg adds + aligned full-tile stores."""
    yr = y.reshape(-1, 8, y.shape[-1])
    acc_ref[0:8, :] += jnp.sum(yr, axis=0)
    acc_ref[8:16, :] += jnp.sum(yr * yr, axis=0)


# ----------------------------- Pallas kernels --------------------------------

def _make_matmul_stats_kernel():
    """bf16 matmul tile (f32 accumulate) + per-channel stats.
    M-padding rows of the LHS are exact zeros -> no row mask needed."""

    def kernel(x_ref, w_ref, y_ref, st_ref, acc_ref):
        i = pl.program_id(0)

        @pl.when(i == 0)
        def _init():
            acc_ref[...] = jnp.zeros_like(acc_ref)

        y = jnp.dot(x_ref[...], w_ref[...], preferred_element_type=jnp.float32)
        y_ref[...] = y.astype(y_ref.dtype)
        _accumulate_stats(acc_ref, y)

        @pl.when(i == pl.num_programs(0) - 1)
        def _fin():
            st_ref[...] = acc_ref[...]

    return kernel


def _make_bn_matmul_stats_kernel(tile_m, true_m, inv_count_in):
    """Fused: BN+ReLU of the previous stage (raw bf16 output + its stats),
    then bf16 matmul + stats for this stage.  Padded M rows become
    relu(shift) after the pre-BN, so they are excluded from the stats; the
    mask is pl.when-gated to the single partial boundary tile."""

    def kernel(x_ref, sti_ref, gi_ref, bi_ref, w_ref, y_ref, st_ref, acc_ref):
        i = pl.program_id(0)

        @pl.when(i == 0)
        def _init():
            acc_ref[...] = jnp.zeros_like(acc_ref)

        sc, sh = _bn_terms(sti_ref[...], gi_ref[...], bi_ref[...], inv_count_in)
        act = jnp.maximum(x_ref[...].astype(jnp.float32) * sc + sh, 0.0)
        y = jnp.dot(act.astype(jnp.bfloat16), w_ref[...],
                    preferred_element_type=jnp.float32)
        y_ref[...] = y.astype(y_ref.dtype)

        is_full = (i + 1) * tile_m <= true_m

        @pl.when(is_full)
        def _full():
            _accumulate_stats(acc_ref, y)

        @pl.when(jnp.logical_not(is_full))
        def _partial():
            row = i * tile_m + lax.broadcasted_iota(jnp.int32, (tile_m, 1), 0)
            _accumulate_stats(acc_ref, jnp.where(row < true_m, y, 0.0))

        @pl.when(i == pl.num_programs(0) - 1)
        def _fin():
            st_ref[...] = acc_ref[...]

    return kernel


def _make_bn_relu_kernel(inv_count):
    def kernel(y_ref, st_ref, g_ref, b_ref, o_ref):
        sc, sh = _bn_terms(st_ref[...], g_ref[...], b_ref[...], inv_count)
        o_ref[...] = jnp.maximum(y_ref[...].astype(jnp.float32) * sc + sh,
                                 0.0).astype(o_ref.dtype)
    return kernel


def _make_final_proj_kernel(inv_count):
    def kernel(y3_ref, st3_ref, g3_ref, b3_ref,
               ys_ref, sts_ref, gs_ref, bs_ref, o_ref):
        sc3, sh3 = _bn_terms(st3_ref[...], g3_ref[...], b3_ref[...], inv_count)
        scs, shs = _bn_terms(sts_ref[...], gs_ref[...], bs_ref[...], inv_count)
        r = y3_ref[...].astype(jnp.float32) * sc3 + sh3
        s = ys_ref[...].astype(jnp.float32) * scs + shs
        o_ref[...] = jnp.maximum(r + s, 0.0)
    return kernel


def _make_final_id_kernel(inv_count):
    def kernel(y3_ref, st3_ref, g3_ref, b3_ref, sc_ref, o_ref):
        sc3, sh3 = _bn_terms(st3_ref[...], g3_ref[...], b3_ref[...], inv_count)
        r = y3_ref[...].astype(jnp.float32) * sc3 + sh3
        o_ref[...] = jnp.maximum(r + sc_ref[...].astype(jnp.float32), 0.0)
    return kernel


# --------------------------- pallas_call wrappers -----------------------------

def _matmul_stats(x2d, w, tile_m):
    """x2d: (Mpad, K) bf16, w: (K, C) bf16 -> (Y bf16 (Mpad, C), stats f32 (16, C))."""
    mp, k = x2d.shape
    c = w.shape[1]
    return pl.pallas_call(
        _make_matmul_stats_kernel(),
        out_shape=(jax.ShapeDtypeStruct((mp, c), jnp.bfloat16),
                   jax.ShapeDtypeStruct((16, c), jnp.float32)),
        grid=(mp // tile_m,),
        in_specs=[pl.BlockSpec((tile_m, k), lambda i: (i, 0)),
                  pl.BlockSpec((k, c), lambda i: (0, 0))],
        out_specs=(pl.BlockSpec((tile_m, c), lambda i: (i, 0)),
                   pl.BlockSpec((16, c), lambda i: (0, 0))),
        scratch_shapes=[pltpu.VMEM((16, c), jnp.float32)],
        compiler_params=_cparams(("arbitrary",)),   # stats accumulate across M
    )(x2d, w)


def _bn_matmul_stats(x2d, st_in, g_in, b_in, w, tile_m, true_m, count_in):
    """Fused pre-BN(+ReLU) -> matmul -> stats (used for the stage-3 conv)."""
    mp, k = x2d.shape
    c = w.shape[1]
    row_in = pl.BlockSpec((tile_m, k), lambda i: (i, 0))
    st_sp = pl.BlockSpec((16, k), lambda i: (0, 0))
    vec = pl.BlockSpec((1, k), lambda i: (0, 0))
    return pl.pallas_call(
        _make_bn_matmul_stats_kernel(tile_m, true_m, 1.0 / count_in),
        out_shape=(jax.ShapeDtypeStruct((mp, c), jnp.bfloat16),
                   jax.ShapeDtypeStruct((16, c), jnp.float32)),
        grid=(mp // tile_m,),
        in_specs=[row_in, st_sp, vec, vec,
                  pl.BlockSpec((k, c), lambda i: (0, 0))],
        out_specs=(pl.BlockSpec((tile_m, c), lambda i: (i, 0)),
                   pl.BlockSpec((16, c), lambda i: (0, 0))),
        scratch_shapes=[pltpu.VMEM((16, c), jnp.float32)],
        compiler_params=_cparams(("arbitrary",)),
    )(x2d, st_in, g_in, b_in, w)


def _bn_relu(y, stats, gamma, beta, count, tile_m, c_pad, out_dtype):
    mp = y.shape[0]
    row = pl.BlockSpec((tile_m, c_pad), lambda i: (i, 0))
    st = pl.BlockSpec((16, c_pad), lambda i: (0, 0))
    vec = pl.BlockSpec((1, c_pad), lambda i: (0, 0))
    return pl.pallas_call(
        _make_bn_relu_kernel(1.0 / count),
        out_shape=jax.ShapeDtypeStruct((mp, c_pad), out_dtype),
        grid=(mp // tile_m,),
        in_specs=[row, st, vec, vec],
        out_specs=row,
        compiler_params=_cparams(("parallel",)),
    )(y, stats, _pad_vec(gamma, c_pad, 1.0), _pad_vec(beta, c_pad, 0.0))


def _final_proj(y3, st3, g3, b3, ys, sts, gs, bs, count, tile_m, c_pad):
    mp = y3.shape[0]
    row = pl.BlockSpec((tile_m, c_pad), lambda i: (i, 0))
    st = pl.BlockSpec((16, c_pad), lambda i: (0, 0))
    vec = pl.BlockSpec((1, c_pad), lambda i: (0, 0))
    return pl.pallas_call(
        _make_final_proj_kernel(1.0 / count),
        out_shape=jax.ShapeDtypeStruct((mp, c_pad), jnp.float32),
        grid=(mp // tile_m,),
        in_specs=[row, st, vec, vec, row, st, vec, vec],
        out_specs=row,
        compiler_params=_cparams(("parallel",)),
    )(y3, st3, _pad_vec(g3, c_pad, 1.0), _pad_vec(b3, c_pad, 0.0),
      ys, sts, _pad_vec(gs, c_pad, 1.0), _pad_vec(bs, c_pad, 0.0))


def _final_id(y3, st3, g3, b3, sc, count, tile_m, c_pad):
    mp = y3.shape[0]
    row = pl.BlockSpec((tile_m, c_pad), lambda i: (i, 0))
    st = pl.BlockSpec((16, c_pad), lambda i: (0, 0))
    vec = pl.BlockSpec((1, c_pad), lambda i: (0, 0))
    return pl.pallas_call(
        _make_final_id_kernel(1.0 / count),
        out_shape=jax.ShapeDtypeStruct((mp, c_pad), jnp.float32),
        grid=(mp // tile_m,),
        in_specs=[row, st, vec, vec, row],
        out_specs=row,
        compiler_params=_cparams(("parallel",)),
    )(y3, st3, _pad_vec(g3, c_pad, 1.0), _pad_vec(b3, c_pad, 0.0), sc)


# ------------------------------- glue (JAX) -----------------------------------

def _ceil_to(x, m):
    return ((x + m - 1) // m) * m


def _pick_tile(m, tile_max):
    """Largest 8-aligned tile <= tile_max that doesn't overshoot tiny M."""
    return max(8, min(tile_max, _ceil_to(m, 8)))


def _pad_rows(a, m_pad):
    return jnp.pad(a, ((0, m_pad - a.shape[0]), (0, 0)))


def _pad_channels(x_nhwc, c_pad):
    return jnp.pad(x_nhwc, ((0, 0), (0, 0), (0, 0), (0, c_pad - x_nhwc.shape[-1])))


def _pad_vec(v, c_pad, fill):
    return jnp.pad(v, (0, c_pad - v.shape[0]),
                   constant_values=fill).reshape(1, c_pad).astype(jnp.float32)


def _w_mat(w_oihw, o_pad, i_pad):
    """OIHW weight (zero-padded on O and I) -> (kh*kw*i_pad, o_pad) matrix."""
    o, i, kh, kw = w_oihw.shape
    wp = jnp.pad(w_oihw, ((0, o_pad - o), (0, i_pad - i), (0, 0), (0, 0)))
    return jnp.transpose(wp, (2, 3, 1, 0)).reshape(kh * kw * i_pad, o_pad)


def _im2col(x_nhwc, k, stride, pad):
    # TODO(synk): move this into the stage-2 kernel (halo tiles / 9 shifted
    #             matmuls) to avoid the 9x HBM patch materialization.
    n, h, w, c = x_nhwc.shape
    xp = jnp.pad(x_nhwc, ((0, 0), (pad, pad), (pad, pad), (0, 0)))
    ho = (h + 2 * pad - k) // stride + 1
    wo = (w + 2 * pad - k) // stride + 1
    cols = []
    for ky in range(k):
        for kx in range(k):
            cols.append(xp[:, ky:ky + stride * ho:stride,
                           kx:kx + stride * wo:stride, :])
    patches = jnp.stack(cols, axis=3).reshape(n * ho * wo, k * k * c)
    return patches, ho, wo


@functools.partial(jax.jit, static_argnums=(2, 3))
def bottleneck_forward(x_nchw, params, stride=1, tile_m=512):
    """Pallas implementation of BottleNeck.forward. Input/output NCHW f32."""
    n, cin, h, w = x_nchw.shape
    cmid = params["w1"].shape[0]
    cout = params["w3"].shape[0]
    cin_p = _ceil_to(cin, LANE)
    cmid_p = _ceil_to(cmid, LANE)
    cout_p = _ceil_to(cout, LANE)

    x = jnp.transpose(x_nchw, (0, 2, 3, 1)).astype(jnp.float32)   # NHWC
    x = _pad_channels(x, cin_p)

    # ---- stage 1: 1x1 conv + BN + ReLU --------------------------------------
    m1 = n * h * w
    tile1 = _pick_tile(m1, tile_m)
    m1p = _ceil_to(m1, tile1)
    x2d = _pad_rows(x.reshape(m1, cin_p), m1p).astype(jnp.bfloat16)
    w1 = _w_mat(params["w1"], cmid_p, cin_p).astype(jnp.bfloat16)
    y1, st1 = _matmul_stats(x2d, w1, tile1)
    z1 = _bn_relu(y1, st1, params["g1"], params["b1"], m1, tile1,
                  cmid_p, jnp.bfloat16)

    # ---- stage 2: 3x3 conv (stride, pad=1) -> raw y2 + stats -----------------
    z1_nhwc = z1[:m1].reshape(n, h, w, cmid_p)
    p2, ho, wo = _im2col(z1_nhwc, 3, stride, 1)            # bf16 patch matrix
    m2 = n * ho * wo
    tile2 = _pick_tile(m2, tile_m)
    m2p = _ceil_to(m2, tile2)
    p2 = _pad_rows(p2, m2p)
    w2 = _w_mat(params["w2"], cmid_p, cmid_p).astype(jnp.bfloat16)
    y2, st2 = _matmul_stats(p2, w2, tile2)

    # ---- stage 3: BN2+ReLU fused into the 1x1 expansion conv + stats --------
    w3 = _w_mat(params["w3"], cout_p, cmid_p).astype(jnp.bfloat16)
    y3, st3 = _bn_matmul_stats(
        y2, st2, _pad_vec(params["g2"], cmid_p, 1.0),
        _pad_vec(params["b2"], cmid_p, 0.0), w3, tile2, m2, m2)

    # ---- shortcut + BN3-apply + add + ReLU -----------------------------------
    needs_proj = (stride != 1) or (cin != cout)
    if needs_proj:
        xs = x[:, ::stride, ::stride, :].reshape(m2, cin_p)
        xs = _pad_rows(xs, m2p).astype(jnp.bfloat16)
        ws = _w_mat(params["ws"], cout_p, cin_p).astype(jnp.bfloat16)
        ys, sts = _matmul_stats(xs, ws, tile2)
        out = _final_proj(y3, st3, params["g3"], params["b3"],
                          ys, sts, params["gs"], params["bs"],
                          m2, tile2, cout_p)
    else:
        sc = _pad_rows(x.reshape(m1, cin_p), m2p).astype(jnp.bfloat16)
        out = _final_id(y3, st3, params["g3"], params["b3"], sc,
                        m2, tile2, cout_p)

    out = out[:m2, :cout].reshape(n, ho, wo, cout)
    return jnp.transpose(out, (0, 3, 1, 2))                # -> NCHW (module API)


# --------------------------- pure-JAX reference --------------------------------

def _conv_ref(x, w, stride, pad):
    return lax.conv_general_dilated(
        x, w, (stride, stride), [(pad, pad), (pad, pad)],
        dimension_numbers=("NCHW", "OIHW", "NCHW"))


def _bn_ref(y, g, b):
    mean = jnp.mean(y, axis=(0, 2, 3), keepdims=True)
    var = jnp.var(y, axis=(0, 2, 3), keepdims=True)
    return (g.reshape(1, -1, 1, 1) * (y - mean) * lax.rsqrt(var + EPS)
            + b.reshape(1, -1, 1, 1))


def reference(x, params, stride):
    cin = x.shape[1]
    cout = params["w3"].shape[0]
    y = jnp.maximum(_bn_ref(_conv_ref(x, params["w1"], 1, 0),
                            params["g1"], params["b1"]), 0.0)
    y = jnp.maximum(_bn_ref(_conv_ref(y, params["w2"], stride, 1),
                            params["g2"], params["b2"]), 0.0)
    y = _bn_ref(_conv_ref(y, params["w3"], 1, 0), params["g3"], params["b3"])
    if stride != 1 or cin != cout:
        sc = _bn_ref(_conv_ref(x, params["ws"], stride, 0),
                     params["gs"], params["bs"])
    else:
        sc = x
    return jnp.maximum(y + sc, 0.0)


# ----------------------------------- main ---------------------------------------

if __name__ == "__main__":
    root = jax.random.PRNGKey(0)

    def make_params(key, cin, cmid, cout, needs_proj):
        ks = jax.random.split(key, 12)

        def bnp(kg, kb, c):
            return (1.0 + 0.1 * jax.random.normal(kg, (c,), jnp.float32),
                    0.1 * jax.random.normal(kb, (c,), jnp.float32))

        g1, b1 = bnp(ks[1], ks[2], cmid)
        g2, b2 = bnp(ks[4], ks[5], cmid)
        g3, b3 = bnp(ks[7], ks[8], cout)
        p = {
            "w1": 0.1 * jax.random.normal(ks[0], (cmid, cin, 1, 1), jnp.float32),
            "g1": g1, "b1": b1,
            "w2": 0.1 * jax.random.normal(ks[3], (cmid, cmid, 3, 3), jnp.float32),
            "g2": g2, "b2": b2,
            "w3": 0.1 * jax.random.normal(ks[6], (cout, cmid, 1, 1), jnp.float32),
            "g3": g3, "b3": b3,
        }
        if needs_proj:
            gs, bs = bnp(ks[10], ks[11], cout)
            p["ws"] = 0.1 * jax.random.normal(ks[9], (cout, cin, 1, 1),
                                              jnp.float32)
            p["gs"] = gs
            p["bs"] = bs
        return p

    configs = [
        # (N, Cin, H, W, out_channels, stride); BottleNeck Cout = 4*out_channels
        (2, 4, 16, 16, 4, 2),    # projection shortcut (channel change + stride)
        (2, 16, 16, 16, 4, 1),   # identity shortcut (Cin == 4*out_channels)
        (2, 8, 24, 24, 4, 1),    # stride-1 projection; exercises the partial
                                 # boundary tile of the fused stage-3 stats
    ]

    for idx, (N, Cin, H, W, oc, stride) in enumerate(configs):
        kp, kx = jax.random.split(jax.random.fold_in(root, idx))
        cmid, cout = oc, oc * 4
        needs_proj = (stride != 1) or (Cin != cout)
        params = make_params(kp, Cin, cmid, cout, needs_proj)
        x = jax.random.normal(kx, (N, Cin, H, W), jnp.float32)

        out = jax.block_until_ready(bottleneck_forward(x, params, stride))
        ref = jax.block_until_ready(reference(x, params, stride))

        ho = (H - 1) // stride + 1
        assert out.shape == ref.shape == (N, cout, ho, ho), (out.shape, ref.shape)
        max_err = float(jnp.max(jnp.abs(out - ref)))
        # bf16 MXU operands + bf16 intermediate tensors vs f32 reference
        assert jnp.allclose(out, ref, atol=5e-2, rtol=5e-2), max_err

    print("KERNEL_OK")
</pallas_src>

<mosaic_0001>
module attributes {stable_mosaic.version = 11 : i64} {
  func.func @kernel(%arg0: i32, %arg1: memref<512x128xbf16, #tpu.memory_space<vmem>>, %arg2: memref<128x128xbf16, #tpu.memory_space<vmem>>, %arg3: memref<512x128xbf16, #tpu.memory_space<vmem>>, %arg4: memref<16x128xf32, #tpu.memory_space<vmem>>, %arg5: memref<16x128xf32, #tpu.memory_space<vmem>>) attributes {dimension_semantics = [#tpu.dimension_semantics<arbitrary>], iteration_bounds = array<i64: 1>, scalar_prefetch = 0 : i64, scratch_operands = 1 : i64, tpu.core_type = #tpu.core_type<tc>, window_params = [{transform_indices = @transform_0, window_bounds = array<i64: 512, 128>}, {pipeline_mode = #tpu.pipeline_mode<synchronous>, transform_indices = @transform_1, window_bounds = array<i64: 128, 128>}, {transform_indices = @transform_2, window_bounds = array<i64: 512, 128>}, {pipeline_mode = #tpu.pipeline_mode<synchronous>, transform_indices = @transform_3, window_bounds = array<i64: 16, 128>}]} {
    %c0_i32 = arith.constant 0 : i32
    %0 = arith.cmpi eq, %arg0, %c0_i32 : i32
    %1 = arith.extui %0 : i1 to i32
    %c0_i32_0 = arith.constant 0 : i32
    %2 = arith.cmpi ne, %1, %c0_i32_0 : i32
    scf.if %2 {
      %cst_17 = arith.constant 0.000000e+00 : f32
      %21 = vector.broadcast %cst_17 : f32 to vector<16x128xf32>
      %c0_18 = arith.constant 0 : index
      %c0_19 = arith.constant 0 : index
      %22 = vector.load %arg5[%c0_18, %c0_19] : memref<16x128xf32, #tpu.memory_space<vmem>>, vector<16x128xf32>
      tpu.vector_store %arg5[%c0_18, %c0_19], %21 {strides = array<i32>} : memref<16x128xf32, #tpu.memory_space<vmem>>, vector<16x128xf32>,
    } else {
    }
    %c0 = arith.constant 0 : index
    %c0_1 = arith.constant 0 : index
    %3 = vector.load %arg1[%c0, %c0_1] : memref<512x128xbf16, #tpu.memory_space<vmem>>, vector<512x128xbf16>
    %c0_2 = arith.constant 0 : index
    %c0_3 = arith.constant 0 : index
    %4 = vector.load %arg2[%c0_2, %c0_3] : memref<128x128xbf16, #tpu.memory_space<vmem>>, vector<128x128xbf16>
    %cst = arith.constant dense<0.000000e+00> : vector<512x128xf32>
    %5 = tpu.matmul %3, %4, %cst {dimension_numbers = #tpu.dot_dimension_numbers<[1], [0], [0], [1], [0, 0, 1, 1], [], []>} : vector<512x128xbf16>, vector<128x128xbf16>, vector<512x128xf32> -> vector<512x128xf32>
    %6 = arith.truncf %5 : vector<512x128xf32> to vector<512x128xbf16>
    %c0_4 = arith.constant 0 : index
    %c0_5 = arith.constant 0 : index
    %7 = vector.load %arg3[%c0_4, %c0_5] : memref<512x128xbf16, #tpu.memory_space<vmem>>, vector<512x128xbf16>
    tpu.vector_store %arg3[%c0_4, %c0_5], %6 {strides = array<i32>} : memref<512x128xbf16, #tpu.memory_space<vmem>>, vector<512x128xbf16>,
    %8 = vector.shape_cast %5 : vector<512x128xf32> to vector<64x8x128xf32>
    %c0_6 = arith.constant 0 : index
    %c0_7 = arith.constant 0 : index
    %9 = vector.load %arg5[%c0_6, %c0_7] : memref<16x128xf32, #tpu.memory_space<vmem>>, vector<8x128xf32>
    %cst_8 = arith.constant dense<0.000000e+00> : vector<8x128xf32>
    %10 = vector.multi_reduction <add>, %8, %cst_8 [0] : vector<64x8x128xf32> to vector<8x128xf32>
    %11 = arith.addf %9, %10 : vector<8x128xf32>
    %c0_9 = arith.constant 0 : index
    %c0_10 = arith.constant 0 : index
    %12 = vector.load %arg5[%c0_9, %c0_10] : memref<16x128xf32, #tpu.memory_space<vmem>>, vector<8x128xf32>
    tpu.vector_store %arg5[%c0_9, %c0_10], %11 {strides = array<i32>} : memref<16x128xf32, #tpu.memory_space<vmem>>, vector<8x128xf32>,
    %c8 = arith.constant 8 : index
    %c0_11 = arith.constant 0 : index
    %13 = vector.load %arg5[%c8, %c0_11] : memref<16x128xf32, #tpu.memory_space<vmem>>, vector<8x128xf32>
    %14 = arith.mulf %8, %8 : vector<64x8x128xf32>
    %cst_12 = arith.constant dense<0.000000e+00> : vector<8x128xf32>
    %15 = vector.multi_reduction <add>, %14, %cst_12 [0] : vector<64x8x128xf32> to vector<8x128xf32>
    %16 = arith.addf %13, %15 : vector<8x128xf32>
    %c8_13 = arith.constant 8 : index
    %c0_14 = arith.constant 0 : index
    %17 = vector.load %arg5[%c8_13, %c0_14] : memref<16x128xf32, #tpu.memory_space<vmem>>, vector<8x128xf32>
    tpu.vector_store %arg5[%c8_13, %c0_14], %16 {strides = array<i32>} : memref<16x128xf32, #tpu.memory_space<vmem>>, vector<8x128xf32>,
    %c0_i32_15 = arith.constant 0 : i32
    %18 = arith.cmpi eq, %arg0, %c0_i32_15 : i32
    %19 = arith.extui %18 : i1 to i32
    %c0_i32_16 = arith.constant 0 : i32
    %20 = arith.cmpi ne, %19, %c0_i32_16 : i32
    scf.if %20 {
      %c0_17 = arith.constant 0 : index
      %c0_18 = arith.constant 0 : index
      %21 = vector.load %arg5[%c0_17, %c0_18] : memref<16x128xf32, #tpu.memory_space<vmem>>, vector<16x128xf32>
      %c0_19 = arith.constant 0 : index
      %c0_20 = arith.constant 0 : index
      %22 = vector.load %arg4[%c0_19, %c0_20] : memref<16x128xf32, #tpu.memory_space<vmem>>, vector<16x128xf32>
      tpu.vector_store %arg4[%c0_19, %c0_20], %21 {strides = array<i32>} : memref<16x128xf32, #tpu.memory_space<vmem>>, vector<16x128xf32>,
    } else {
    }
    return
  }
  func.func @transform_0(%arg0: i32) -> (i32, i32) {
    %c0_i32 = arith.constant 0 : i32
    %c0_i32_0 = arith.constant 0 : i32
    return %arg0, %c0_i32 : i32, i32
  }
  func.func @transform_1(%arg0: i32) -> (i32, i32) {
    %c0_i32 = arith.constant 0 : i32
    %c0_i32_0 = arith.constant 0 : i32
    %c0_i32_1 = arith.constant 0 : i32
    return %c0_i32, %c0_i32_0 : i32, i32
  }
  func.func @transform_2(%arg0: i32) -> (i32, i32) {
    %c0_i32 = arith.constant 0 : i32
    %c0_i32_0 = arith.constant 0 : i32
    return %arg0, %c0_i32 : i32, i32
  }
  func.func @transform_3(%arg0: i32) -> (i32, i32) {
    %c0_i32 = arith.constant 0 : i32
    %c0_i32_0 = arith.constant 0 : i32
    %c0_i32_1 = arith.constant 0 : i32
    return %c0_i32, %c0_i32_0 : i32, i32
  }
}

module attributes {stable_mosaic.version = 11 : i64} {
  func.func @kernel(%arg0: i32, %arg1: memref<512x128xbf16, #tpu.memory_space<vmem>>, %arg2: memref<16x128xf32, #tpu.memory_space<vmem>>, %arg3: memref<1x128xf32, #tpu.memory_space<vmem>>, %arg4: memref<1x128xf32, #tpu.memory_space<vmem>>, %arg5: memref<512x128xbf16, #tpu.memory_space<vmem>>) attributes {dimension_semantics = [#tpu.dimension_semantics<parallel>], iteration_bounds = array<i64: 1>, scalar_prefetch = 0 : i64, scratch_operands = 0 : i64, tpu.core_type = #tpu.core_type<tc>, window_params = [{transform_indices = @transform_0, window_bounds = array<i64: 512, 128>}, {pipeline_mode = #tpu.pipeline_mode<synchronous>, transform_indices = @transform_1, window_bounds = array<i64: 16, 128>}, {pipeline_mode = #tpu.pipeline_mode<synchronous>, transform_indices = @transform_2, window_bounds = array<i64: 1, 128>}, {pipeline_mode = #tpu.pipeline_mode<synchronous>, transform_indices = @transform_3, window_bounds = array<i64: 1, 128>}, {transform_indices = @transform_4, window_bounds = array<i64: 512, 128>}]} {
    %c0 = arith.constant 0 : index
    %c0_0 = arith.constant 0 : index
    %0 = vector.load %arg2[%c0, %c0_0] : memref<16x128xf32, #tpu.memory_space<vmem>>, vector<16x128xf32>
    %c0_1 = arith.constant 0 : index
    %c0_2 = arith.constant 0 : index
    %1 = vector.load %arg3[%c0_1, %c0_2] : memref<1x128xf32, #tpu.memory_space<vmem>>, vector<1x128xf32>
    %c0_3 = arith.constant 0 : index
    %c0_4 = arith.constant 0 : index
    %2 = vector.load %arg4[%c0_3, %c0_4] : memref<1x128xf32, #tpu.memory_space<vmem>>, vector<1x128xf32>
    %3 = vector.extract_strided_slice %0 {offsets = [0, 0], sizes = [8, 128], strides = [1, 1]} : vector<16x128xf32> to vector<8x128xf32>
    %cst = arith.constant dense<0.000000e+00> : vector<128xf32>
    %4 = vector.multi_reduction <add>, %3, %cst [0] : vector<8x128xf32> to vector<128xf32>
    %5 = vector.shape_cast %4 : vector<128xf32> to vector<1x128xf32>
    %6 = vector.extract_strided_slice %0 {offsets = [8, 0], sizes = [8, 128], strides = [1, 1]} : vector<16x128xf32> to vector<8x128xf32>
    %cst_5 = arith.constant dense<0.000000e+00> : vector<128xf32>
    %7 = vector.multi_reduction <add>, %6, %cst_5 [0] : vector<8x128xf32> to vector<128xf32>
    %8 = vector.shape_cast %7 : vector<128xf32> to vector<1x128xf32>
    %cst_6 = arith.constant 0.001953125 : f32
    %9 = vector.broadcast %cst_6 : f32 to vector<1x128xf32>
    %10 = arith.mulf %5, %9 : vector<1x128xf32>
    %cst_7 = arith.constant 0.001953125 : f32
    %11 = vector.broadcast %cst_7 : f32 to vector<1x128xf32>
    %12 = arith.mulf %8, %11 : vector<1x128xf32>
    %13 = arith.mulf %10, %10 : vector<1x128xf32>
    %14 = arith.subf %12, %13 : vector<1x128xf32>
    %cst_8 = arith.constant 0.000000e+00 : f32
    %15 = vector.broadcast %cst_8 : f32 to vector<1x128xf32>
    %16 = arith.maximumf %14, %15 : vector<1x128xf32>
    %cst_9 = arith.constant 9.99999974E-6 : f32
    %17 = vector.broadcast %cst_9 : f32 to vector<1x128xf32>
    %18 = arith.addf %16, %17 : vector<1x128xf32>
    %19 = math.rsqrt %18 : vector<1x128xf32>
    %20 = arith.mulf %1, %19 : vector<1x128xf32>
    %21 = arith.mulf %10, %20 : vector<1x128xf32>
    %22 = arith.subf %2, %21 : vector<1x128xf32>
    %c0_10 = arith.constant 0 : index
    %c0_11 = arith.constant 0 : index
    %23 = vector.load %arg1[%c0_10, %c0_11] : memref<512x128xbf16, #tpu.memory_space<vmem>>, vector<512x128xbf16>
    %24 = arith.extf %23 : vector<512x128xbf16> to vector<512x128xf32>
    %25 = vector.broadcast %20 : vector<1x128xf32> to vector<512x128xf32>
    %26 = arith.mulf %24, %25 : vector<512x128xf32>
    %27 = vector.broadcast %22 : vector<1x128xf32> to vector<512x128xf32>
    %28 = arith.addf %26, %27 : vector<512x128xf32>
    %cst_12 = arith.constant 0.000000e+00 : f32
    %29 = vector.broadcast %cst_12 : f32 to vector<512x128xf32>
    %30 = arith.maximumf %28, %29 : vector<512x128xf32>
    %31 = arith.truncf %30 : vector<512x128xf32> to vector<512x128xbf16>
    %c0_13 = arith.constant 0 : index
    %c0_14 = arith.constant 0 : index
    %32 = vector.load %arg5[%c0_13, %c0_14] : memref<512x128xbf16, #tpu.memory_space<vmem>>, vector<512x128xbf16>
    tpu.vector_store %arg5[%c0_13, %c0_14], %31 {strides = array<i32>} : memref<512x128xbf16, #tpu.memory_space<vmem>>, vector<512x128xbf16>,
    return
  }
  func.func @transform_0(%arg0: i32) -> (i32, i32) {
    %c0_i32 = arith.constant 0 : i32
    %c0_i32_0 = arith.constant 0 : i32
    return %arg0, %c0_i32 : i32, i32
  }
  func.func @transform_1(%arg0: i32) -> (i32, i32) {
    %c0_i32 = arith.constant 0 : i32
    %c0_i32_0 = arith.constant 0 : i32
    %c0_i32_1 = arith.constant 0 : i32
    return %c0_i32, %c0_i32_0 : i32, i32
  }
  func.func @transform_2(%arg0: i32) -> (i32, i32) {
    %c0_i32 = arith.constant 0 : i32
    %c0_i32_0 = arith.constant 0 : i32
    %c0_i32_1 = arith.constant 0 : i32
    return %c0_i32, %c0_i32_0 : i32, i32
  }
  func.func @transform_3(%arg0: i32) -> (i32, i32) {
    %c0_i32 = arith.constant 0 : i32
    %c0_i32_0 = arith.constant 0 : i32
    %c0_i32_1 = arith.constant 0 : i32
    return %c0_i32, %c0_i32_0 : i32, i32
  }
  func.func @transform_4(%arg0: i32) -> (i32, i32) {
    %c0_i32 = arith.constant 0 : i32
    %c0_i32_0 = arith.constant 0 : i32
    return %arg0, %c0_i32 : i32, i32
  }
}

module attributes {stable_mosaic.version = 11 : i64} {
  func.func @kernel(%arg0: i32, %arg1: memref<128x128xbf16, #tpu.memory_space<vmem>>, %arg2: memref<16x128xf32, #tpu.memory_space<vmem>>, %arg3: memref<1x128xf32, #tpu.memory_space<vmem>>, %arg4: memref<1x128xf32, #tpu.memory_space<vmem>>, %arg5: memref<128x128xbf16, #tpu.memory_space<vmem>>, %arg6: memref<128x128xbf16, #tpu.memory_space<vmem>>, %arg7: memref<16x128xf32, #tpu.memory_space<vmem>>, %arg8: memref<16x128xf32, #tpu.memory_space<vmem>>) attributes {dimension_semantics = [#tpu.dimension_semantics<arbitrary>], iteration_bounds = array<i64: 1>, scalar_prefetch = 0 : i64, scratch_operands = 1 : i64, tpu.core_type = #tpu.core_type<tc>, window_params = [{transform_indices = @transform_0, window_bounds = array<i64: 128, 128>}, {pipeline_mode = #tpu.pipeline_mode<synchronous>, transform_indices = @transform_1, window_bounds = array<i64: 16, 128>}, {pipeline_mode = #tpu.pipeline_mode<synchronous>, transform_indices = @transform_2, window_bounds = array<i64: 1, 128>}, {pipeline_mode = #tpu.pipeline_mode<synchronous>, transform_indices = @transform_3, window_bounds = array<i64: 1, 128>}, {pipeline_mode = #tpu.pipeline_mode<synchronous>, transform_indices = @transform_4, window_bounds = array<i64: 128, 128>}, {transform_indices = @transform_5, window_bounds = array<i64: 128, 128>}, {pipeline_mode = #tpu.pipeline_mode<synchronous>, transform_indices = @transform_6, window_bounds = array<i64: 16, 128>}]} {
    %c0_i32 = arith.constant 0 : i32
    %0 = arith.cmpi eq, %arg0, %c0_i32 : i32
    %1 = arith.extui %0 : i1 to i32
    %c0_i32_0 = arith.constant 0 : i32
    %2 = arith.cmpi ne, %1, %c0_i32_0 : i32
    scf.if %2 {
      %cst_24 = arith.constant 0.000000e+00 : f32
      %50 = vector.broadcast %cst_24 : f32 to vector<16x128xf32>
      %c0_25 = arith.constant 0 : index
      %c0_26 = arith.constant 0 : index
      %51 = vector.load %arg8[%c0_25, %c0_26] : memref<16x128xf32, #tpu.memory_space<vmem>>, vector<16x128xf32>
      tpu.vector_store %arg8[%c0_25, %c0_26], %50 {strides = array<i32>} : memref<16x128xf32, #tpu.memory_space<vmem>>, vector<16x128xf32>,
    } else {
    }
    %c0 = arith.constant 0 : index
    %c0_1 = arith.constant 0 : index
    %3 = vector.load %arg2[%c0, %c0_1] : memref<16x128xf32, #tpu.memory_space<vmem>>, vector<16x128xf32>
    %c0_2 = arith.constant 0 : index
    %c0_3 = arith.constant 0 : index
    %4 = vector.load %arg3[%c0_2, %c0_3] : memref<1x128xf32, #tpu.memory_space<vmem>>, vector<1x128xf32>
    %c0_4 = arith.constant 0 : index
    %c0_5 = arith.constant 0 : index
    %5 = vector.load %arg4[%c0_4, %c0_5] : memref<1x128xf32, #tpu.memory_space<vmem>>, vector<1x128xf32>
    %6 = vector.extract_strided_slice %3 {offsets = [0, 0], sizes = [8, 128], strides = [1, 1]} : vector<16x128xf32> to vector<8x128xf32>
    %cst = arith.constant dense<0.000000e+00> : vector<128xf32>
    %7 = vector.multi_reduction <add>, %6, %cst [0] : vector<8x128xf32> to vector<128xf32>
    %8 = vector.shape_cast %7 : vector<128xf32> to vector<1x128xf32>
    %9 = vector.extract_strided_slice %3 {offsets = [8, 0], sizes = [8, 128], strides = [1, 1]} : vector<16x128xf32> to vector<8x128xf32>
    %cst_6 = arith.constant dense<0.000000e+00> : vector<128xf32>
    %10 = vector.multi_reduction <add>, %9, %cst_6 [0] : vector<8x128xf32> to vector<128xf32>
    %11 = vector.shape_cast %10 : vector<128xf32> to vector<1x128xf32>
    %cst_7 = arith.constant 7.812500e-03 : f32
    %12 = vector.broadcast %cst_7 : f32 to vector<1x128xf32>
    %13 = arith.mulf %8, %12 : vector<1x128xf32>
    %cst_8 = arith.constant 7.812500e-03 : f32
    %14 = vector.broadcast %cst_8 : f32 to vector<1x128xf32>
    %15 = arith.mulf %11, %14 : vector<1x128xf32>
    %16 = arith.mulf %13, %13 : vector<1x128xf32>
    %17 = arith.subf %15, %16 : vector<1x128xf32>
    %cst_9 = arith.constant 0.000000e+00 : f32
    %18 = vector.broadcast %cst_9 : f32 to vector<1x128xf32>
    %19 = arith.maximumf %17, %18 : vector<1x128xf32>
    %cst_10 = arith.constant 9.99999974E-6 : f32
    %20 = vector.broadcast %cst_10 : f32 to vector<1x128xf32>
    %21 = arith.addf %19, %20 : vector<1x128xf32>
    %22 = math.rsqrt %21 : vector<1x128xf32>
    %23 = arith.mulf %4, %22 : vector<1x128xf32>
    %24 = arith.mulf %13, %23 : vector<1x128xf32>
    %25 = arith.subf %5, %24 : vector<1x128xf32>
    %c0_11 = arith.constant 0 : index
    %c0_12 = arith.constant 0 : index
    %26 = vector.load %arg1[%c0_11, %c0_12] : memref<128x128xbf16, #tpu.memory_space<vmem>>, vector<128x128xbf16>
    %27 = arith.extf %26 : vector<128x128xbf16> to vector<128x128xf32>
    %28 = vector.broadcast %23 : vector<1x128xf32> to vector<128x128xf32>
    %29 = arith.mulf %27, %28 : vector<128x128xf32>
    %30 = vector.broadcast %25 : vector<1x128xf32> to vector<128x128xf32>
    %31 = arith.addf %29, %30 : vector<128x128xf32>
    %cst_13 = arith.constant 0.000000e+00 : f32
    %32 = vector.broadcast %cst_13 : f32 to vector<128x128xf32>
    %33 = arith.maximumf %31, %32 : vector<128x128xf32>
    %34 = arith.truncf %33 : vector<128x128xf32> to vector<128x128xbf16>
    %c0_14 = arith.constant 0 : index
    %c0_15 = arith.constant 0 : index
    %35 = vector.load %arg5[%c0_14, %c0_15] : memref<128x128xbf16, #tpu.memory_space<vmem>>, vector<128x128xbf16>
    %cst_16 = arith.constant dense<0.000000e+00> : vector<128x128xf32>
    %36 = tpu.matmul %34, %35, %cst_16 {dimension_numbers = #tpu.dot_dimension_numbers<[1], [0], [0], [1], [0, 0, 1, 1], [], []>} : vector<128x128xbf16>, vector<128x128xbf16>, vector<128x128xf32> -> vector<128x128xf32>
    %37 = arith.truncf %36 : vector<128x128xf32> to vector<128x128xbf16>
    %c0_17 = arith.constant 0 : index
    %c0_18 = arith.constant 0 : index
    %38 = vector.load %arg6[%c0_17, %c0_18] : memref<128x128xbf16, #tpu.memory_space<vmem>>, vector<128x128xbf16>
    tpu.vector_store %arg6[%c0_17, %c0_18], %37 {strides = array<i32>} : memref<128x128xbf16, #tpu.memory_space<vmem>>, vector<128x128xbf16>,
    %c1_i32 = arith.constant 1 : i32
    %39 = arith.addi %arg0, %c1_i32 : i32
    %c128_i32 = arith.constant 128 : i32
    %40 = arith.muli %39, %c128_i32 : i32
    %c128_i32_19 = arith.constant 128 : i32
    %41 = arith.cmpi sle, %40, %c128_i32_19 : i32
    %42 = arith.extui %41 : i1 to i32
    %c0_i32_20 = arith.constant 0 : i32
    %43 = arith.cmpi ne, %42, %c0_i32_20 : i32
    scf.if %43 {
      %50 = vector.shape_cast %36 : vector<128x128xf32> to vector<16x8x128xf32>
      %c0_24 = arith.constant 0 : index
      %c0_25 = arith.constant 0 : index
      %51 = vector.load %arg8[%c0_24, %c0_25] : memref<16x128xf32, #tpu.memory_space<vmem>>, vector<8x128xf32>
      %cst_26 = arith.constant dense<0.000000e+00> : vector<8x128xf32>
      %52 = vector.multi_reduction <add>, %50, %cst_26 [0] : vector<16x8x128xf32> to vector<8x128xf32>
      %53 = arith.addf %51, %52 : vector<8x128xf32>
      %c0_27 = arith.constant 0 : index
      %c0_28 = arith.constant 0 : index
      %54 = vector.load %arg8[%c0_27, %c0_28] : memref<16x128xf32, #tpu.memory_space<vmem>>, vector<8x128xf32>
      tpu.vector_store %arg8[%c0_27, %c0_28], %53 {strides = array<i32>} : memref<16x128xf32, #tpu.memory_space<vmem>>, vector<8x128xf32>,
      %c8 = arith.constant 8 : index
      %c0_29 = arith.constant 0 : index
      %55 = vector.load %arg8[%c8, %c0_29] : memref<16x128xf32, #tpu.memory_space<vmem>>, vector<8x128xf32>
      %56 = arith.mulf %50, %50 : vector<16x8x128xf32>
      %cst_30 = arith.constant dense<0.000000e+00> : vector<8x128xf32>
      %57 = vector.multi_reduction <add>, %56, %cst_30 [0] : vector<16x8x128xf32> to vector<8x128xf32>
      %58 = arith.addf %55, %57 : vector<8x128xf32>
      %c8_31 = arith.constant 8 : index
      %c0_32 = arith.constant 0 : index
      %59 = vector.load %arg8[%c8_31, %c0_32] : memref<16x128xf32, #tpu.memory_space<vmem>>, vector<8x128xf32>
      tpu.vector_store %arg8[%c8_31, %c0_32], %58 {strides = array<i32>} : memref<16x128xf32, #tpu.memory_space<vmem>>, vector<8x128xf32>,
    } else {
    }
    %true = arith.constant true
    %44 = arith.xori %41, %true : i1
    %45 = arith.extui %44 : i1 to i32
    %c0_i32_21 = arith.constant 0 : i32
    %46 = arith.cmpi ne, %45, %c0_i32_21 : i32
    scf.if %46 {
      %c128_i32_24 = arith.constant 128 : i32
      %50 = arith.muli %arg0, %c128_i32_24 : i32
      %51 = tpu.iota {dimensions = array<i32: 0>} : vector<128x1xi32>
      %52 = vector.broadcast %50 : i32 to vector<128x1xi32>
      %53 = arith.addi %52, %51 : vector<128x1xi32>
      %c128_i32_25 = arith.constant 128 : i32
      %54 = vector.broadcast %c128_i32_25 : i32 to vector<128x1xi32>
      %55 = arith.cmpi slt, %53, %54 : vector<128x1xi32>
      %cst_26 = arith.constant 0.000000e+00 : f32
      %56 = vector.shape_cast %55 : vector<128x1xi1> to vector<128x1xi1>
      %57 = vector.broadcast %56 : vector<128x1xi1> to vector<128x128xi1>
      %58 = vector.broadcast %cst_26 : f32 to vector<128x128xf32>
      %59 = arith.select %57, %36, %58 : vector<128x128xi1>, vector<128x128xf32>
      %60 = vector.shape_cast %59 : vector<128x128xf32> to vector<16x8x128xf32>
      %c0_27 = arith.constant 0 : index
      %c0_28 = arith.constant 0 : index
      %61 = vector.load %arg8[%c0_27, %c0_28] : memref<16x128xf32, #tpu.memory_space<vmem>>, vector<8x128xf32>
      %cst_29 = arith.constant dense<0.000000e+00> : vector<8x128xf32>
      %62 = vector.multi_reduction <add>, %60, %cst_29 [0] : vector<16x8x128xf32> to vector<8x128xf32>
      %63 = arith.addf %61, %62 : vector<8x128xf32>
      %c0_30 = arith.constant 0 : index
      %c0_31 = arith.constant 0 : index
      %64 = vector.load %arg8[%c0_30, %c0_31] : memref<16x128xf32, #tpu.memory_space<vmem>>, vector<8x128xf32>
      tpu.vector_store %arg8[%c0_30, %c0_31], %63 {strides = array<i32>} : memref<16x128xf32, #tpu.memory_space<vmem>>, vector<8x128xf32>,
      %c8 = arith.constant 8 : index
      %c0_32 = arith.constant 0 : index
      %65 = vector.load %arg8[%c8, %c0_32] : memref<16x128xf32, #tpu.memory_space<vmem>>, vector<8x128xf32>
      %66 = arith.mulf %60, %60 : vector<16x8x128xf32>
      %cst_33 = arith.constant dense<0.000000e+00> : vector<8x128xf32>
      %67 = vector.multi_reduction <add>, %66, %cst_33 [0] : vector<16x8x128xf32> to vector<8x128xf32>
      %68 = arith.addf %65, %67 : vector<8x128xf32>
      %c8_34 = arith.constant 8 : index
      %c0_35 = arith.constant 0 : index
      %69 = vector.load %arg8[%c8_34, %c0_35] : memref<16x128xf32, #tpu.memory_space<vmem>>, vector<8x128xf32>
      tpu.vector_store %arg8[%c8_34, %c0_35], %68 {strides = array<i32>} : memref<16x128xf32, #tpu.memory_space<vmem>>, vector<8x128xf32>,
    } else {
    }
    %c0_i32_22 = arith.constant 0 : i32
    %47 = arith.cmpi eq, %arg0, %c0_i32_22 : i32
    %48 = arith.extui %47 : i1 to i32
    %c0_i32_23 = arith.constant 0 : i32
    %49 = arith.cmpi ne, %48, %c0_i32_23 : i32
    scf.if %49 {
      %c0_24 = arith.constant 0 : index
      %c0_25 = arith.constant 0 : index
      %50 = vector.load %arg8[%c0_24, %c0_25] : memref<16x128xf32, #tpu.memory_space<vmem>>, vector<16x128xf32>
      %c0_26 = arith.constant 0 : index
      %c0_27 = arith.constant 0 : index
      %51 = vector.load %arg7[%c0_26, %c0_27] : memref<16x128xf32, #tpu.memory_space<vmem>>, vector<16x128xf32>
      tpu.vector_store %arg7[%c0_26, %c0_27], %50 {strides = array<i32>} : memref<16x128xf32, #tpu.memory_space<vmem>>, vector<16x128xf32>,
    } else {
    }
    return
  }
  func.func @transform_0(%arg0: i32) -> (i32, i32) {
    %c0_i32 = arith.constant 0 : i32
    %c0_i32_0 = arith.constant 0 : i32
    return %arg0, %c0_i32 : i32, i32
  }
  func.func @transform_1(%arg0: i32) -> (i32, i32) {
    %c0_i32 = arith.constant 0 : i32
    %c0_i32_0 = arith.constant 0 : i32
    %c0_i32_1 = arith.constant 0 : i32
    return %c0_i32, %c0_i32_0 : i32, i32
  }
  func.func @transform_2(%arg0: i32) -> (i32, i32) {
    %c0_i32 = arith.constant 0 : i32
    %c0_i32_0 = arith.constant 0 : i32
    %c0_i32_1 = arith.constant 0 : i32
    return %c0_i32, %c0_i32_0 : i32, i32
  }
  func.func @transform_3(%arg0: i32) -> (i32, i32) {
    %c0_i32 = arith.constant 0 : i32
    %c0_i32_0 = arith.constant 0 : i32
    %c0_i32_1 = arith.constant 0 : i32
    return %c0_i32, %c0_i32_0 : i32, i32
  }
  func.func @transform_4(%arg0: i32) -> (i32, i32) {
    %c0_i32 = arith.constant 0 : i32
    %c0_i32_0 = arith.constant 0 : i32
    %c0_i32_1 = arith.constant 0 : i32
    return %c0_i32, %c0_i32_0 : i32, i32
  }
  func.func @transform_5(%arg0: i32) -> (i32, i32) {
    %c0_i32 = arith.constant 0 : i32
    %c0_i32_0 = arith.constant 0 : i32
    return %arg0, %c0_i32 : i32, i32
  }
  func.func @transform_6(%arg0: i32) -> (i32, i32) {
    %c0_i32 = arith.constant 0 : i32
    %c0_i32_0 = arith.constant 0 : i32
    %c0_i32_1 = arith.constant 0 : i32
    return %c0_i32, %c0_i32_0 : i32, i32
  }
}

module attributes {stable_mosaic.version = 11 : i64} {
  func.func @kernel(%arg0: i32, %arg1: memref<128x1152xbf16, #tpu.memory_space<vmem>>, %arg2: memref<1152x128xbf16, #tpu.memory_space<vmem>>, %arg3: memref<128x128xbf16, #tpu.memory_space<vmem>>, %arg4: memref<16x128xf32, #tpu.memory_space<vmem>>, %arg5: memref<16x128xf32, #tpu.memory_space<vmem>>) attributes {dimension_semantics = [#tpu.dimension_semantics<arbitrary>], iteration_bounds = array<i64: 1>, scalar_prefetch = 0 : i64, scratch_operands = 1 : i64, tpu.core_type = #tpu.core_type<tc>, window_params = [{transform_indices = @transform_0, window_bounds = array<i64: 128, 1152>}, {pipeline_mode = #tpu.pipeline_mode<synchronous>, transform_indices = @transform_1, window_bounds = array<i64: 1152, 128>}, {transform_indices = @transform_2, window_bounds = array<i64: 128, 128>}, {pipeline_mode = #tpu.pipeline_mode<synchronous>, transform_indices = @transform_3, window_bounds = array<i64: 16, 128>}]} {
    %c0_i32 = arith.constant 0 : i32
    %0 = arith.cmpi eq, %arg0, %c0_i32 : i32
    %1 = arith.extui %0 : i1 to i32
    %c0_i32_0 = arith.constant 0 : i32
    %2 = arith.cmpi ne, %1, %c0_i32_0 : i32
    scf.if %2 {
      %cst_17 = arith.constant 0.000000e+00 : f32
      %21 = vector.broadcast %cst_17 : f32 to vector<16x128xf32>
      %c0_18 = arith.constant 0 : index
      %c0_19 = arith.constant 0 : index
      %22 = vector.load %arg5[%c0_18, %c0_19] : memref<16x128xf32, #tpu.memory_space<vmem>>, vector<16x128xf32>
      tpu.vector_store %arg5[%c0_18, %c0_19], %21 {strides = array<i32>} : memref<16x128xf32, #tpu.memory_space<vmem>>, vector<16x128xf32>,
    } else {
    }
    %c0 = arith.constant 0 : index
    %c0_1 = arith.constant 0 : index
    %3 = vector.load %arg1[%c0, %c0_1] : memref<128x1152xbf16, #tpu.memory_space<vmem>>, vector<128x1152xbf16>
    %c0_2 = arith.constant 0 : index
    %c0_3 = arith.constant 0 : index
    %4 = vector.load %arg2[%c0_2, %c0_3] : memref<1152x128xbf16, #tpu.memory_space<vmem>>, vector<1152x128xbf16>
    %cst = arith.constant dense<0.000000e+00> : vector<128x128xf32>
    %5 = tpu.matmul %3, %4, %cst {dimension_numbers = #tpu.dot_dimension_numbers<[1], [0], [0], [1], [0, 0, 1, 1], [], []>} : vector<128x1152xbf16>, vector<1152x128xbf16>, vector<128x128xf32> -> vector<128x128xf32>
    %6 = arith.truncf %5 : vector<128x128xf32> to vector<128x128xbf16>
    %c0_4 = arith.constant 0 : index
    %c0_5 = arith.constant 0 : index
    %7 = vector.load %arg3[%c0_4, %c0_5] : memref<128x128xbf16, #tpu.memory_space<vmem>>, vector<128x128xbf16>
    tpu.vector_store %arg3[%c0_4, %c0_5], %6 {strides = array<i32>} : memref<128x128xbf16, #tpu.memory_space<vmem>>, vector<128x128xbf16>,
    %8 = vector.shape_cast %5 : vector<128x128xf32> to vector<16x8x128xf32>
    %c0_6 = arith.constant 0 : index
    %c0_7 = arith.constant 0 : index
    %9 = vector.load %arg5[%c0_6, %c0_7] : memref<16x128xf32, #tpu.memory_space<vmem>>, vector<8x128xf32>
    %cst_8 = arith.constant dense<0.000000e+00> : vector<8x128xf32>
    %10 = vector.multi_reduction <add>, %8, %cst_8 [0] : vector<16x8x128xf32> to vector<8x128xf32>
    %11 = arith.addf %9, %10 : vector<8x128xf32>
    %c0_9 = arith.constant 0 : index
    %c0_10 = arith.constant 0 : index
    %12 = vector.load %arg5[%c0_9, %c0_10] : memref<16x128xf32, #tpu.memory_space<vmem>>, vector<8x128xf32>
    tpu.vector_store %arg5[%c0_9, %c0_10], %11 {strides = array<i32>} : memref<16x128xf32, #tpu.memory_space<vmem>>, vector<8x128xf32>,
    %c8 = arith.constant 8 : index
    %c0_11 = arith.constant 0 : index
    %13 = vector.load %arg5[%c8, %c0_11] : memref<16x128xf32, #tpu.memory_space<vmem>>, vector<8x128xf32>
    %14 = arith.mulf %8, %8 : vector<16x8x128xf32>
    %cst_12 = arith.constant dense<0.000000e+00> : vector<8x128xf32>
    %15 = vector.multi_reduction <add>, %14, %cst_12 [0] : vector<16x8x128xf32> to vector<8x128xf32>
    %16 = arith.addf %13, %15 : vector<8x128xf32>
    %c8_13 = arith.constant 8 : index
    %c0_14 = arith.constant 0 : index
    %17 = vector.load %arg5[%c8_13, %c0_14] : memref<16x128xf32, #tpu.memory_space<vmem>>, vector<8x128xf32>
    tpu.vector_store %arg5[%c8_13, %c0_14], %16 {strides = array<i32>} : memref<16x128xf32, #tpu.memory_space<vmem>>, vector<8x128xf32>,
    %c0_i32_15 = arith.constant 0 : i32
    %18 = arith.cmpi eq, %arg0, %c0_i32_15 : i32
    %19 = arith.extui %18 : i1 to i32
    %c0_i32_16 = arith.constant 0 : i32
    %20 = arith.cmpi ne, %19, %c0_i32_16 : i32
    scf.if %20 {
      %c0_17 = arith.constant 0 : index
      %c0_18 = arith.constant 0 : index
      %21 = vector.load %arg5[%c0_17, %c0_18] : memref<16x128xf32, #tpu.memory_space<vmem>>, vector<16x128xf32>
      %c0_19 = arith.constant 0 : index
      %c0_20 = arith.constant 0 : index
      %22 = vector.load %arg4[%c0_19, %c0_20] : memref<16x128xf32, #tpu.memory_space<vmem>>, vector<16x128xf32>
      tpu.vector_store %arg4[%c0_19, %c0_20], %21 {strides = array<i32>} : memref<16x128xf32, #tpu.memory_space<vmem>>, vector<16x128xf32>,
    } else {
    }
    return
  }
  func.func @transform_0(%arg0: i32) -> (i32, i32) {
    %c0_i32 = arith.constant 0 : i32
    %c0_i32_0 = arith.constant 0 : i32
    return %arg0, %c0_i32 : i32, i32
  }
  func.func @transform_1(%arg0: i32) -> (i32, i32) {
    %c0_i32 = arith.constant 0 : i32
    %c0_i32_0 = arith.constant 0 : i32
    %c0_i32_1 = arith.constant 0 : i32
    return %c0_i32, %c0_i32_0 : i32, i32
  }
  func.func @transform_2(%arg0: i32) -> (i32, i32) {
    %c0_i32 = arith.constant 0 : i32
    %c0_i32_0 = arith.constant 0 : i32
    return %arg0, %c0_i32 : i32, i32
  }
  func.func @transform_3(%arg0: i32) -> (i32, i32) {
    %c0_i32 = arith.constant 0 : i32
    %c0_i32_0 = arith.constant 0 : i32
    %c0_i32_1 = arith.constant 0 : i32
    return %c0_i32, %c0_i32_0 : i32, i32
  }
}

module attributes {stable_mosaic.version = 11 : i64} {
  func.func @kernel(%arg0: i32, %arg1: memref<128x128xbf16, #tpu.memory_space<vmem>>, %arg2: memref<16x128xf32, #tpu.memory_space<vmem>>, %arg3: memref<1x128xf32, #tpu.memory_space<vmem>>, %arg4: memref<1x128xf32, #tpu.memory_space<vmem>>, %arg5: memref<128x128xbf16, #tpu.memory_space<vmem>>, %arg6: memref<16x128xf32, #tpu.memory_space<vmem>>, %arg7: memref<1x128xf32, #tpu.memory_space<vmem>>, %arg8: memref<1x128xf32, #tpu.memory_space<vmem>>, %arg9: memref<128x128xf32, #tpu.memory_space<vmem>>) attributes {dimension_semantics = [#tpu.dimension_semantics<parallel>], iteration_bounds = array<i64: 1>, scalar_prefetch = 0 : i64, scratch_operands = 0 : i64, tpu.core_type = #tpu.core_type<tc>, window_params = [{transform_indices = @transform_0, window_bounds = array<i64: 128, 128>}, {pipeline_mode = #tpu.pipeline_mode<synchronous>, transform_indices = @transform_1, window_bounds = array<i64: 16, 128>}, {pipeline_mode = #tpu.pipeline_mode<synchronous>, transform_indices = @transform_2, window_bounds = array<i64: 1, 128>}, {pipeline_mode = #tpu.pipeline_mode<synchronous>, transform_indices = @transform_3, window_bounds = array<i64: 1, 128>}, {transform_indices = @transform_4, window_bounds = array<i64: 128, 128>}, {pipeline_mode = #tpu.pipeline_mode<synchronous>, transform_indices = @transform_5, window_bounds = array<i64: 16, 128>}, {pipeline_mode = #tpu.pipeline_mode<synchronous>, transform_indices = @transform_6, window_bounds = array<i64: 1, 128>}, {pipeline_mode = #tpu.pipeline_mode<synchronous>, transform_indices = @transform_7, window_bounds = array<i64: 1, 128>}, {transform_indices = @transform_8, window_bounds = array<i64: 128, 128>}]} {
    %c0 = arith.constant 0 : index
    %c0_0 = arith.constant 0 : index
    %0 = vector.load %arg2[%c0, %c0_0] : memref<16x128xf32, #tpu.memory_space<vmem>>, vector<16x128xf32>
    %c0_1 = arith.constant 0 : index
    %c0_2 = arith.constant 0 : index
    %1 = vector.load %arg3[%c0_1, %c0_2] : memref<1x128xf32, #tpu.memory_space<vmem>>, vector<1x128xf32>
    %c0_3 = arith.constant 0 : index
    %c0_4 = arith.constant 0 : index
    %2 = vector.load %arg4[%c0_3, %c0_4] : memref<1x128xf32, #tpu.memory_space<vmem>>, vector<1x128xf32>
    %3 = vector.extract_strided_slice %0 {offsets = [0, 0], sizes = [8, 128], strides = [1, 1]} : vector<16x128xf32> to vector<8x128xf32>
    %cst = arith.constant dense<0.000000e+00> : vector<128xf32>
    %4 = vector.multi_reduction <add>, %3, %cst [0] : vector<8x128xf32> to vector<128xf32>
    %5 = vector.shape_cast %4 : vector<128xf32> to vector<1x128xf32>
    %6 = vector.extract_strided_slice %0 {offsets = [8, 0], sizes = [8, 128], strides = [1, 1]} : vector<16x128xf32> to vector<8x128xf32>
    %cst_5 = arith.constant dense<0.000000e+00> : vector<128xf32>
    %7 = vector.multi_reduction <add>, %6, %cst_5 [0] : vector<8x128xf32> to vector<128xf32>
    %8 = vector.shape_cast %7 : vector<128xf32> to vector<1x128xf32>
    %cst_6 = arith.constant 7.812500e-03 : f32
    %9 = vector.broadcast %cst_6 : f32 to vector<1x128xf32>
    %10 = arith.mulf %5, %9 : vector<1x128xf32>
    %cst_7 = arith.constant 7.812500e-03 : f32
    %11 = vector.broadcast %cst_7 : f32 to vector<1x128xf32>
    %12 = arith.mulf %8, %11 : vector<1x128xf32>
    %13 = arith.mulf %10, %10 : vector<1x128xf32>
    %14 = arith.subf %12, %13 : vector<1x128xf32>
    %cst_8 = arith.constant 0.000000e+00 : f32
    %15 = vector.broadcast %cst_8 : f32 to vector<1x128xf32>
    %16 = arith.maximumf %14, %15 : vector<1x128xf32>
    %cst_9 = arith.constant 9.99999974E-6 : f32
    %17 = vector.broadcast %cst_9 : f32 to vector<1x128xf32>
    %18 = arith.addf %16, %17 : vector<1x128xf32>
    %19 = math.rsqrt %18 : vector<1x128xf32>
    %20 = arith.mulf %1, %19 : vector<1x128xf32>
    %21 = arith.mulf %10, %20 : vector<1x128xf32>
    %22 = arith.subf %2, %21 : vector<1x128xf32>
    %c0_10 = arith.constant 0 : index
    %c0_11 = arith.constant 0 : index
    %23 = vector.load %arg6[%c0_10, %c0_11] : memref<16x128xf32, #tpu.memory_space<vmem>>, vector<16x128xf32>
    %c0_12 = arith.constant 0 : index
    %c0_13 = arith.constant 0 : index
    %24 = vector.load %arg7[%c0_12, %c0_13] : memref<1x128xf32, #tpu.memory_space<vmem>>, vector<1x128xf32>
    %c0_14 = arith.constant 0 : index
    %c0_15 = arith.constant 0 : index
    %25 = vector.load %arg8[%c0_14, %c0_15] : memref<1x128xf32, #tpu.memory_space<vmem>>, vector<1x128xf32>
    %26 = vector.extract_strided_slice %23 {offsets = [0, 0], sizes = [8, 128], strides = [1, 1]} : vector<16x128xf32> to vector<8x128xf32>
    %cst_16 = arith.constant dense<0.000000e+00> : vector<128xf32>
    %27 = vector.multi_reduction <add>, %26, %cst_16 [0] : vector<8x128xf32> to vector<128xf32>
    %28 = vector.shape_cast %27 : vector<128xf32> to vector<1x128xf32>
    %29 = vector.extract_strided_slice %23 {offsets = [8, 0], sizes = [8, 128], strides = [1, 1]} : vector<16x128xf32> to vector<8x128xf32>
    %cst_17 = arith.constant dense<0.000000e+00> : vector<128xf32>
    %30 = vector.multi_reduction <add>, %29, %cst_17 [0] : vector<8x128xf32> to vector<128xf32>
    %31 = vector.shape_cast %30 : vector<128xf32> to vector<1x128xf32>
    %cst_18 = arith.constant 7.812500e-03 : f32
    %32 = vector.broadcast %cst_18 : f32 to vector<1x128xf32>
    %33 = arith.mulf %28, %32 : vector<1x128xf32>
    %cst_19 = arith.constant 7.812500e-03 : f32
    %34 = vector.broadcast %cst_19 : f32 to vector<1x128xf32>
    %35 = arith.mulf %31, %34 : vector<1x128xf32>
    %36 = arith.mulf %33, %33 : vector<1x128xf32>
    %37 = arith.subf %35, %36 : vector<1x128xf32>
    %cst_20 = arith.constant 0.000000e+00 : f32
    %38 = vector.broadcast %cst_20 : f32 to vector<1x128xf32>
    %39 = arith.maximumf %37, %38 : vector<1x128xf32>
    %cst_21 = arith.constant 9.99999974E-6 : f32
    %40 = vector.broadcast %cst_21 : f32 to vector<1x128xf32>
    %41 = arith.addf %39, %40 : vector<1x128xf32>
    %42 = math.rsqrt %41 : vector<1x128xf32>
    %43 = arith.mulf %24, %42 : vector<1x128xf32>
    %44 = arith.mulf %33, %43 : vector<1x128xf32>
    %45 = arith.subf %25, %44 : vector<1x128xf32>
    %c0_22 = arith.constant 0 : index
    %c0_23 = arith.constant 0 : index
    %46 = vector.load %arg1[%c0_22, %c0_23] : memref<128x128xbf16, #tpu.memory_space<vmem>>, vector<128x128xbf16>
    %47 = arith.extf %46 : vector<128x128xbf16> to vector<128x128xf32>
    %48 = vector.broadcast %20 : vector<1x128xf32> to vector<128x128xf32>
    %49 = arith.mulf %47, %48 : vector<128x128xf32>
    %50 = vector.broadcast %22 : vector<1x128xf32> to vector<128x128xf32>
    %51 = arith.addf %49, %50 : vector<128x128xf32>
    %c0_24 = arith.constant 0 : index
    %c0_25 = arith.constant 0 : index
    %52 = vector.load %arg5[%c0_24, %c0_25] : memref<128x128xbf16, #tpu.memory_space<vmem>>, vector<128x128xbf16>
    %53 = arith.extf %52 : vector<128x128xbf16> to vector<128x128xf32>
    %54 = vector.broadcast %43 : vector<1x128xf32> to vector<128x128xf32>
    %55 = arith.mulf %53, %54 : vector<128x128xf32>
    %56 = vector.broadcast %45 : vector<1x128xf32> to vector<128x128xf32>
    %57 = arith.addf %55, %56 : vector<128x128xf32>
    %58 = arith.addf %51, %57 : vector<128x128xf32>
    %cst_26 = arith.constant 0.000000e+00 : f32
    %59 = vector.broadcast %cst_26 : f32 to vector<128x128xf32>
    %60 = arith.maximumf %58, %59 : vector<128x128xf32>
    %c0_27 = arith.constant 0 : index
    %c0_28 = arith.constant 0 : index
    %61 = vector.load %arg9[%c0_27, %c0_28] : memref<128x128xf32, #tpu.memory_space<vmem>>, vector<128x128xf32>
    tpu.vector_store %arg9[%c0_27, %c0_28], %60 {strides = array<i32>} : memref<128x128xf32, #tpu.memory_space<vmem>>, vector<128x128xf32>,
    return
  }
  func.func @transform_0(%arg0: i32) -> (i32, i32) {
    %c0_i32 = arith.constant 0 : i32
    %c0_i32_0 = arith.constant 0 : i32
    return %arg0, %c0_i32 : i32, i32
  }
  func.func @transform_1(%arg0: i32) -> (i32, i32) {
    %c0_i32 = arith.constant 0 : i32
    %c0_i32_0 = arith.constant 0 : i32
    %c0_i32_1 = arith.constant 0 : i32
    return %c0_i32, %c0_i32_0 : i32, i32
  }
  func.func @transform_2(%arg0: i32) -> (i32, i32) {
    %c0_i32 = arith.constant 0 : i32
    %c0_i32_0 = arith.constant 0 : i32
    %c0_i32_1 = arith.constant 0 : i32
    return %c0_i32, %c0_i32_0 : i32, i32
  }
  func.func @transform_3(%arg0: i32) -> (i32, i32) {
    %c0_i32 = arith.constant 0 : i32
    %c0_i32_0 = arith.constant 0 : i32
    %c0_i32_1 = arith.constant 0 : i32
    return %c0_i32, %c0_i32_0 : i32, i32
  }
  func.func @transform_4(%arg0: i32) -> (i32, i32) {
    %c0_i32 = arith.constant 0 : i32
    %c0_i32_0 = arith.constant 0 : i32
    return %arg0, %c0_i32 : i32, i32
  }
  func.func @transform_5(%arg0: i32) -> (i32, i32) {
    %c0_i32 = arith.constant 0 : i32
    %c0_i32_0 = arith.constant 0 : i32
    %c0_i32_1 = arith.constant 0 : i32
    return %c0_i32, %c0_i32_0 : i32, i32
  }
  func.func @transform_6(%arg0: i32) -> (i32, i32) {
    %c0_i32 = arith.constant 0 : i32
    %c0_i32_0 = arith.constant 0 : i32
    %c0_i32_1 = arith.constant 0 : i32
    return %c0_i32, %c0_i32_0 : i32, i32
  }
  func.func @transform_7(%arg0: i32) -> (i32, i32) {
    %c0_i32 = arith.constant 0 : i32
    %c0_i32_0 = arith.constant 0 : i32
    %c0_i32_1 = arith.constant 0 : i32
    return %c0_i32, %c0_i32_0 : i32, i32
  }
  func.func @transform_8(%arg0: i32) -> (i32, i32) {
    %c0_i32 = arith.constant 0 : i32
    %c0_i32_0 = arith.constant 0 : i32
    return %arg0, %c0_i32 : i32, i32
  }
}

module attributes {stable_mosaic.version = 11 : i64} {
  func.func @kernel(%arg0: i32, %arg1: memref<128x128xbf16, #tpu.memory_space<vmem>>, %arg2: memref<128x128xbf16, #tpu.memory_space<vmem>>, %arg3: memref<128x128xbf16, #tpu.memory_space<vmem>>, %arg4: memref<16x128xf32, #tpu.memory_space<vmem>>, %arg5: memref<16x128xf32, #tpu.memory_space<vmem>>) attributes {dimension_semantics = [#tpu.dimension_semantics<arbitrary>], iteration_bounds = array<i64: 1>, scalar_prefetch = 0 : i64, scratch_operands = 1 : i64, tpu.core_type = #tpu.core_type<tc>, window_params = [{transform_indices = @transform_0, window_bounds = array<i64: 128, 128>}, {pipeline_mode = #tpu.pipeline_mode<synchronous>, transform_indices = @transform_1, window_bounds = array<i64: 128, 128>}, {transform_indices = @transform_2, window_bounds = array<i64: 128, 128>}, {pipeline_mode = #tpu.pipeline_mode<synchronous>, transform_indices = @transform_3, window_bounds = array<i64: 16, 128>}]} {
    %c0_i32 = arith.constant 0 : i32
    %0 = arith.cmpi eq, %arg0, %c0_i32 : i32
    %1 = arith.extui %0 : i1 to i32
    %c0_i32_0 = arith.constant 0 : i32
    %2 = arith.cmpi ne, %1, %c0_i32_0 : i32
    scf.if %2 {
      %cst_17 = arith.constant 0.000000e+00 : f32
      %21 = vector.broadcast %cst_17 : f32 to vector<16x128xf32>
      %c0_18 = arith.constant 0 : index
      %c0_19 = arith.constant 0 : index
      %22 = vector.load %arg5[%c0_18, %c0_19] : memref<16x128xf32, #tpu.memory_space<vmem>>, vector<16x128xf32>
      tpu.vector_store %arg5[%c0_18, %c0_19], %21 {strides = array<i32>} : memref<16x128xf32, #tpu.memory_space<vmem>>, vector<16x128xf32>,
    } else {
    }
    %c0 = arith.constant 0 : index
    %c0_1 = arith.constant 0 : index
    %3 = vector.load %arg1[%c0, %c0_1] : memref<128x128xbf16, #tpu.memory_space<vmem>>, vector<128x128xbf16>
    %c0_2 = arith.constant 0 : index
    %c0_3 = arith.constant 0 : index
    %4 = vector.load %arg2[%c0_2, %c0_3] : memref<128x128xbf16, #tpu.memory_space<vmem>>, vector<128x128xbf16>
    %cst = arith.constant dense<0.000000e+00> : vector<128x128xf32>
    %5 = tpu.matmul %3, %4, %cst {dimension_numbers = #tpu.dot_dimension_numbers<[1], [0], [0], [1], [0, 0, 1, 1], [], []>} : vector<128x128xbf16>, vector<128x128xbf16>, vector<128x128xf32> -> vector<128x128xf32>
    %6 = arith.truncf %5 : vector<128x128xf32> to vector<128x128xbf16>
    %c0_4 = arith.constant 0 : index
    %c0_5 = arith.constant 0 : index
    %7 = vector.load %arg3[%c0_4, %c0_5] : memref<128x128xbf16, #tpu.memory_space<vmem>>, vector<128x128xbf16>
    tpu.vector_store %arg3[%c0_4, %c0_5], %6 {strides = array<i32>} : memref<128x128xbf16, #tpu.memory_space<vmem>>, vector<128x128xbf16>,
    %8 = vector.shape_cast %5 : vector<128x128xf32> to vector<16x8x128xf32>
    %c0_6 = arith.constant 0 : index
    %c0_7 = arith.constant 0 : index
    %9 = vector.load %arg5[%c0_6, %c0_7] : memref<16x128xf32, #tpu.memory_space<vmem>>, vector<8x128xf32>
    %cst_8 = arith.constant dense<0.000000e+00> : vector<8x128xf32>
    %10 = vector.multi_reduction <add>, %8, %cst_8 [0] : vector<16x8x128xf32> to vector<8x128xf32>
    %11 = arith.addf %9, %10 : vector<8x128xf32>
    %c0_9 = arith.constant 0 : index
    %c0_10 = arith.constant 0 : index
    %12 = vector.load %arg5[%c0_9, %c0_10] : memref<16x128xf32, #tpu.memory_space<vmem>>, vector<8x128xf32>
    tpu.vector_store %arg5[%c0_9, %c0_10], %11 {strides = array<i32>} : memref<16x128xf32, #tpu.memory_space<vmem>>, vector<8x128xf32>,
    %c8 = arith.constant 8 : index
    %c0_11 = arith.constant 0 : index
    %13 = vector.load %arg5[%c8, %c0_11] : memref<16x128xf32, #tpu.memory_space<vmem>>, vector<8x128xf32>
    %14 = arith.mulf %8, %8 : vector<16x8x128xf32>
    %cst_12 = arith.constant dense<0.000000e+00> : vector<8x128xf32>
    %15 = vector.multi_reduction <add>, %14, %cst_12 [0] : vector<16x8x128xf32> to vector<8x128xf32>
    %16 = arith.addf %13, %15 : vector<8x128xf32>
    %c8_13 = arith.constant 8 : index
    %c0_14 = arith.constant 0 : index
    %17 = vector.load %arg5[%c8_13, %c0_14] : memref<16x128xf32, #tpu.memory_space<vmem>>, vector<8x128xf32>
    tpu.vector_store %arg5[%c8_13, %c0_14], %16 {strides = array<i32>} : memref<16x128xf32, #tpu.memory_space<vmem>>, vector<8x128xf32>,
    %c0_i32_15 = arith.constant 0 : i32
    %18 = arith.cmpi eq, %arg0, %c0_i32_15 : i32
    %19 = arith.extui %18 : i1 to i32
    %c0_i32_16 = arith.constant 0 : i32
    %20 = arith.cmpi ne, %19, %c0_i32_16 : i32
    scf.if %20 {
      %c0_17 = arith.constant 0 : index
      %c0_18 = arith.constant 0 : index
      %21 = vector.load %arg5[%c0_17, %c0_18] : memref<16x128xf32, #tpu.memory_space<vmem>>, vector<16x128xf32>
      %c0_19 = arith.constant 0 : index
      %c0_20 = arith.constant 0 : index
      %22 = vector.load %arg4[%c0_19, %c0_20] : memref<16x128xf32, #tpu.memory_space<vmem>>, vector<16x128xf32>
      tpu.vector_store %arg4[%c0_19, %c0_20], %21 {strides = array<i32>} : memref<16x128xf32, #tpu.memory_space<vmem>>, vector<16x128xf32>,
    } else {
    }
    return
  }
  func.func @transform_0(%arg0: i32) -> (i32, i32) {
    %c0_i32 = arith.constant 0 : i32
    %c0_i32_0 = arith.constant 0 : i32
    return %arg0, %c0_i32 : i32, i32
  }
  func.func @transform_1(%arg0: i32) -> (i32, i32) {
    %c0_i32 = arith.constant 0 : i32
    %c0_i32_0 = arith.constant 0 : i32
    %c0_i32_1 = arith.constant 0 : i32
    return %c0_i32, %c0_i32_0 : i32, i32
  }
  func.func @transform_2(%arg0: i32) -> (i32, i32) {
    %c0_i32 = arith.constant 0 : i32
    %c0_i32_0 = arith.constant 0 : i32
    return %arg0, %c0_i32 : i32, i32
  }
  func.func @transform_3(%arg0: i32) -> (i32, i32) {
    %c0_i32 = arith.constant 0 : i32
    %c0_i32_0 = arith.constant 0 : i32
    %c0_i32_1 = arith.constant 0 : i32
    return %c0_i32, %c0_i32_0 : i32, i32
  }
}

</mosaic_0001>

<llo_original>
// kernel: bottleneck_forward.7
$region0: #{bottleneck_forward.7}
  #allocation0 [shape = 'u32[]', space=smem, size = 0x4, offset = 0x4, fixed_abs, tag = 'smem constant byte address 0x4 - core index']
  #allocation1 [shape = 'u32[144,128]{1,0:T(1,128)}', space=vmem, size = 0x12000, scoped, tag = 'internal scratch']
  %s0 = inlined_call_operand.vmem [shape: bf16[512,128], index: 0, kind: input, shape index: {}]
  %s1 = inlined_call_operand.vmem [shape: f32[16,128], index: 1, kind: input, shape index: {}]
  %s2 = inlined_call_operand.vmem [shape: f32[1,128], index: 2, kind: input, shape index: {}]
  %s3 = inlined_call_operand.vmem [shape: f32[1,128], index: 3, kind: input, shape index: {}]
  %s4 = inlined_call_operand.vmem [shape: bf16[512,128], index: 4, kind: output, shape index: {}]
  %s5 = sld [smem:[#allocation0]]
  $region26: #{bottleneck_forward.7} parent=0
    _
  %s7 = ssub.s32 1, %s5
  %s8 = scalar_select 0, %s7, %s5
  // Predicated region
  $region2: #{bottleneck_forward.7} parent=0 // pred_check
    _
  $region3: #{bottleneck_forward.7} parent=0 // pred_check_branch
    %10 = sbr.rel (0) target = $region5
  $region4: #{bottleneck_forward.7} parent=0 // pred_region
    _
  $region5: #{bottleneck_forward.7} parent=0 // pred_fallthru
    _
  // Predicated region
  $region6: #{bottleneck_forward.7} parent=0 // pred_check
    _
  $region7: #{bottleneck_forward.7} parent=0 // pred_check_branch
    %12 = sbr.rel (0) target = $region9
  $region8: #{bottleneck_forward.7} parent=0 // pred_region
    _
  $region9: #{bottleneck_forward.7} parent=0 // pred_fallthru
    _
  // Predicated region
  $region10: #{bottleneck_forward.7} parent=0 // pred_check
    _
  $region11: #{bottleneck_forward.7} parent=0 // pred_check_branch
    %14 = sbr.rel (0) target = $region13
  $region12: #{bottleneck_forward.7} parent=0 // pred_region
    _
  $region13: #{bottleneck_forward.7} parent=0 // pred_fallthru
    _
  // Predicated region
  $region14: #{bottleneck_forward.7} parent=0 // pred_check
    _
  $region15: #{bottleneck_forward.7} parent=0 // pred_check_branch
    %16 = sbr.rel (0) target = $region17
  $region16: #{bottleneck_forward.7} parent=0 // pred_region
    _
  $region17: #{bottleneck_forward.7} parent=0 // pred_fallthru
    _
  %v17 = vld [vmem:[%s1] sm:$0xff]
  %v18 = vld [vmem:[%s1 + $0x8] sm:$0xff]
  %v19 = vld [vmem:[%s2] sm:$0x1]
  %v20 = vld [vmem:[%s3] sm:$0x1]
  %v21 = vrot.slane %v17, 4
  %v22 = vadd.f32 %v17, %v21
  %v23 = vrot.slane %v22, 2
  %v24 = vadd.f32 %v22, %v23
  %v25 = vrot.slane %v24, 1
  %v26 = vadd.f32 %v24, %v25
  %v27 = vrot.slane %v18, 4
  %v28 = vadd.f32 %v18, %v27
  %v29 = vrot.slane %v28, 2
  %v30 = vadd.f32 %v28, %v29
  %v31 = vrot.slane %v30, 1
  %v32 = vadd.f32 %v30, %v31
  %v33 = vmul.f32 %v26, 0.001953125
  %v34 = vmul.f32 %v32, 0.001953125
  %v35 = vmul.f32 %v33, %v33
  %v36 = vsub.f32 %v34, %v35
  %v37 = vmax.f32 %v36, 0.0
  %v38 = vadd.f32 %v37, 1e-05
  %v39 = vrsqrt.pop %v38
  %v40 = vmul.f32 %v19, %v39
  %v41 = vmul.f32 %v33, %v40
  %v42 = vsub.f32 %v20, %v41
  %v43 = vld [vmem:[%s0] sm:$0xf]
  %v44 = vld [vmem:[%s0 + $0x4] sm:$0xf]
  %v45 = vld [vmem:[%s0 + $0x8] sm:$0xf]
  %v46 = vld [vmem:[%s0 + $0xc] sm:$0xf]
  %v47 = vld [vmem:[%s0 + $0x10] sm:$0xf]
  %v48 = vld [vmem:[%s0 + $0x14] sm:$0xf]
  %v49 = vld [vmem:[%s0 + $0x18] sm:$0xf]
  %v50 = vld [vmem:[%s0 + $0x1c] sm:$0xf]
  %v51 = vld [vmem:[%s0 + $0x20] sm:$0xf]
  %v52 = vld [vmem:[%s0 + $0x24] sm:$0xf]
  %v53 = vld [vmem:[%s0 + $0x28] sm:$0xf]
  %v54 = vld [vmem:[%s0 + $0x2c] sm:$0xf]
  %v55 = vld [vmem:[%s0 + $0x30] sm:$0xf]
  %v56 = vld [vmem:[%s0 + $0x34] sm:$0xf]
  %v57 = vld [vmem:[%s0 + $0x38] sm:$0xf]
  %v58 = vld [vmem:[%s0 + $0x3c] sm:$0xf]
  %v59 = vld [vmem:[%s0 + $0x40] sm:$0xf]
  %v60 = vld [vmem:[%s0 + $0x44] sm:$0xf]
  %v61 = vld [vmem:[%s0 + $0x48] sm:$0xf]
  %v62 = vld [vmem:[%s0 + $0x4c] sm:$0xf]
  %v63 = vld [vmem:[%s0 + $0x50] sm:$0xf]
  %v64 = vld [vmem:[%s0 + $0x54] sm:$0xf]
  %v65 = vld [vmem:[%s0 + $0x58] sm:$0xf]
  %v66 = vld [vmem:[%s0 + $0x5c] sm:$0xf]
  %v67 = vld [vmem:[%s0 + $0x60] sm:$0xf]
  %v68 = vld [vmem:[%s0 + $0x64] sm:$0xf]
  %v69 = vld [vmem:[%s0 + $0x68] sm:$0xf]
  %v70 = vld [vmem:[%s0 + $0x6c] sm:$0xf]
  %v71 = vld [vmem:[%s0 + $0x70] sm:$0xf]
  %v72 = vld [vmem:[%s0 + $0x74] sm:$0xf]
  %v73 = vld [vmem:[%s0 + $0x78] sm:$0xf]
  %v74 = vld [vmem:[%s0 + $0x7c] sm:$0xf]
  %v75 = vld [vmem:[%s0 + $0x80] sm:$0xf]
  %v76 = vld [vmem:[%s0 + $0x84] sm:$0xf]
  %v77 = vld [vmem:[%s0 + $0x88] sm:$0xf]
  %v78 = vld [vmem:[%s0 + $0x8c] sm:$0xf]
  %v79 = vld [vmem:[%s0 + $0x90] sm:$0xf]
  %v80 = vld [vmem:[%s0 + $0x94] sm:$0xf]
  %v81 = vld [vmem:[%s0 + $0x98] sm:$0xf]
  %v82 = vld [vmem:[%s0 + $0x9c] sm:$0xf]
  %v83 = vld [vmem:[%s0 + $0xa0] sm:$0xf]
  %v84 = vld [vmem:[%s0 + $0xa4] sm:$0xf]
  %v85 = vld [vmem:[%s0 + $0xa8] sm:$0xf]
  %v86 = vld [vmem:[%s0 + $0xac] sm:$0xf]
  %v87 = vld [vmem:[%s0 + $0xb0] sm:$0xf]
  %v88 = vld [vmem:[%s0 + $0xb4] sm:$0xf]
  %v89 = vld [vmem:[%s0 + $0xb8] sm:$0xf]
  %v90 = vld [vmem:[%s0 + $0xbc] sm:$0xf]
  %v91 = vld [vmem:[%s0 + $0xc0] sm:$0xf]
  %v92 = vld [vmem:[%s0 + $0xc4] sm:$0xf]
  %v93 = vld [vmem:[%s0 + $0xc8] sm:$0xf]
  %v94 = vld [vmem:[%s0 + $0xcc] sm:$0xf]
  %v95 = vld [vmem:[%s0 + $0xd0] sm:$0xf]
  %v96 = vld [vmem:[%s0 + $0xd4] sm:$0xf]
  %v97 = vld [vmem:[%s0 + $0xd8] sm:$0xf]
  %v98 = vld [vmem:[%s0 + $0xdc] sm:$0xf]
  %v99 = vld [vmem:[%s0 + $0xe0] sm:$0xf]
  %v100 = vld [vmem:[%s0 + $0xe4] sm:$0xf]
  %v101 = vld [vmem:[%s0 + $0xe8] sm:$0xf]
  %v102 = vld [vmem:[%s0 + $0xec] sm:$0xf]
  %v103 = vld [vmem:[%s0 + $0xf0] sm:$0xf]
  %v104 = vld [vmem:[%s0 + $0xf4] sm:$0xf]
  %v105 = vld [vmem:[%s0 + $0xf8] sm:$0xf]
  %v106 = vld [vmem:[%s0 + $0xfc] sm:$0xf]
  %v107 = vunpack.c.l.bf16 %v43
  %v108 = vunpack.c.l.bf16 %v44
  %v109 = vunpack.c.l.bf16 %v45
  %v110 = vunpack.c.l.bf16 %v46
  %v111 = vunpack.c.l.bf16 %v47
  %v112 = vunpack.c.l.bf16 %v48
  %v113 = vunpack.c.l.bf16 %v49
  %v114 = vunpack.c.l.bf16 %v50
  %v115 = vunpack.c.l.bf16 %v51
  %v116 = vunpack.c.l.bf16 %v52
  %v117 = vunpack.c.l.bf16 %v53
  %v118 = vunpack.c.l.bf16 %v54
  %v119 = vunpack.c.l.bf16 %v55
  %v120 = vunpack.c.l.bf16 %v56
  %v121 = vunpack.c.l.bf16 %v57
  %v122 = vunpack.c.l.bf16 %v58
  %v123 = vunpack.c.l.bf16 %v59
  %v124 = vunpack.c.l.bf16 %v60
  %v125 = vunpack.c.l.bf16 %v61
  %v126 = vunpack.c.l.bf16 %v62
  %v127 = vunpack.c.l.bf16 %v63
  %v128 = vunpack.c.l.bf16 %v64
  %v129 = vunpack.c.l.bf16 %v65
  %v130 = vunpack.c.l.bf16 %v66
  %v131 = vunpack.c.l.bf16 %v67
  %v132 = vunpack.c.l.bf16 %v68
  %v133 = vunpack.c.l.bf16 %v69
  %v134 = vunpack.c.l.bf16 %v70
  %v135 = vunpack.c.l.bf16 %v71
  %v136 = vunpack.c.l.bf16 %v72
  %v137 = vunpack.c.l.bf16 %v73
  %v138 = vunpack.c.l.bf16 %v74
  %v139 = vunpack.c.l.bf16 %v75
  %v140 = vunpack.c.l.bf16 %v76
  %v141 = vunpack.c.l.bf16 %v77
  %v142 = vunpack.c.l.bf16 %v78
  %v143 = vunpack.c.l.bf16 %v79
  %v144 = vunpack.c.l.bf16 %v80
  %v145 = vunpack.c.l.bf16 %v81
  %v146 = vunpack.c.l.bf16 %v82
  %v147 = vunpack.c.l.bf16 %v83
  %v148 = vunpack.c.l.bf16 %v84
  %v149 = vunpack.c.l.bf16 %v85
  %v150 = vunpack.c.l.bf16 %v86
  %v151 = vunpack.c.l.bf16 %v87
  %v152 = vunpack.c.l.bf16 %v88
  %v153 = vunpack.c.l.bf16 %v89
  %v154 = vunpack.c.l.bf16 %v90
  %v155 = vunpack.c.l.bf16 %v91
  %v156 = vunpack.c.l.bf16 %v92
  %v157 = vunpack.c.l.bf16 %v93
  %v158 = vunpack.c.l.bf16 %v94
  %v159 = vunpack.c.l.bf16 %v95
  %v160 = vunpack.c.l.bf16 %v96
  %v161 = vunpack.c.l.bf16 %v97
  %v162 = vunpack.c.l.bf16 %v98
  %v163 = vunpack.c.l.bf16 %v99
  %v164 = vunpack.c.l.bf16 %v100
  %v165 = vunpack.c.l.bf16 %v101
  %v166 = vunpack.c.l.bf16 %v102
  %v167 = vunpack.c.l.bf16 %v103
  %v168 = vunpack.c.l.bf16 %v104
  %v169 = vunpack.c.l.bf16 %v105
  %v170 = vunpack.c.l.bf16 %v106
  %v172 = vlaneseq
  %v173 = vshrl.u32 %v172, 7
  %v174 = vsub.s32 0, %v173
  %v175 = vrot.slane %v40, %v174
  %v177 = vmul.f32 %v107, %v175
  %v178 = vmul.f32 %v108, %v175
  %v179 = vmul.f32 %v109, %v175
  %v180 = vmul.f32 %v110, %v175
  %v181 = vmul.f32 %v111, %v175
  %v182 = vmul.f32 %v112, %v175
  %v183 = vmul.f32 %v113, %v175
  %v184 = vmul.f32 %v114, %v175
  %v185 = vmul.f32 %v115, %v175
  %v186 = vmul.f32 %v116, %v175
  %v187 = vmul.f32 %v117, %v175
  %v188 = vmul.f32 %v118, %v175
  %v189 = vmul.f32 %v119, %v175
  %v190 = vmul.f32 %v120, %v175
  %v191 = vmul.f32 %v121, %v175
  %v192 = vmul.f32 %v122, %v175
  %v193 = vmul.f32 %v123, %v175
  %v194 = vmul.f32 %v124, %v175
  %v195 = vmul.f32 %v125, %v175
  %v196 = vmul.f32 %v126, %v175
  %v197 = vmul.f32 %v127, %v175
  %v198 = vmul.f32 %v128, %v175
  %v199 = vmul.f32 %v129, %v175
  %v200 = vmul.f32 %v130, %v175
  %v201 = vmul.f32 %v131, %v175
  %v202 = vmul.f32 %v132, %v175
  %v203 = vmul.f32 %v133, %v175
  %v204 = vmul.f32 %v134, %v175
  %v205 = vmul.f32 %v135, %v175
  %v206 = vmul.f32 %v136, %v175
  %v207 = vmul.f32 %v137, %v175
  %v208 = vmul.f32 %v138, %v175
  %v209 = vmul.f32 %v139, %v175
  %v210 = vmul.f32 %v140, %v175
  %v211 = vmul.f32 %v141, %v175
  %v212 = vmul.f32 %v142, %v175
  %v213 = vmul.f32 %v143, %v175
  %v214 = vmul.f32 %v144, %v175
  %v215 = vmul.f32 %v145, %v175
  %v216 = vmul.f32 %v146, %v175
  %v217 = vmul.f32 %v147, %v175
  %v218 = vmul.f32 %v148, %v175
  %v219 = vmul.f32 %v149, %v175
  %v220 = vmul.f32 %v150, %v175
  %v221 = vmul.f32 %v151, %v175
  %v222 = vmul.f32 %v152, %v175
  %v223 = vmul.f32 %v153, %v175
  %v224 = vmul.f32 %v154, %v175
  %v225 = vmul.f32 %v155, %v175
  %v226 = vmul.f32 %v156, %v175
  %v227 = vmul.f32 %v157, %v175
  %v228 = vmul.f32 %v158, %v175
  %v229 = vmul.f32 %v159, %v175
  %v230 = vmul.f32 %v160, %v175
  %v231 = vmul.f32 %v161, %v175
  %v232 = vmul.f32 %v162, %v175
  %v233 = vmul.f32 %v163, %v175
  %v234 = vmul.f32 %v164, %v175
  %v235 = vmul.f32 %v165, %v175
  %v236 = vmul.f32 %v166, %v175
  %v237 = vmul.f32 %v167, %v175
  %v238 = vmul.f32 %v168, %v175
  %v239 = vmul.f32 %v169, %v175
  %v240 = vmul.f32 %v170, %v175
  %v242 = vlaneseq
  %v243 = vshrl.u32 %v242, 7
  %v244 = vsub.s32 0, %v243
  %v245 = vrot.slane %v42, %v244
  %v247 = vadd.f32 %v177, %v245
  %v248 = vadd.f32 %v178, %v245
  %v249 = vadd.f32 %v179, %v245
  %v250 = vadd.f32 %v180, %v245
  %v251 = vadd.f32 %v181, %v245
  %v252 = vadd.f32 %v182, %v245
  %v253 = vadd.f32 %v183, %v245
  %v254 = vadd.f32 %v184, %v245
  %v255 = vadd.f32 %v185, %v245
  %v256 = vadd.f32 %v186, %v245
  %v257 = vadd.f32 %v187, %v245
  %v258 = vadd.f32 %v188, %v245
  %v259 = vadd.f32 %v189, %v245
  %v260 = vadd.f32 %v190, %v245
  %v261 = vadd.f32 %v191, %v245
  %v262 = vadd.f32 %v192, %v245
  %v263 = vadd.f32 %v193, %v245
  %v264 = vadd.f32 %v194, %v245
  %v265 = vadd.f32 %v195, %v245
  %v266 = vadd.f32 %v196, %v245
  %v267 = vadd.f32 %v197, %v245
  %v268 = vadd.f32 %v198, %v245
  %v269 = vadd.f32 %v199, %v245
  %v270 = vadd.f32 %v200, %v245
  %v271 = vadd.f32 %v201, %v245
  %v272 = vadd.f32 %v202, %v245
  %v273 = vadd.f32 %v203, %v245
  %v274 = vadd.f32 %v204, %v245
  %v275 = vadd.f32 %v205, %v245
  %v276 = vadd.f32 %v206, %v245
  %v277 = vadd.f32 %v207, %v245
  %v278 = vadd.f32 %v208, %v245
  %v279 = vadd.f32 %v209, %v245
  %v280 = vadd.f32 %v210, %v245
  %v281 = vadd.f32 %v211, %v245
  %v282 = vadd.f32 %v212, %v245
  %v283 = vadd.f32 %v213, %v245
  %v284 = vadd.f32 %v214, %v245
  %v285 = vadd.f32 %v215, %v245
  %v286 = vadd.f32 %v216, %v245
  %v287 = vadd.f32 %v217, %v245
  %v288 = vadd.f32 %v218, %v245
  %v289 = vadd.f32 %v219, %v245
  %v290 = vadd.f32 %v220, %v245
  %v291 = vadd.f32 %v221, %v245
  %v292 = vadd.f32 %v222, %v245
  %v293 = vadd.f32 %v223, %v245
  %v294 = vadd.f32 %v224, %v245
  %v295 = vadd.f32 %v225, %v245
  %v296 = vadd.f32 %v226, %v245
  %v297 = vadd.f32 %v227, %v245
  %v298 = vadd.f32 %v228, %v245
  %v299 = vadd.f32 %v229, %v245
  %v300 = vadd.f32 %v230, %v245
  %v301 = vadd.f32 %v231, %v245
  %v302 = vadd.f32 %v232, %v245
  %v303 = vadd.f32 %v233, %v245
  %v304 = vadd.f32 %v234, %v245
  %v305 = vadd.f32 %v235, %v245
  %v306 = vadd.f32 %v236, %v245
  %v307 = vadd.f32 %v237, %v245
  %v308 = vadd.f32 %v238, %v245
  %v309 = vadd.f32 %v239, %v245
  %v310 = vadd.f32 %v240, %v245
  %v311 = vmax.f32 %v247, 0.0
  %v312 = vmax.f32 %v248, 0.0
  %v313 = vmax.f32 %v249, 0.0
  %v314 = vmax.f32 %v250, 0.0
  %v315 = vmax.f32 %v251, 0.0
  %v316 = vmax.f32 %v252, 0.0
  %v317 = vmax.f32 %v253, 0.0
  %v318 = vmax.f32 %v254, 0.0
  %v319 = vmax.f32 %v255, 0.0
  %v320 = vmax.f32 %v256, 0.0
  %v321 = vmax.f32 %v257, 0.0
  %v322 = vmax.f32 %v258, 0.0
  %v323 = vmax.f32 %v259, 0.0
  %v324 = vmax.f32 %v260, 0.0
  %v325 = vmax.f32 %v261, 0.0
  %v326 = vmax.f32 %v262, 0.0
  %v327 = vmax.f32 %v263, 0.0
  %v328 = vmax.f32 %v264, 0.0
  %v329 = vmax.f32 %v265, 0.0
  %v330 = vmax.f32 %v266, 0.0
  %v331 = vmax.f32 %v267, 0.0
  %v332 = vmax.f32 %v268, 0.0
  %v333 = vmax.f32 %v269, 0.0
  %v334 = vmax.f32 %v270, 0.0
  %v335 = vmax.f32 %v271, 0.0
  %v336 = vmax.f32 %v272, 0.0
  %v337 = vmax.f32 %v273, 0.0
  %v338 = vmax.f32 %v274, 0.0
  %v339 = vmax.f32 %v275, 0.0
  %v340 = vmax.f32 %v276, 0.0
  %v341 = vmax.f32 %v277, 0.0
  %v342 = vmax.f32 %v278, 0.0
  %v343 = vmax.f32 %v279, 0.0
  %v344 = vmax.f32 %v280, 0.0
  %v345 = vmax.f32 %v281, 0.0
  %v346 = vmax.f32 %v282, 0.0
  %v347 = vmax.f32 %v283, 0.0
  %v348 = vmax.f32 %v284, 0.0
  %v349 = vmax.f32 %v285, 0.0
  %v350 = vmax.f32 %v286, 0.0
  %v351 = vmax.f32 %v287, 0.0
  %v352 = vmax.f32 %v288, 0.0
  %v353 = vmax.f32 %v289, 0.0
  %v354 = vmax.f32 %v290, 0.0
  %v355 = vmax.f32 %v291, 0.0
  %v356 = vmax.f32 %v292, 0.0
  %v357 = vmax.f32 %v293, 0.0
  %v358 = vmax.f32 %v294, 0.0
  %v359 = vmax.f32 %v295, 0.0
  %v360 = vmax.f32 %v296, 0.0
  %v361 = vmax.f32 %v297, 0.0
  %v362 = vmax.f32 %v298, 0.0
  %v363 = vmax.f32 %v299, 0.0
  %v364 = vmax.f32 %v300, 0.0
  %v365 = vmax.f32 %v301, 0.0
  %v366 = vmax.f32 %v302, 0.0
  %v367 = vmax.f32 %v303, 0.0
  %v368 = vmax.f32 %v304, 0.0
  %v369 = vmax.f32 %v305, 0.0
  %v370 = vmax.f32 %v306, 0.0
  %v371 = vmax.f32 %v307, 0.0
  %v372 = vmax.f32 %v308, 0.0
  %v373 = vmax.f32 %v309, 0.0
  %v374 = vmax.f32 %v310, 0.0
  %v375 = vpack.c.bf16 %v312, %v311
  %v376 = vpack.c.bf16 %v314, %v313
  %v377 = vpack.c.bf16 %v316, %v315
  %v378 = vpack.c.bf16 %v318, %v317
  %v379 = vpack.c.bf16 %v320, %v319
  %v380 = vpack.c.bf16 %v322, %v321
  %v381 = vpack.c.bf16 %v324, %v323
  %v382 = vpack.c.bf16 %v326, %v325
  %v383 = vpack.c.bf16 %v328, %v327
  %v384 = vpack.c.bf16 %v330, %v329
  %v385 = vpack.c.bf16 %v332, %v331
  %v386 = vpack.c.bf16 %v334, %v333
  %v387 = vpack.c.bf16 %v336, %v335
  %v388 = vpack.c.bf16 %v338, %v337
  %v389 = vpack.c.bf16 %v340, %v339
  %v390 = vpack.c.bf16 %v342, %v341
  %v391 = vpack.c.bf16 %v344, %v343
  %v392 = vpack.c.bf16 %v346, %v345
  %v393 = vpack.c.bf16 %v348, %v347
  %v394 = vpack.c.bf16 %v350, %v349
  %v395 = vpack.c.bf16 %v352, %v351
  %v396 = vpack.c.bf16 %v354, %v353
  %v397 = vpack.c.bf16 %v356, %v355
  %v398 = vpack.c.bf16 %v358, %v357
  %v399 = vpack.c.bf16 %v360, %v359
  %v400 = vpack.c.bf16 %v362, %v361
  %v401 = vpack.c.bf16 %v364, %v363
  %v402 = vpack.c.bf16 %v366, %v365
  %v403 = vpack.c.bf16 %v368, %v367
  %v404 = vpack.c.bf16 %v370, %v369
  %v405 = vpack.c.bf16 %v372, %v371
  %v406 = vpack.c.bf16 %v374, %v373
  %v439 = vunpack.c.l.b16 %v375
  %v440 = vunpack.c.h.b16 %v375
  %v441 = vunpack.c.l.b16 %v376
  %v442 = vunpack.c.h.b16 %v376
  %v443 = vunpack.c.l.b16 %v377
  %v444 = vunpack.c.h.b16 %v377
  %v445 = vunpack.c.l.b16 %v378
  %v446 = vunpack.c.h.b16 %v378
  %v447 = vunpack.c.l.b16 %v379
  %v448 = vunpack.c.h.b16 %v379
  %v449 = vunpack.c.l.b16 %v380
  %v450 = vunpack.c.h.b16 %v380
  %v451 = vunpack.c.l.b16 %v381
  %v452 = vunpack.c.h.b16 %v381
  %v453 = vunpack.c.l.b16 %v382
  %v454 = vunpack.c.h.b16 %v382
  %v455 = vunpack.c.l.b16 %v383
  %v456 = vunpack.c.h.b16 %v383
  %v457 = vunpack.c.l.b16 %v384
  %v458 = vunpack.c.h.b16 %v384
  %v459 = vunpack.c.l.b16 %v385
  %v460 = vunpack.c.h.b16 %v385
  %v461 = vunpack.c.l.b16 %v386
  %v462 = vunpack.c.h.b16 %v386
  %v463 = vunpack.c.l.b16 %v387
  %v464 = vunpack.c.h.b16 %v387
  %v465 = vunpack.c.l.b16 %v388
  %v466 = vunpack.c.h.b16 %v388
  %v467 = vunpack.c.l.b16 %v389
  %v468 = vunpack.c.h.b16 %v389
  %v469 = vunpack.c.l.b16 %v390
  %v470 = vunpack.c.h.b16 %v390
  %v471 = vunpack.c.l.b16 %v391
  %v472 = vunpack.c.h.b16 %v391
  %v473 = vunpack.c.l.b16 %v392
  %v474 = vunpack.c.h.b16 %v392
  %v475 = vunpack.c.l.b16 %v393
  %v476 = vunpack.c.h.b16 %v393
  %v477 = vunpack.c.l.b16 %v394
  %v478 = vunpack.c.h.b16 %v394
  %v479 = vunpack.c.l.b16 %v395
  %v480 = vunpack.c.h.b16 %v395
  %v481 = vunpack.c.l.b16 %v396
  %v482 = vunpack.c.h.b16 %v396
  %v483 = vunpack.c.l.b16 %v397
  %v484 = vunpack.c.h.b16 %v397
  %v485 = vunpack.c.l.b16 %v398
  %v486 = vunpack.c.h.b16 %v398
  %v487 = vunpack.c.l.b16 %v399
  %v488 = vunpack.c.h.b16 %v399
  %v489 = vunpack.c.l.b16 %v400
  %v490 = vunpack.c.h.b16 %v400
  %v491 = vunpack.c.l.b16 %v401
  %v492 = vunpack.c.h.b16 %v401
  %v493 = vunpack.c.l.b16 %v402
  %v494 = vunpack.c.h.b16 %v402
  %v495 = vunpack.c.l.b16 %v403
  %v496 = vunpack.c.h.b16 %v403
  %v497 = vunpack.c.l.b16 %v404
  %v498 = vunpack.c.h.b16 %v404
  %v499 = vunpack.c.l.b16 %v405
  %v500 = vunpack.c.h.b16 %v405
  %v501 = vunpack.c.l.b16 %v406
  %v502 = vunpack.c.h.b16 %v406
  %v503 = vpack.c.b16 %v439, %v439
  %v504 = vpack.c.b16 %v440, %v440
  %v505 = vpack.c.b16 %v441, %v441
  %v506 = vpack.c.b16 %v442, %v442
  %v507 = vpack.c.b16 %v443, %v443
  %v508 = vpack.c.b16 %v444, %v444
  %v509 = vpack.c.b16 %v445, %v445
  %v510 = vpack.c.b16 %v446, %v446
  %v511 = vpack.c.b16 %v447, %v447
  %v512 = vpack.c.b16 %v448, %v448
  %v513 = vpack.c.b16 %v449, %v449
  %v514 = vpack.c.b16 %v450, %v450
  %v515 = vpack.c.b16 %v451, %v451
  %v516 = vpack.c.b16 %v452, %v452
  %v517 = vpack.c.b16 %v453, %v453
  %v518 = vpack.c.b16 %v454, %v454
  %v519 = vpack.c.b16 %v455, %v455
  %v520 = vpack.c.b16 %v456, %v456
  %v521 = vpack.c.b16 %v457, %v457
  %v522 = vpack.c.b16 %v458, %v458
  %v523 = vpack.c.b16 %v459, %v459
  %v524 = vpack.c.b16 %v460, %v460
  %v525 = vpack.c.b16 %v461, %v461
  %v526 = vpack.c.b16 %v462, %v462
  %v527 = vpack.c.b16 %v463, %v463
  %v528 = vpack.c.b16 %v464, %v464
  %v529 = vpack.c.b16 %v465, %v465
  %v530 = vpack.c.b16 %v466, %v466
  %v531 = vpack.c.b16 %v467, %v467
  %v532 = vpack.c.b16 %v468, %v468
  %v533 = vpack.c.b16 %v469, %v469
  %v534 = vpack.c.b16 %v470, %v470
  %v535 = vpack.c.b16 %v471, %v471
  %v536 = vpack.c.b16 %v472, %v472
  %v537 = vpack.c.b16 %v473, %v473
  %v538 = vpack.c.b16 %v474, %v474
  %v539 = vpack.c.b16 %v475, %v475
  %v540 = vpack.c.b16 %v476, %v476
  %v541 = vpack.c.b16 %v477, %v477
  %v542 = vpack.c.b16 %v478, %v478
  %v543 = vpack.c.b16 %v479, %v479
  %v544 = vpack.c.b16 %v480, %v480
  %v545 = vpack.c.b16 %v481, %v481
  %v546 = vpack.c.b16 %v482, %v482
  %v547 = vpack.c.b16 %v483, %v483
  %v548 = vpack.c.b16 %v484, %v484
  %v549 = vpack.c.b16 %v485, %v485
  %v550 = vpack.c.b16 %v486, %v486
  %v551 = vpack.c.b16 %v487, %v487
  %v552 = vpack.c.b16 %v488, %v488
  %v553 = vpack.c.b16 %v489, %v489
  %v554 = vpack.c.b16 %v490, %v490
  %v555 = vpack.c.b16 %v491, %v491
  %v556 = vpack.c.b16 %v492, %v492
  %v557 = vpack.c.b16 %v493, %v493
  %v558 = vpack.c.b16 %v494, %v494
  %v559 = vpack.c.b16 %v495, %v495
  %v560 = vpack.c.b16 %v496, %v496
  %v561 = vpack.c.b16 %v497, %v497
  %v562 = vpack.c.b16 %v498, %v498
  %v563 = vpack.c.b16 %v499, %v499
  %v564 = vpack.c.b16 %v500, %v500
  %v565 = vpack.c.b16 %v501, %v501
  %v566 = vpack.c.b16 %v502, %v502
  %631 = vst [vmem:[%s4] sm:$0xf] %v503
  %632 = vst [vmem:[%s4 + $0x4] sm:$0xf] %v504
  %633 = vst [vmem:[%s4 + $0x8] sm:$0xf] %v505
  %634 = vst [vmem:[%s4 + $0xc] sm:$0xf] %v506
  %635 = vst [vmem:[%s4 + $0x10] sm:$0xf] %v507
  %636 = vst [vmem:[%s4 + $0x14] sm:$0xf] %v508
  %637 = vst [vmem:[%s4 + $0x18] sm:$0xf] %v509
  %638 = vst [vmem:[%s4 + $0x1c] sm:$0xf] %v510
  %639 = vst [vmem:[%s4 + $0x20] sm:$0xf] %v511
  %640 = vst [vmem:[%s4 + $0x24] sm:$0xf] %v512
  %641 = vst [vmem:[%s4 + $0x28] sm:$0xf] %v513
  %642 = vst [vmem:[%s4 + $0x2c] sm:$0xf] %v514
  %643 = vst [vmem:[%s4 + $0x30] sm:$0xf] %v515
  %644 = vst [vmem:[%s4 + $0x34] sm:$0xf] %v516
  %645 = vst [vmem:[%s4 + $0x38] sm:$0xf] %v517
  %646 = vst [vmem:[%s4 + $0x3c] sm:$0xf] %v518
  %647 = vst [vmem:[%s4 + $0x40] sm:$0xf] %v519
  %648 = vst [vmem:[%s4 + $0x44] sm:$0xf] %v520
  %649 = vst [vmem:[%s4 + $0x48] sm:$0xf] %v521
  %650 = vst [vmem:[%s4 + $0x4c] sm:$0xf] %v522
  %651 = vst [vmem:[%s4 + $0x50] sm:$0xf] %v523
  %652 = vst [vmem:[%s4 + $0x54] sm:$0xf] %v524
  %653 = vst [vmem:[%s4 + $0x58] sm:$0xf] %v525
  %654 = vst [vmem:[%s4 + $0x5c] sm:$0xf] %v526
  %655 = vst [vmem:[%s4 + $0x60] sm:$0xf] %v527
  %656 = vst [vmem:[%s4 + $0x64] sm:$0xf] %v528
  %657 = vst [vmem:[%s4 + $0x68] sm:$0xf] %v529
  %658 = vst [vmem:[%s4 + $0x6c] sm:$0xf] %v530
  %659 = vst [vmem:[%s4 + $0x70] sm:$0xf] %v531
  %660 = vst [vmem:[%s4 + $0x74] sm:$0xf] %v532
  %661 = vst [vmem:[%s4 + $0x78] sm:$0xf] %v533
  %662 = vst [vmem:[%s4 + $0x7c] sm:$0xf] %v534
  %663 = vst [vmem:[%s4 + $0x80] sm:$0xf] %v535
  %664 = vst [vmem:[%s4 + $0x84] sm:$0xf] %v536
  %665 = vst [vmem:[%s4 + $0x88] sm:$0xf] %v537
  %666 = vst [vmem:[%s4 + $0x8c] sm:$0xf] %v538
  %667 = vst [vmem:[%s4 + $0x90] sm:$0xf] %v539
  %668 = vst [vmem:[%s4 + $0x94] sm:$0xf] %v540
  %669 = vst [vmem:[%s4 + $0x98] sm:$0xf] %v541
  %670 = vst [vmem:[%s4 + $0x9c] sm:$0xf] %v542
  %671 = vst [vmem:[%s4 + $0xa0] sm:$0xf] %v543
  %672 = vst [vmem:[%s4 + $0xa4] sm:$0xf] %v544
  %673 = vst [vmem:[%s4 + $0xa8] sm:$0xf] %v545
  %674 = vst [vmem:[%s4 + $0xac] sm:$0xf] %v546
  %675 = vst [vmem:[%s4 + $0xb0] sm:$0xf] %v547
  %676 = vst [vmem:[%s4 + $0xb4] sm:$0xf] %v548
  %677 = vst [vmem:[%s4 + $0xb8] sm:$0xf] %v549
  %678 = vst [vmem:[%s4 + $0xbc] sm:$0xf] %v550
  %679 = vst [vmem:[%s4 + $0xc0] sm:$0xf] %v551
  %680 = vst [vmem:[%s4 + $0xc4] sm:$0xf] %v552
  %681 = vst [vmem:[%s4 + $0xc8] sm:$0xf] %v553
  %682 = vst [vmem:[%s4 + $0xcc] sm:$0xf] %v554
  %683 = vst [vmem:[%s4 + $0xd0] sm:$0xf] %v555
  %684 = vst [vmem:[%s4 + $0xd4] sm:$0xf] %v556
  %685 = vst [vmem:[%s4 + $0xd8] sm:$0xf] %v557
  %686 = vst [vmem:[%s4 + $0xdc] sm:$0xf] %v558
  %687 = vst [vmem:[%s4 + $0xe0] sm:$0xf] %v559
  %688 = vst [vmem:[%s4 + $0xe4] sm:$0xf] %v560
  %689 = vst [vmem:[%s4 + $0xe8] sm:$0xf] %v561
  %690 = vst [vmem:[%s4 + $0xec] sm:$0xf] %v562
  %691 = vst [vmem:[%s4 + $0xf0] sm:$0xf] %v563
  %692 = vst [vmem:[%s4 + $0xf4] sm:$0xf] %v564
  %693 = vst [vmem:[%s4 + $0xf8] sm:$0xf] %v565
  %694 = vst [vmem:[%s4 + $0xfc] sm:$0xf] %v566
  // Predicated region
  $region18: #{bottleneck_forward.7} parent=0 // pred_check
    _
  $region19: #{bottleneck_forward.7} parent=0 // pred_check_branch
    %696 = sbr.rel (0) target = $region21
  $region20: #{bottleneck_forward.7} parent=0 // pred_region
    _
  $region21: #{bottleneck_forward.7} parent=0 // pred_fallthru
    _
  // Predicated region
  $region22: #{bottleneck_forward.7} parent=0 // pred_check
    _
  $region23: #{bottleneck_forward.7} parent=0 // pred_check_branch
    %698 = sbr.rel (0) target = $region25
  $region24: #{bottleneck_forward.7} parent=0 // pred_region
    _
  $region25: #{bottleneck_forward.7} parent=0 // pred_fallthru
    _

// kernel: bottleneck_forward.6
$region0: #{bottleneck_forward.6}
  #allocation0 [shape = 'u32[]', space=smem, size = 0x4, offset = 0x4, fixed_abs, tag = 'smem constant byte address 0x4 - core index']
  #allocation1 [shape = 'u32[144,128]{1,0:T(1,128)}', space=vmem, size = 0x12000, scoped, tag = 'internal scratch']
  #allocation2 [shape = 'f32[16,128]{1,0:T(8,128)}', space=vmem, size = 0x2000, scoped, tag = 'scratch operand']
  %s0 = inlined_call_operand.vmem [shape: bf16[512,128], index: 0, kind: input, shape index: {}]
  %s1 = inlined_call_operand.vmem [shape: bf16[128,128], index: 1, kind: input, shape index: {}]
  %s2 = inlined_call_operand.vmem [shape: bf16[512,128], index: 2, kind: output, shape index: {0}]
  %s3 = inlined_call_operand.vmem [shape: f32[16,128], index: 3, kind: output, shape index: {1}]
  %4 = xla_tuple %s2, %s3
  %s5 = sld [smem:[#allocation0]]
  $region34: #{bottleneck_forward.6} parent=0
    _
  %s7 = ssub.s32 1, %s5
  %s8 = scalar_select 0, %s7, %s5
  // Predicated region
  $region2: #{bottleneck_forward.6} parent=0 // pred_check
    _
  $region3: #{bottleneck_forward.6} parent=0 // pred_check_branch
    %10 = sbr.rel (0) target = $region5
  $region4: #{bottleneck_forward.6} parent=0 // pred_region
    _
  $region5: #{bottleneck_forward.6} parent=0 // pred_fallthru
    _
  // Predicated region
  $region6: #{bottleneck_forward.6} parent=0 // pred_check
    _
  $region7: #{bottleneck_forward.6} parent=0 // pred_check_branch
    %12 = sbr.rel (0) target = $region9
  $region8: #{bottleneck_forward.6} parent=0 // pred_region
    _
  $region9: #{bottleneck_forward.6} parent=0 // pred_fallthru
    _
  %p14 = scmp.eq.s32.totalorder 0, 0
  // Predicated region
  $region10: #{bottleneck_forward.6} parent=0 // pred_check
    %p15 = pneg %p14
  $region11: #{bottleneck_forward.6} parent=0 // pred_check_branch
    %17 = sbr.rel (%p15) target = $region13
  $region12: #{bottleneck_forward.6} parent=0 // pred_region
    %18 = vst [vmem:[#allocation2] sm:$0xff] 0.0
    %19 = vst [vmem:[#allocation2 + $0x8] sm:$0xff] 0.0
  $region13: #{bottleneck_forward.6} parent=0 // pred_fallthru
    _
  %v20 = vld [vmem:[%s0] sm:$0xf]
  %v21 = vld [vmem:[%s0 + $0x4] sm:$0xf]
  %v22 = vld [vmem:[%s0 + $0x8] sm:$0xf]
  %v23 = vld [vmem:[%s0 + $0xc] sm:$0xf]
  %v24 = vld [vmem:[%s0 + $0x10] sm:$0xf]
  %v25 = vld [vmem:[%s0 + $0x14] sm:$0xf]
  %v26 = vld [vmem:[%s0 + $0x18] sm:$0xf]
  %v27 = vld [vmem:[%s0 + $0x1c] sm:$0xf]
  %v28 = vld [vmem:[%s0 + $0x20] sm:$0xf]
  %v29 = vld [vmem:[%s0 + $0x24] sm:$0xf]
  %v30 = vld [vmem:[%s0 + $0x28] sm:$0xf]
  %v31 = vld [vmem:[%s0 + $0x2c] sm:$0xf]
  %v32 = vld [vmem:[%s0 + $0x30] sm:$0xf]
  %v33 = vld [vmem:[%s0 + $0x34] sm:$0xf]
  %v34 = vld [vmem:[%s0 + $0x38] sm:$0xf]
  %v35 = vld [vmem:[%s0 + $0x3c] sm:$0xf]
  %v36 = vld [vmem:[%s0 + $0x40] sm:$0xf]
  %v37 = vld [vmem:[%s0 + $0x44] sm:$0xf]
  %v38 = vld [vmem:[%s0 + $0x48] sm:$0xf]
  %v39 = vld [vmem:[%s0 + $0x4c] sm:$0xf]
  %v40 = vld [vmem:[%s0 + $0x50] sm:$0xf]
  %v41 = vld [vmem:[%s0 + $0x54] sm:$0xf]
  %v42 = vld [vmem:[%s0 + $0x58] sm:$0xf]
  %v43 = vld [vmem:[%s0 + $0x5c] sm:$0xf]
  %v44 = vld [vmem:[%s0 + $0x60] sm:$0xf]
  %v45 = vld [vmem:[%s0 + $0x64] sm:$0xf]
  %v46 = vld [vmem:[%s0 + $0x68] sm:$0xf]
  %v47 = vld [vmem:[%s0 + $0x6c] sm:$0xf]
  %v48 = vld [vmem:[%s0 + $0x70] sm:$0xf]
  %v49 = vld [vmem:[%s0 + $0x74] sm:$0xf]
  %v50 = vld [vmem:[%s0 + $0x78] sm:$0xf]
  %v51 = vld [vmem:[%s0 + $0x7c] sm:$0xf]
  %v52 = vld [vmem:[%s0 + $0x80] sm:$0xf]
  %v53 = vld [vmem:[%s0 + $0x84] sm:$0xf]
  %v54 = vld [vmem:[%s0 + $0x88] sm:$0xf]
  %v55 = vld [vmem:[%s0 + $0x8c] sm:$0xf]
  %v56 = vld [vmem:[%s0 + $0x90] sm:$0xf]
  %v57 = vld [vmem:[%s0 + $0x94] sm:$0xf]
  %v58 = vld [vmem:[%s0 + $0x98] sm:$0xf]
  %v59 = vld [vmem:[%s0 + $0x9c] sm:$0xf]
  %v60 = vld [vmem:[%s0 + $0xa0] sm:$0xf]
  %v61 = vld [vmem:[%s0 + $0xa4] sm:$0xf]
  %v62 = vld [vmem:[%s0 + $0xa8] sm:$0xf]
  %v63 = vld [vmem:[%s0 + $0xac] sm:$0xf]
  %v64 = vld [vmem:[%s0 + $0xb0] sm:$0xf]
  %v65 = vld [vmem:[%s0 + $0xb4] sm:$0xf]
  %v66 = vld [vmem:[%s0 + $0xb8] sm:$0xf]
  %v67 = vld [vmem:[%s0 + $0xbc] sm:$0xf]
  %v68 = vld [vmem:[%s0 + $0xc0] sm:$0xf]
  %v69 = vld [vmem:[%s0 + $0xc4] sm:$0xf]
  %v70 = vld [vmem:[%s0 + $0xc8] sm:$0xf]
  %v71 = vld [vmem:[%s0 + $0xcc] sm:$0xf]
  %v72 = vld [vmem:[%s0 + $0xd0] sm:$0xf]
  %v73 = vld [vmem:[%s0 + $0xd4] sm:$0xf]
  %v74 = vld [vmem:[%s0 + $0xd8] sm:$0xf]
  %v75 = vld [vmem:[%s0 + $0xdc] sm:$0xf]
  %v76 = vld [vmem:[%s0 + $0xe0] sm:$0xf]
  %v77 = vld [vmem:[%s0 + $0xe4] sm:$0xf]
  %v78 = vld [vmem:[%s0 + $0xe8] sm:$0xf]
  %v79 = vld [vmem:[%s0 + $0xec] sm:$0xf]
  %v80 = vld [vmem:[%s0 + $0xf0] sm:$0xf]
  %v81 = vld [vmem:[%s0 + $0xf4] sm:$0xf]
  %v82 = vld [vmem:[%s0 + $0xf8] sm:$0xf]
  %v83 = vld [vmem:[%s0 + $0xfc] sm:$0xf]
  %v84 = vld [vmem:[%s1] sm:$0xf]
  %v85 = vld [vmem:[%s1 + $0x4] sm:$0xf]
  %v86 = vld [vmem:[%s1 + $0x8] sm:$0xf]
  %v87 = vld [vmem:[%s1 + $0xc] sm:$0xf]
  %v88 = vld [vmem:[%s1 + $0x10] sm:$0xf]
  %v89 = vld [vmem:[%s1 + $0x14] sm:$0xf]
  %v90 = vld [vmem:[%s1 + $0x18] sm:$0xf]
  %v91 = vld [vmem:[%s1 + $0x1c] sm:$0xf]
  %v92 = vld [vmem:[%s1 + $0x20] sm:$0xf]
  %v93 = vld [vmem:[%s1 + $0x24] sm:$0xf]
  %v94 = vld [vmem:[%s1 + $0x28] sm:$0xf]
  %v95 = vld [vmem:[%s1 + $0x2c] sm:$0xf]
  %v96 = vld [vmem:[%s1 + $0x30] sm:$0xf]
  %v97 = vld [vmem:[%s1 + $0x34] sm:$0xf]
  %v98 = vld [vmem:[%s1 + $0x38] sm:$0xf]
  %v99 = vld [vmem:[%s1 + $0x3c] sm:$0xf]
  %v164 = vunpack.c.l.b16 %v20
  %v165 = vunpack.c.l.b16 %v21
  %v166 = vunpack.c.l.b16 %v22
  %v167 = vunpack.c.l.b16 %v23
  %v168 = vunpack.c.l.b16 %v24
  %v169 = vunpack.c.l.b16 %v25
  %v170 = vunpack.c.l.b16 %v26
  %v171 = vunpack.c.l.b16 %v27
  %v172 = vunpack.c.l.b16 %v28
  %v173 = vunpack.c.l.b16 %v29
  %v174 = vunpack.c.l.b16 %v30
  %v175 = vunpack.c.l.b16 %v31
  %v176 = vunpack.c.l.b16 %v32
  %v177 = vunpack.c.l.b16 %v33
  %v178 = vunpack.c.l.b16 %v34
  %v179 = vunpack.c.l.b16 %v35
  %v180 = vunpack.c.l.b16 %v36
  %v181 = vunpack.c.l.b16 %v37
  %v182 = vunpack.c.l.b16 %v38
  %v183 = vunpack.c.l.b16 %v39
  %v184 = vunpack.c.l.b16 %v40
  %v185 = vunpack.c.l.b16 %v41
  %v186 = vunpack.c.l.b16 %v42
  %v187 = vunpack.c.l.b16 %v43
  %v188 = vunpack.c.l.b16 %v44
  %v189 = vunpack.c.l.b16 %v45
  %v190 = vunpack.c.l.b16 %v46
  %v191 = vunpack.c.l.b16 %v47
  %v192 = vunpack.c.l.b16 %v48
  %v193 = vunpack.c.l.b16 %v49
  %v194 = vunpack.c.l.b16 %v50
  %v195 = vunpack.c.l.b16 %v51
  %v196 = vunpack.c.l.b16 %v52
  %v197 = vunpack.c.l.b16 %v53
  %v198 = vunpack.c.l.b16 %v54
  %v199 = vunpack.c.l.b16 %v55
  %v200 = vunpack.c.l.b16 %v56
  %v201 = vunpack.c.l.b16 %v57
  %v202 = vunpack.c.l.b16 %v58
  %v203 = vunpack.c.l.b16 %v59
  %v204 = vunpack.c.l.b16 %v60
  %v205 = vunpack.c.l.b16 %v61
  %v206 = vunpack.c.l.b16 %v62
  %v207 = vunpack.c.l.b16 %v63
  %v208 = vunpack.c.l.b16 %v64
  %v209 = vunpack.c.l.b16 %v65
  %v210 = vunpack.c.l.b16 %v66
  %v211 = vunpack.c.l.b16 %v67
  %v212 = vunpack.c.l.b16 %v68
  %v213 = vunpack.c.l.b16 %v69
  %v214 = vunpack.c.l.b16 %v70
  %v215 = vunpack.c.l.b16 %v71
  %v216 = vunpack.c.l.b16 %v72
  %v217 = vunpack.c.l.b16 %v73
  %v218 = vunpack.c.l.b16 %v74
  %v219 = vunpack.c.l.b16 %v75
  %v220 = vunpack.c.l.b16 %v76
  %v221 = vunpack.c.l.b16 %v77
  %v222 = vunpack.c.l.b16 %v78
  %v223 = vunpack.c.l.b16 %v79
  %v224 = vunpack.c.l.b16 %v80
  %v225 = vunpack.c.l.b16 %v81
  %v226 = vunpack.c.l.b16 %v82
  %v227 = vunpack.c.l.b16 %v83
  %v228 = vpack.c.b16 %v165, %v164
  %v229 = vpack.c.b16 %v167, %v166
  %v230 = vpack.c.b16 %v169, %v168
  %v231 = vpack.c.b16 %v171, %v170
  %v232 = vpack.c.b16 %v173, %v172
  %v233 = vpack.c.b16 %v175, %v174
  %v234 = vpack.c.b16 %v177, %v176
  %v235 = vpack.c.b16 %v179, %v178
  %v236 = vpack.c.b16 %v181, %v180
  %v237 = vpack.c.b16 %v183, %v182
  %v238 = vpack.c.b16 %v185, %v184
  %v239 = vpack.c.b16 %v187, %v186
  %v240 = vpack.c.b16 %v189, %v188
  %v241 = vpack.c.b16 %v191, %v190
  %v242 = vpack.c.b16 %v193, %v192
  %v243 = vpack.c.b16 %v195, %v194
  %v244 = vpack.c.b16 %v197, %v196
  %v245 = vpack.c.b16 %v199, %v198
  %v246 = vpack.c.b16 %v201, %v200
  %v247 = vpack.c.b16 %v203, %v202
  %v248 = vpack.c.b16 %v205, %v204
  %v249 = vpack.c.b16 %v207, %v206
  %v250 = vpack.c.b16 %v209, %v208
  %v251 = vpack.c.b16 %v211, %v210
  %v252 = vpack.c.b16 %v213, %v212
  %v253 = vpack.c.b16 %v215, %v214
  %v254 = vpack.c.b16 %v217, %v216
  %v255 = vpack.c.b16 %v219, %v218
  %v256 = vpack.c.b16 %v221, %v220
  %v257 = vpack.c.b16 %v223, %v222
  %v258 = vpack.c.b16 %v225, %v224
  %v259 = vpack.c.b16 %v227, %v226
  %v308 = vunpack.c.l.b16 %v84
  %v309 = vunpack.c.l.b16 %v85
  %v310 = vunpack.c.l.b16 %v86
  %v311 = vunpack.c.l.b16 %v87
  %v312 = vunpack.c.l.b16 %v88
  %v313 = vunpack.c.l.b16 %v89
  %v314 = vunpack.c.l.b16 %v90
  %v315 = vunpack.c.l.b16 %v91
  %v316 = vunpack.c.l.b16 %v92
  %v317 = vunpack.c.l.b16 %v93
  %v318 = vunpack.c.l.b16 %v94
  %v319 = vunpack.c.l.b16 %v95
  %v320 = vunpack.c.l.b16 %v96
  %v321 = vunpack.c.l.b16 %v97
  %v322 = vunpack.c.l.b16 %v98
  %v323 = vunpack.c.l.b16 %v99
  %v324 = vpack.c.b16 %v309, %v308
  %v325 = vpack.c.b16 %v311, %v310
  %v326 = vpack.c.b16 %v313, %v312
  %v327 = vpack.c.b16 %v315, %v314
  %v328 = vpack.c.b16 %v317, %v316
  %v329 = vpack.c.b16 %v319, %v318
  %v330 = vpack.c.b16 %v321, %v320
  %v331 = vpack.c.b16 %v323, %v322
  %340 = vmatprep.subr.bf16.mxu0 0
  %341 = vmatpush1.bf16.msra.mxu0 %v324
  %342 = vmatprep.subr.bf16.mxu0 0
  %343 = vmatpush1.bf16.msra.mxu0 %v325
  %344 = vmatprep.subr.bf16.mxu0 0
  %345 = vmatpush1.bf16.msra.mxu0 %v326
  %346 = vmatprep.subr.bf16.mxu0 0
  %347 = vmatpush1.bf16.msra.mxu0 %v327
  %348 = vmatprep.subr.bf16.mxu0 0
  %349 = vmatpush1.bf16.msra.mxu0 %v328
  %350 = vmatprep.subr.bf16.mxu0 0
  %351 = vmatpush1.bf16.msra.mxu0 %v329
  %352 = vmatprep.subr.bf16.mxu0 0
  %353 = vmatpush1.bf16.msra.mxu0 %v330
  %354 = vmatprep.subr.bf16.mxu0 0
  %355 = vmatpush1.bf16.msra.mxu0 %v331
  %356 = vmatprep.subr.bf16.mxu0 0
  %357 = vmatpush1.bf16.msra.mxu0 0
  %358 = vmatprep.subr.bf16.mxu0 0
  %359 = vmatpush1.bf16.msra.mxu0 0
  %360 = vmatprep.subr.bf16.mxu0 0
  %361 = vmatpush1.bf16.msra.mxu0 0
  %362 = vmatprep.subr.bf16.mxu0 0
  %363 = vmatpush1.bf16.msra.mxu0 0
  %364 = vmatprep.subr.bf16.mxu0 0
  %365 = vmatpush1.bf16.msra.mxu0 0
  %366 = vmatprep.subr.bf16.mxu0 0
  %367 = vmatpush1.bf16.msra.mxu0 0
  %368 = vmatprep.subr.bf16.mxu0 0
  %369 = vmatpush1.bf16.msra.mxu0 0
  %370 = vmatprep.subr.bf16.mxu0 0
  %371 = vmatpush1.bf16.msra.mxu0 0
  %372 = vmatprep.mubr.bf16.mxu0 0
  %373 = vmatmul.mubr.bf16.gmra.mrb[0].mxu0 %v228
  %v374 = vpop.f32.mrb[0].mxu0
  %v375 = vadd.f32 0.0, %v374
  %v376 = vpop.f32.mrb[0].mxu0
  %v377 = vpop.f32.mrb[0].mxu0
  %v378 = vadd.f32 0.0, %v377
  %v379 = vpop.f32.mrb[0].mxu0
  %380 = vmatprep.mubr.bf16.mxu0 0
  %381 = vmatmul.mubr.bf16.gmra.mrb[0].mxu0 %v229
  %v382 = vpop.f32.mrb[0].mxu0
  %v383 = vadd.f32 0.0, %v382
  %v384 = vpop.f32.mrb[0].mxu0
  %v385 = vpop.f32.mrb[0].mxu0
  %v386 = vadd.f32 0.0, %v385
  %v387 = vpop.f32.mrb[0].mxu0
  %388 = vmatprep.mubr.bf16.mxu0 0
  %389 = vmatmul.mubr.bf16.gmra.mrb[0].mxu0 %v230
  %v390 = vpop.f32.mrb[0].mxu0
  %v391 = vadd.f32 0.0, %v390
  %v392 = vpop.f32.mrb[0].mxu0
  %v393 = vpop.f32.mrb[0].mxu0
  %v394 = vadd.f32 0.0, %v393
  %v395 = vpop.f32.mrb[0].mxu0
  %396 = vmatprep.mubr.bf16.mxu0 0
  %397 = vmatmul.mubr.bf16.gmra.mrb[0].mxu0 %v231
  %v398 = vpop.f32.mrb[0].mxu0
  %v399 = vadd.f32 0.0, %v398
  %v400 = vpop.f32.mrb[0].mxu0
  %v401 = vpop.f32.mrb[0].mxu0
  %v402 = vadd.f32 0.0, %v401
  %v403 = vpop.f32.mrb[0].mxu0
  %404 = vmatprep.mubr.bf16.mxu0 0
  %405 = vmatmul.mubr.bf16.gmra.mrb[0].mxu0 %v232
  %v406 = vpop.f32.mrb[0].mxu0
  %v407 = vadd.f32 0.0, %v406
  %v408 = vpop.f32.mrb[0].mxu0
  %v409 = vpop.f32.mrb[0].mxu0
  %v410 = vadd.f32 0.0, %v409
  %v411 = vpop.f32.mrb[0].mxu0
  %412 = vmatprep.mubr.bf16.mxu0 0
  %413 = vmatmul.mubr.bf16.gmra.mrb[0].mxu0 %v233
  %v414 = vpop.f32.mrb[0].mxu0
  %v415 = vadd.f32 0.0, %v414
  %v416 = vpop.f32.mrb[0].mxu0
  %v417 = vpop.f32.mrb[0].mxu0
  %v418 = vadd.f32 0.0, %v417
  %v419 = vpop.f32.mrb[0].mxu0
  %420 = vmatprep.mubr.bf16.mxu0 0
  %421 = vmatmul.mubr.bf16.gmra.mrb[0].mxu0 %v234
  %v422 = vpop.f32.mrb[0].mxu0
  %v423 = vadd.f32 0.0, %v422
  %v424 = vpop.f32.mrb[0].mxu0
  %v425 = vpop.f32.mrb[0].mxu0
  %v426 = vadd.f32 0.0, %v425
  %v427 = vpop.f32.mrb[0].mxu0
  %428 = vmatprep.mubr.bf16.mxu0 0
  %429 = vmatmul.mubr.bf16.gmra.mrb[0].mxu0 %v235
  %v430 = vpop.f32.mrb[0].mxu0
  %v431 = vadd.f32 0.0, %v430
  %v432 = vpop.f32.mrb[0].mxu0
  %v433 = vpop.f32.mrb[0].mxu0
  %v434 = vadd.f32 0.0, %v433
  %v435 = vpop.f32.mrb[0].mxu0
  %436 = vmatprep.mubr.bf16.mxu0 0
  %437 = vmatmul.mubr.bf16.gmra.mrb[0].mxu0 %v236
  %v438 = vpop.f32.mrb[0].mxu0
  %v439 = vadd.f32 0.0, %v438
  %v440 = vpop.f32.mrb[0].mxu0
  %v441 = vpop.f32.mrb[0].mxu0
  %v442 = vadd.f32 0.0, %v441
  %v443 = vpop.f32.mrb[0].mxu0
  %444 = vmatprep.mubr.bf16.mxu0 0
  %445 = vmatmul.mubr.bf16.gmra.mrb[0].mxu0 %v237
  %v446 = vpop.f32.mrb[0].mxu0
  %v447 = vadd.f32 0.0, %v446
  %v448 = vpop.f32.mrb[0].mxu0
  %v449 = vpop.f32.mrb[0].mxu0
  %v450 = vadd.f32 0.0, %v449
  %v451 = vpop.f32.mrb[0].mxu0
  %452 = vmatprep.mubr.bf16.mxu0 0
  %453 = vmatmul.mubr.bf16.gmra.mrb[0].mxu0 %v238
  %v454 = vpop.f32.mrb[0].mxu0
  %v455 = vadd.f32 0.0, %v454
  %v456 = vpop.f32.mrb[0].mxu0
  %v457 = vpop.f32.mrb[0].mxu0
  %v458 = vadd.f32 0.0, %v457
  %v459 = vpop.f32.mrb[0].mxu0
  %460 = vmatprep.mubr.bf16.mxu0 0
  %461 = vmatmul.mubr.bf16.gmra.mrb[0].mxu0 %v239
  %v462 = vpop.f32.mrb[0].mxu0
  %v463 = vadd.f32 0.0, %v462
  %v464 = vpop.f32.mrb[0].mxu0
  %v465 = vpop.f32.mrb[0].mxu0
  %v466 = vadd.f32 0.0, %v465
  %v467 = vpop.f32.mrb[0].mxu0
  %468 = vmatprep.mubr.bf16.mxu0 0
  %469 = vmatmul.mubr.bf16.gmra.mrb[0].mxu0 %v240
  %v470 = vpop.f32.mrb[0].mxu0
  %v471 = vadd.f32 0.0, %v470
  %v472 = vpop.f32.mrb[0].mxu0
  %v473 = vpop.f32.mrb[0].mxu0
  %v474 = vadd.f32 0.0, %v473
  %v475 = vpop.f32.mrb[0].mxu0
  %476 = vmatprep.mubr.bf16.mxu0 0
  %477 = vmatmul.mubr.bf16.gmra.mrb[0].mxu0 %v241
  %v478 = vpop.f32.mrb[0].mxu0
  %v479 = vadd.f32 0.0, %v478
  %v480 = vpop.f32.mrb[0].mxu0
  %v481 = vpop.f32.mrb[0].mxu0
  %v482 = vadd.f32 0.0, %v481
  %v483 = vpop.f32.mrb[0].mxu0
  %484 = vmatprep.mubr.bf16.mxu0 0
  %485 = vmatmul.mubr.bf16.gmra.mrb[0].mxu0 %v242
  %v486 = vpop.f32.mrb[0].mxu0
  %v487 = vadd.f32 0.0, %v486
  %v488 = vpop.f32.mrb[0].mxu0
  %v489 = vpop.f32.mrb[0].mxu0
  %v490 = vadd.f32 0.0, %v489
  %v491 = vpop.f32.mrb[0].mxu0
  %492 = vmatprep.mubr.bf16.mxu0 0
  %493 = vmatmul.mubr.bf16.gmra.mrb[0].mxu0 %v243
  %v494 = vpop.f32.mrb[0].mxu0
  %v495 = vadd.f32 0.0, %v494
  %v496 = vpop.f32.mrb[0].mxu0
  %v497 = vpop.f32.mrb[0].mxu0
  %v498 = vadd.f32 0.0, %v497
  %v499 = vpop.f32.mrb[0].mxu0
  %500 = vmatprep.mubr.bf16.mxu0 0
  %501 = vmatmul.mubr.bf16.gmra.mrb[0].mxu0 %v244
  %v502 = vpop.f32.mrb[0].mxu0
  %v503 = vadd.f32 0.0, %v502
  %v504 = vpop.f32.mrb[0].mxu0
  %v505 = vpop.f32.mrb[0].mxu0
  %v506 = vadd.f32 0.0, %v505
  %v507 = vpop.f32.mrb[0].mxu0
  %508 = vmatprep.mubr.bf16.mxu0 0
  %509 = vmatmul.mubr.bf16.gmra.mrb[0].mxu0 %v245
  %v510 = vpop.f32.mrb[0].mxu0
  %v511 = vadd.f32 0.0, %v510
  %v512 = vpop.f32.mrb[0].mxu0
  %v513 = vpop.f32.mrb[0].mxu0
  %v514 = vadd.f32 0.0, %v513
  %v515 = vpop.f32.mrb[0].mxu0
  %516 = vmatprep.mubr.bf16.mxu0 0
  %517 = vmatmul.mubr.bf16.gmra.mrb[0].mxu0 %v246
  %v518 = vpop.f32.mrb[0].mxu0
  %v519 = vadd.f32 0.0, %v518
  %v520 = vpop.f32.mrb[0].mxu0
  %v521 = vpop.f32.mrb[0].mxu0
  %v522 = vadd.f32 0.0, %v521
  %v523 = vpop.f32.mrb[0].mxu0
  %524 = vmatprep.mubr.bf16.mxu0 0
  %525 = vmatmul.mubr.bf16.gmra.mrb[0].mxu0 %v247
  %v526 = vpop.f32.mrb[0].mxu0
  %v527 = vadd.f32 0.0, %v526
  %v528 = vpop.f32.mrb[0].mxu0
  %v529 = vpop.f32.mrb[0].mxu0
  %v530 = vadd.f32 0.0, %v529
  %v531 = vpop.f32.mrb[0].mxu0
  %532 = vmatprep.mubr.bf16.mxu0 0
  %533 = vmatmul.mubr.bf16.gmra.mrb[0].mxu0 %v248
  %v534 = vpop.f32.mrb[0].mxu0
  %v535 = vadd.f32 0.0, %v534
  %v536 = vpop.f32.mrb[0].mxu0
  %v537 = vpop.f32.mrb[0].mxu0
  %v538 = vadd.f32 0.0, %v537
  %v539 = vpop.f32.mrb[0].mxu0
  %540 = vmatprep.mubr.bf16.mxu0 0
  %541 = vmatmul.mubr.bf16.gmra.mrb[0].mxu0 %v249
  %v542 = vpop.f32.mrb[0].mxu0
  %v543 = vadd.f32 0.0, %v542
  %v544 = vpop.f32.mrb[0].mxu0
  %v545 = vpop.f32.mrb[0].mxu0
  %v546 = vadd.f32 0.0, %v545
  %v547 = vpop.f32.mrb[0].mxu0
  %548 = vmatprep.mubr.bf16.mxu0 0
  %549 = vmatmul.mubr.bf16.gmra.mrb[0].mxu0 %v250
  %v550 = vpop.f32.mrb[0].mxu0
  %v551 = vadd.f32 0.0, %v550
  %v552 = vpop.f32.mrb[0].mxu0
  %v553 = vpop.f32.mrb[0].mxu0
  %v554 = vadd.f32 0.0, %v553
  %v555 = vpop.f32.mrb[0].mxu0
  %556 = vmatprep.mubr.bf16.mxu0 0
  %557 = vmatmul.mubr.bf16.gmra.mrb[0].mxu0 %v251
  %v558 = vpop.f32.mrb[0].mxu0
  %v559 = vadd.f32 0.0, %v558
  %v560 = vpop.f32.mrb[0].mxu0
  %v561 = vpop.f32.mrb[0].mxu0
  %v562 = vadd.f32 0.0, %v561
  %v563 = vpop.f32.mrb[0].mxu0
  %564 = vmatprep.mubr.bf16.mxu0 0
  %565 = vmatmul.mubr.bf16.gmra.mrb[0].mxu0 %v252
  %v566 = vpop.f32.mrb[0].mxu0
  %v567 = vadd.f32 0.0, %v566
  %v568 = vpop.f32.mrb[0].mxu0
  %v569 = vpop.f32.mrb[0].mxu0
  %v570 = vadd.f32 0.0, %v569
  %v571 = vpop.f32.mrb[0].mxu0
  %572 = vmatprep.mubr.bf16.mxu0 0
  %573 = vmatmul.mubr.bf16.gmra.mrb[0].mxu0 %v253
  %v574 = vpop.f32.mrb[0].mxu0
  %v575 = vadd.f32 0.0, %v574
  %v576 = vpop.f32.mrb[0].mxu0
  %v577 = vpop.f32.mrb[0].mxu0
  %v578 = vadd.f32 0.0, %v577
  %v579 = vpop.f32.mrb[0].mxu0
  %580 = vmatprep.mubr.bf16.mxu0 0
  %581 = vmatmul.mubr.bf16.gmra.mrb[0].mxu0 %v254
  %v582 = vpop.f32.mrb[0].mxu0
  %v583 = vadd.f32 0.0, %v582
  %v584 = vpop.f32.mrb[0].mxu0
  %v585 = vpop.f32.mrb[0].mxu0
  %v586 = vadd.f32 0.0, %v585
  %v587 = vpop.f32.mrb[0].mxu0
  %588 = vmatprep.mubr.bf16.mxu0 0
  %589 = vmatmul.mubr.bf16.gmra.mrb[0].mxu0 %v255
  %v590 = vpop.f32.mrb[0].mxu0
  %v591 = vadd.f32 0.0, %v590
  %v592 = vpop.f32.mrb[0].mxu0
  %v593 = vpop.f32.mrb[0].mxu0
  %v594 = vadd.f32 0.0, %v593
  %v595 = vpop.f32.mrb[0].mxu0
  %596 = vmatprep.mubr.bf16.mxu0 0
  %597 = vmatmul.mubr.bf16.gmra.mrb[0].mxu0 %v256
  %v598 = vpop.f32.mrb[0].mxu0
  %v599 = vadd.f32 0.0, %v598
  %v600 = vpop.f32.mrb[0].mxu0
  %v601 = vpop.f32.mrb[0].mxu0
  %v602 = vadd.f32 0.0, %v601
  %v603 = vpop.f32.mrb[0].mxu0
  %604 = vmatprep.mubr.bf16.mxu0 0
  %605 = vmatmul.mubr.bf16.gmra.mrb[0].mxu0 %v257
  %v606 = vpop.f32.mrb[0].mxu0
  %v607 = vadd.f32 0.0, %v606
  %v608 = vpop.f32.mrb[0].mxu0
  %v609 = vpop.f32.mrb[0].mxu0
  %v610 = vadd.f32 0.0, %v609
  %v611 = vpop.f32.mrb[0].mxu0
  %612 = vmatprep.mubr.bf16.mxu0 0
  %613 = vmatmul.mubr.bf16.gmra.mrb[0].mxu0 %v258
  %v614 = vpop.f32.mrb[0].mxu0
  %v615 = vadd.f32 0.0, %v614
  %v616 = vpop.f32.mrb[0].mxu0
  %v617 = vpop.f32.mrb[0].mxu0
  %v618 = vadd.f32 0.0, %v617
  %v619 = vpop.f32.mrb[0].mxu0
  %620 = vmatprep.mubr.bf16.mxu0 0
  %621 = vmatmul.mubr.bf16.gmra.mrb[0].mxu0 %v259
  %v622 = vpop.f32.mrb[0].mxu0
  %v623 = vadd.f32 0.0, %v622
  %v624 = vpop.f32.mrb[0].mxu0
  %v625 = vpop.f32.mrb[0].mxu0
  %v626 = vadd.f32 0.0, %v625
  %v627 = vpop.f32.mrb[0].mxu0
  %628 = vdwg.mxu0
  %v629 = vpack.c.bf16 %v378, %v375
  %v630 = vpack.c.bf16 %v386, %v383
  %v631 = vpack.c.bf16 %v394, %v391
  %v632 = vpack.c.bf16 %v402, %v399
  %v633 = vpack.c.bf16 %v410, %v407
  %v634 = vpack.c.bf16 %v418, %v415
  %v635 = vpack.c.bf16 %v426, %v423
  %v636 = vpack.c.bf16 %v434, %v431
  %v637 = vpack.c.bf16 %v442, %v439
  %v638 = vpack.c.bf16 %v450, %v447
  %v639 = vpack.c.bf16 %v458, %v455
  %v640 = vpack.c.bf16 %v466, %v463
  %v641 = vpack.c.bf16 %v474, %v471
  %v642 = vpack.c.bf16 %v482, %v479
  %v643 = vpack.c.bf16 %v490, %v487
  %v644 = vpack.c.bf16 %v498, %v495
  %v645 = vpack.c.bf16 %v506, %v503
  %v646 = vpack.c.bf16 %v514, %v511
  %v647 = vpack.c.bf16 %v522, %v519
  %v648 = vpack.c.bf16 %v530, %v527
  %v649 = vpack.c.bf16 %v538, %v535
  %v650 = vpack.c.bf16 %v546, %v543
  %v651 = vpack.c.bf16 %v554, %v551
  %v652 = vpack.c.bf16 %v562, %v559
  %v653 = vpack.c.bf16 %v570, %v567
  %v654 = vpack.c.bf16 %v578, %v575
  %v655 = vpack.c.bf16 %v586, %v583
  %v656 = vpack.c.bf16 %v594, %v591
  %v657 = vpack.c.bf16 %v602, %v599
  %v658 = vpack.c.bf16 %v610, %v607
  %v659 = vpack.c.bf16 %v618, %v615
  %v660 = vpack.c.bf16 %v626, %v623
  %v693 = vunpack.c.l.b16 %v629
  %v694 = vunpack.c.h.b16 %v629
  %v695 = vunpack.c.l.b16 %v630
  %v696 = vunpack.c.h.b16 %v630
  %v697 = vunpack.c.l.b16 %v631
  %v698 = vunpack.c.h.b16 %v631
  %v699 = vunpack.c.l.b16 %v632
  %v700 = vunpack.c.h.b16 %v632
  %v701 = vunpack.c.l.b16 %v633
  %v702 = vunpack.c.h.b16 %v633
  %v703 = vunpack.c.l.b16 %v634
  %v704 = vunpack.c.h.b16 %v634
  %v705 = vunpack.c.l.b16 %v635
  %v706 = vunpack.c.h.b16 %v635
  %v707 = vunpack.c.l.b16 %v636
  %v708 = vunpack.c.h.b16 %v636
  %v709 = vunpack.c.l.b16 %v637
  %v710 = vunpack.c.h.b16 %v637
  %v711 = vunpack.c.l.b16 %v638
  %v712 = vunpack.c.h.b16 %v638
  %v713 = vunpack.c.l.b16 %v639
  %v714 = vunpack.c.h.b16 %v639
  %v715 = vunpack.c.l.b16 %v640
  %v716 = vunpack.c.h.b16 %v640
  %v717 = vunpack.c.l.b16 %v641
  %v718 = vunpack.c.h.b16 %v641
  %v719 = vunpack.c.l.b16 %v642
  %v720 = vunpack.c.h.b16 %v642
  %v721 = vunpack.c.l.b16 %v643
  %v722 = vunpack.c.h.b16 %v643
  %v723 = vunpack.c.l.b16 %v644
  %v724 = vunpack.c.h.b16 %v644
  %v725 = vunpack.c.l.b16 %v645
  %v726 = vunpack.c.h.b16 %v645
  %v727 = vunpack.c.l.b16 %v646
  %v728 = vunpack.c.h.b16 %v646
  %v729 = vunpack.c.l.b16 %v647
  %v730 = vunpack.c.h.b16 %v647
  %v731 = vunpack.c.l.b16 %v648
  %v732 = vunpack.c.h.b16 %v648
  %v733 = vunpack.c.l.b16 %v649
  %v734 = vunpack.c.h.b16 %v649
  %v735 = vunpack.c.l.b16 %v650
  %v736 = vunpack.c.h.b16 %v650
  %v737 = vunpack.c.l.b16 %v651
  %v738 = vunpack.c.h.b16 %v651
  %v739 = vunpack.c.l.b16 %v652
  %v740 = vunpack.c.h.b16 %v652
  %v741 = vunpack.c.l.b16 %v653
  %v742 = vunpack.c.h.b16 %v653
  %v743 = vunpack.c.l.b16 %v654
  %v744 = vunpack.c.h.b16 %v654
  %v745 = vunpack.c.l.b16 %v655
  %v746 = vunpack.c.h.b16 %v655
  %v747 = vunpack.c.l.b16 %v656
  %v748 = vunpack.c.h.b16 %v656
  %v749 = vunpack.c.l.b16 %v657
  %v750 = vunpack.c.h.b16 %v657
  %v751 = vunpack.c.l.b16 %v658
  %v752 = vunpack.c.h.b16 %v658
  %v753 = vunpack.c.l.b16 %v659
  %v754 = vunpack.c.h.b16 %v659
  %v755 = vunpack.c.l.b16 %v660
  %v756 = vunpack.c.h.b16 %v660
  %v757 = vpack.c.b16 %v693, %v693
  %v758 = vpack.c.b16 %v694, %v694
  %v759 = vpack.c.b16 %v695, %v695
  %v760 = vpack.c.b16 %v696, %v696
  %v761 = vpack.c.b16 %v697, %v697
  %v762 = vpack.c.b16 %v698, %v698
  %v763 = vpack.c.b16 %v699, %v699
  %v764 = vpack.c.b16 %v700, %v700
  %v765 = vpack.c.b16 %v701, %v701
  %v766 = vpack.c.b16 %v702, %v702
  %v767 = vpack.c.b16 %v703, %v703
  %v768 = vpack.c.b16 %v704, %v704
  %v769 = vpack.c.b16 %v705, %v705
  %v770 = vpack.c.b16 %v706, %v706
  %v771 = vpack.c.b16 %v707, %v707
  %v772 = vpack.c.b16 %v708, %v708
  %v773 = vpack.c.b16 %v709, %v709
  %v774 = vpack.c.b16 %v710, %v710
  %v775 = vpack.c.b16 %v711, %v711
  %v776 = vpack.c.b16 %v712, %v712
  %v777 = vpack.c.b16 %v713, %v713
  %v778 = vpack.c.b16 %v714, %v714
  %v779 = vpack.c.b16 %v715, %v715
  %v780 = vpack.c.b16 %v716, %v716
  %v781 = vpack.c.b16 %v717, %v717
  %v782 = vpack.c.b16 %v718, %v718
  %v783 = vpack.c.b16 %v719, %v719
  %v784 = vpack.c.b16 %v720, %v720
  %v785 = vpack.c.b16 %v721, %v721
  %v786 = vpack.c.b16 %v722, %v722
  %v787 = vpack.c.b16 %v723, %v723
  %v788 = vpack.c.b16 %v724, %v724
  %v789 = vpack.c.b16 %v725, %v725
  %v790 = vpack.c.b16 %v726, %v726
  %v791 = vpack.c.b16 %v727, %v727
  %v792 = vpack.c.b16 %v728, %v728
  %v793 = vpack.c.b16 %v729, %v729
  %v794 = vpack.c.b16 %v730, %v730
  %v795 = vpack.c.b16 %v731, %v731
  %v796 = vpack.c.b16 %v732, %v732
  %v797 = vpack.c.b16 %v733, %v733
  %v798 = vpack.c.b16 %v734, %v734
  %v799 = vpack.c.b16 %v735, %v735
  %v800 = vpack.c.b16 %v736, %v736
  %v801 = vpack.c.b16 %v737, %v737
  %v802 = vpack.c.b16 %v738, %v738
  %v803 = vpack.c.b16 %v739, %v739
  %v804 = vpack.c.b16 %v740, %v740
  %v805 = vpack.c.b16 %v741, %v741
  %v806 = vpack.c.b16 %v742, %v742
  %v807 = vpack.c.b16 %v743, %v743
  %v808 = vpack.c.b16 %v744, %v744
  %v809 = vpack.c.b16 %v745, %v745
  %v810 = vpack.c.b16 %v746, %v746
  %v811 = vpack.c.b16 %v747, %v747
  %v812 = vpack.c.b16 %v748, %v748
  %v813 = vpack.c.b16 %v749, %v749
  %v814 = vpack.c.b16 %v750, %v750
  %v815 = vpack.c.b16 %v751, %v751
  %v816 = vpack.c.b16 %v752, %v752
  %v817 = vpack.c.b16 %v753, %v753
  %v818 = vpack.c.b16 %v754, %v754
  %v819 = vpack.c.b16 %v755, %v755
  %v820 = vpack.c.b16 %v756, %v756
  %885 = vst [vmem:[%s2] sm:$0xf] %v757
  %886 = vst [vmem:[%s2 + $0x4] sm:$0xf] %v758
  %887 = vst [vmem:[%s2 + $0x8] sm:$0xf] %v759
  %888 = vst [vmem:[%s2 + $0xc] sm:$0xf] %v760
  %889 = vst [vmem:[%s2 + $0x10] sm:$0xf] %v761
  %890 = vst [vmem:[%s2 + $0x14] sm:$0xf] %v762
  %891 = vst [vmem:[%s2 + $0x18] sm:$0xf] %v763
  %892 = vst [vmem:[%s2 + $0x1c] sm:$0xf] %v764
  %893 = vst [vmem:[%s2 + $0x20] sm:$0xf] %v765
  %894 = vst [vmem:[%s2 + $0x24] sm:$0xf] %v766
  %895 = vst [vmem:[%s2 + $0x28] sm:$0xf] %v767
  %896 = vst [vmem:[%s2 + $0x2c] sm:$0xf] %v768
  %897 = vst [vmem:[%s2 + $0x30] sm:$0xf] %v769
  %898 = vst [vmem:[%s2 + $0x34] sm:$0xf] %v770
  %899 = vst [vmem:[%s2 + $0x38] sm:$0xf] %v771
  %900 = vst [vmem:[%s2 + $0x3c] sm:$0xf] %v772
  %901 = vst [vmem:[%s2 + $0x40] sm:$0xf] %v773
  %902 = vst [vmem:[%s2 + $0x44] sm:$0xf] %v774
  %903 = vst [vmem:[%s2 + $0x48] sm:$0xf] %v775
  %904 = vst [vmem:[%s2 + $0x4c] sm:$0xf] %v776
  %905 = vst [vmem:[%s2 + $0x50] sm:$0xf] %v777
  %906 = vst [vmem:[%s2 + $0x54] sm:$0xf] %v778
  %907 = vst [vmem:[%s2 + $0x58] sm:$0xf] %v779
  %908 = vst [vmem:[%s2 + $0x5c] sm:$0xf] %v780
  %909 = vst [vmem:[%s2 + $0x60] sm:$0xf] %v781
  %910 = vst [vmem:[%s2 + $0x64] sm:$0xf] %v782
  %911 = vst [vmem:[%s2 + $0x68] sm:$0xf] %v783
  %912 = vst [vmem:[%s2 + $0x6c] sm:$0xf] %v784
  %913 = vst [vmem:[%s2 + $0x70] sm:$0xf] %v785
  %914 = vst [vmem:[%s2 + $0x74] sm:$0xf] %v786
  %915 = vst [vmem:[%s2 + $0x78] sm:$0xf] %v787
  %916 = vst [vmem:[%s2 + $0x7c] sm:$0xf] %v788
  %917 = vst [vmem:[%s2 + $0x80] sm:$0xf] %v789
  %918 = vst [vmem:[%s2 + $0x84] sm:$0xf] %v790
  %919 = vst [vmem:[%s2 + $0x88] sm:$0xf] %v791
  %920 = vst [vmem:[%s2 + $0x8c] sm:$0xf] %v792
  %921 = vst [vmem:[%s2 + $0x90] sm:$0xf] %v793
  %922 = vst [vmem:[%s2 + $0x94] sm:$0xf] %v794
  %923 = vst [vmem:[%s2 + $0x98] sm:$0xf] %v795
  %924 = vst [vmem:[%s2 + $0x9c] sm:$0xf] %v796
  %925 = vst [vmem:[%s2 + $0xa0] sm:$0xf] %v797
  %926 = vst [vmem:[%s2 + $0xa4] sm:$0xf] %v798
  %927 = vst [vmem:[%s2 + $0xa8] sm:$0xf] %v799
  %928 = vst [vmem:[%s2 + $0xac] sm:$0xf] %v800
  %929 = vst [vmem:[%s2 + $0xb0] sm:$0xf] %v801
  %930 = vst [vmem:[%s2 + $0xb4] sm:$0xf] %v802
  %931 = vst [vmem:[%s2 + $0xb8] sm:$0xf] %v803
  %932 = vst [vmem:[%s2 + $0xbc] sm:$0xf] %v804
  %933 = vst [vmem:[%s2 + $0xc0] sm:$0xf] %v805
  %934 = vst [vmem:[%s2 + $0xc4] sm:$0xf] %v806
  %935 = vst [vmem:[%s2 + $0xc8] sm:$0xf] %v807
  %936 = vst [vmem:[%s2 + $0xcc] sm:$0xf] %v808
  %937 = vst [vmem:[%s2 + $0xd0] sm:$0xf] %v809
  %938 = vst [vmem:[%s2 + $0xd4] sm:$0xf] %v810
  %939 = vst [vmem:[%s2 + $0xd8] sm:$0xf] %v811
  %940 = vst [vmem:[%s2 + $0xdc] sm:$0xf] %v812
  %941 = vst [vmem:[%s2 + $0xe0] sm:$0xf] %v813
  %942 = vst [vmem:[%s2 + $0xe4] sm:$0xf] %v814
  %943 = vst [vmem:[%s2 + $0xe8] sm:$0xf] %v815
  %944 = vst [vmem:[%s2 + $0xec] sm:$0xf] %v816
  %945 = vst [vmem:[%s2 + $0xf0] sm:$0xf] %v817
  %946 = vst [vmem:[%s2 + $0xf4] sm:$0xf] %v818
  %947 = vst [vmem:[%s2 + $0xf8] sm:$0xf] %v819
  %948 = vst [vmem:[%s2 + $0xfc] sm:$0xf] %v820
  %v949 = vld [vmem:[#allocation2] sm:$0xff]
  %v950 = vadd.f32 %v375, %v378
  %v951 = vadd.f32 %v950, %v383
  %v952 = vadd.f32 %v951, %v386
  %v953 = vadd.f32 %v952, %v391
  %v954 = vadd.f32 %v953, %v394
  %v955 = vadd.f32 %v954, %v399
  %v956 = vadd.f32 %v955, %v402
  %v957 = vadd.f32 %v956, %v407
  %v958 = vadd.f32 %v957, %v410
  %v959 = vadd.f32 %v958, %v415
  %v960 = vadd.f32 %v959, %v418
  %v961 = vadd.f32 %v960, %v423
  %v962 = vadd.f32 %v961, %v426
  %v963 = vadd.f32 %v962, %v431
  %v964 = vadd.f32 %v963, %v434
  %v965 = vadd.f32 %v964, %v439
  %v966 = vadd.f32 %v965, %v442
  %v967 = vadd.f32 %v966, %v447
  %v968 = vadd.f32 %v967, %v450
  %v969 = vadd.f32 %v968, %v455
  %v970 = vadd.f32 %v969, %v458
  %v971 = vadd.f32 %v970, %v463
  %v972 = vadd.f32 %v971, %v466
  %v973 = vadd.f32 %v972, %v471
  %v974 = vadd.f32 %v973, %v474
  %v975 = vadd.f32 %v974, %v479
  %v976 = vadd.f32 %v975, %v482
  %v977 = vadd.f32 %v976, %v487
  %v978 = vadd.f32 %v977, %v490
  %v979 = vadd.f32 %v978, %v495
  %v980 = vadd.f32 %v979, %v498
  %v981 = vadd.f32 %v980, %v503
  %v982 = vadd.f32 %v981, %v506
  %v983 = vadd.f32 %v982, %v511
  %v984 = vadd.f32 %v983, %v514
  %v985 = vadd.f32 %v984, %v519
  %v986 = vadd.f32 %v985, %v522
  %v987 = vadd.f32 %v986, %v527
  %v988 = vadd.f32 %v987, %v530
  %v989 = vadd.f32 %v988, %v535
  %v990 = vadd.f32 %v989, %v538
  %v991 = vadd.f32 %v990, %v543
  %v992 = vadd.f32 %v991, %v546
  %v993 = vadd.f32 %v992, %v551
  %v994 = vadd.f32 %v993, %v554
  %v995 = vadd.f32 %v994, %v559
  %v996 = vadd.f32 %v995, %v562
  %v997 = vadd.f32 %v996, %v567
  %v998 = vadd.f32 %v997, %v570
  %v999 = vadd.f32 %v998, %v575
  %v1000 = vadd.f32 %v999, %v578
  %v1001 = vadd.f32 %v1000, %v583
  %v1002 = vadd.f32 %v1001, %v586
  %v1003 = vadd.f32 %v1002, %v591
  %v1004 = vadd.f32 %v1003, %v594
  %v1005 = vadd.f32 %v1004, %v599
  %v1006 = vadd.f32 %v1005, %v602
  %v1007 = vadd.f32 %v1006, %v607
  %v1008 = vadd.f32 %v1007, %v610
  %v1009 = vadd.f32 %v1008, %v615
  %v1010 = vadd.f32 %v1009, %v618
  %v1011 = vadd.f32 %v1010, %v623
  %v1012 = vadd.f32 %v1011, %v626
  %v1013 = vadd.f32 %v949, %v1012
  %1014 = vst [vmem:[#allocation2] sm:$0xff] %v1013
  %v1015 = vld [vmem:[#allocation2 + $0x8] sm:$0xff]
  %v1016 = vmul.f32 %v375, %v375
  %v1017 = vmul.f32 %v378, %v378
  %v1018 = vmul.f32 %v383, %v383
  %v1019 = vmul.f32 %v386, %v386
  %v1020 = vmul.f32 %v391, %v391
  %v1021 = vmul.f32 %v394, %v394
  %v1022 = vmul.f32 %v399, %v399
  %v1023 = vmul.f32 %v402, %v402
  %v1024 = vmul.f32 %v407, %v407
  %v1025 = vmul.f32 %v410, %v410
  %v1026 = vmul.f32 %v415, %v415
  %v1027 = vmul.f32 %v418, %v418
  %v1028 = vmul.f32 %v423, %v423
  %v1029 = vmul.f32 %v426, %v426
  %v1030 = vmul.f32 %v431, %v431
  %v1031 = vmul.f32 %v434, %v434
  %v1032 = vmul.f32 %v439, %v439
  %v1033 = vmul.f32 %v442, %v442
  %v1034 = vmul.f32 %v447, %v447
  %v1035 = vmul.f32 %v450, %v450
  %v1036 = vmul.f32 %v455, %v455
  %v1037 = vmul.f32 %v458, %v458
  %v1038 = vmul.f32 %v463, %v463
  %v1039 = vmul.f32 %v466, %v466
  %v1040 = vmul.f32 %v471, %v471
  %v1041 = vmul.f32 %v474, %v474
  %v1042 = vmul.f32 %v479, %v479
  %v1043 = vmul.f32 %v482, %v482
  %v1044 = vmul.f32 %v487, %v487
  %v1045 = vmul.f32 %v490, %v490
  %v1046 = vmul.f32 %v495, %v495
  %v1047 = vmul.f32 %v498, %v498
  %v1048 = vmul.f32 %v503, %v503
  %v1049 = vmul.f32 %v506, %v506
  %v1050 = vmul.f32 %v511, %v511
  %v1051 = vmul.f32 %v514, %v514
  %v1052 = vmul.f32 %v519, %v519
  %v1053 = vmul.f32 %v522, %v522
  %v1054 = vmul.f32 %v527, %v527
  %v1055 = vmul.f32 %v530, %v530
  %v1056 = vmul.f32 %v535, %v535
  %v1057 = vmul.f32 %v538, %v538
  %v1058 = vmul.f32 %v543, %v543
  %v1059 = vmul.f32 %v546, %v546
  %v1060 = vmul.f32 %v551, %v551
  %v1061 = vmul.f32 %v554, %v554
  %v1062 = vmul.f32 %v559, %v559
  %v1063 = vmul.f32 %v562, %v562
  %v1064 = vmul.f32 %v567, %v567
  %v1065 = vmul.f32 %v570, %v570
  %v1066 = vmul.f32 %v575, %v575
  %v1067 = vmul.f32 %v578, %v578
  %v1068 = vmul.f32 %v583, %v583
  %v1069 = vmul.f32 %v586, %v586
  %v1070 = vmul.f32 %v591, %v591
  %v1071 = vmul.f32 %v594, %v594
  %v1072 = vmul.f32 %v599, %v599
  %v1073 = vmul.f32 %v602, %v602
  %v1074 = vmul.f32 %v607, %v607
  %v1075 = vmul.f32 %v610, %v610
  %v1076 = vmul.f32 %v615, %v615
  %v1077 = vmul.f32 %v618, %v618
  %v1078 = vmul.f32 %v623, %v623
  %v1079 = vmul.f32 %v626, %v626
  %v1080 = vadd.f32 %v1016, %v1017
  %v1081 = vadd.f32 %v1080, %v1018
  %v1082 = vadd.f32 %v1081, %v1019
  %v1083 = vadd.f32 %v1082, %v1020
  %v1084 = vadd.f32 %v1083, %v1021
  %v1085 = vadd.f32 %v1084, %v1022
  %v1086 = vadd.f32 %v1085, %v1023
  %v1087 = vadd.f32 %v1086, %v1024
  %v1088 = vadd.f32 %v1087, %v1025
  %v1089 = vadd.f32 %v1088, %v1026
  %v1090 = vadd.f32 %v1089, %v1027
  %v1091 = vadd.f32 %v1090, %v1028
  %v1092 = vadd.f32 %v1091, %v1029
  %v1093 = vadd.f32 %v1092, %v1030
  %v1094 = vadd.f32 %v1093, %v1031
  %v1095 = vadd.f32 %v1094, %v1032
  %v1096 = vadd.f32 %v1095, %v1033
  %v1097 = vadd.f32 %v1096, %v1034
  %v1098 = vadd.f32 %v1097, %v1035
  %v1099 = vadd.f32 %v1098, %v1036
  %v1100 = vadd.f32 %v1099, %v1037
  %v1101 = vadd.f32 %v1100, %v1038
  %v1102 = vadd.f32 %v1101, %v1039
  %v1103 = vadd.f32 %v1102, %v1040
  %v1104 = vadd.f32 %v1103, %v1041
  %v1105 = vadd.f32 %v1104, %v1042
  %v1106 = vadd.f32 %v1105, %v1043
  %v1107 = vadd.f32 %v1106, %v1044
  %v1108 = vadd.f32 %v1107, %v1045
  %v1109 = vadd.f32 %v1108, %v1046
  %v1110 = vadd.f32 %v1109, %v1047
  %v1111 = vadd.f32 %v1110, %v1048
  %v1112 = vadd.f32 %v1111, %v1049
  %v1113 = vadd.f32 %v1112, %v1050
  %v1114 = vadd.f32 %v1113, %v1051
  %v1115 = vadd.f32 %v1114, %v1052
  %v1116 = vadd.f32 %v1115, %v1053
  %v1117 = vadd.f32 %v1116, %v1054
  %v1118 = vadd.f32 %v1117, %v1055
  %v1119 = vadd.f32 %v1118, %v1056
  %v1120 = vadd.f32 %v1119, %v1057
  %v1121 = vadd.f32 %v1120, %v1058
  %v1122 = vadd.f32 %v1121, %v1059
  %v1123 = vadd.f32 %v1122, %v1060
  %v1124 = vadd.f32 %v1123, %v1061
  %v1125 = vadd.f32 %v1124, %v1062
  %v1126 = vadd.f32 %v1125, %v1063
  %v1127 = vadd.f32 %v1126, %v1064
  %v1128 = vadd.f32 %v1127, %v1065
  %v1129 = vadd.f32 %v1128, %v1066
  %v1130 = vadd.f32 %v1129, %v1067
  %v1131 = vadd.f32 %v1130, %v1068
  %v1132 = vadd.f32 %v1131, %v1069
  %v1133 = vadd.f32 %v1132, %v1070
  %v1134 = vadd.f32 %v1133, %v1071
  %v1135 = vadd.f32 %v1134, %v1072
  %v1136 = vadd.f32 %v1135, %v1073
  %v1137 = vadd.f32 %v1136, %v1074
  %v1138 = vadd.f32 %v1137, %v1075
  %v1139 = vadd.f32 %v1138, %v1076
  %v1140 = vadd.f32 %v1139, %v1077
  %v1141 = vadd.f32 %v1140, %v1078
  %v1142 = vadd.f32 %v1141, %v1079
  %v1143 = vadd.f32 %v1015, %v1142
  %1144 = vst [vmem:[#allocation2 + $0x8] sm:$0xff] %v1143
  // Predicated region
  $region14: #{bottleneck_forward.6} parent=0 // pred_check
    %p1145 = pneg %p14
  $region15: #{bottleneck_forward.6} parent=0 // pred_check_branch
    %1147 = sbr.rel (%p1145) target = $region17
  $region16: #{bottleneck_forward.6} parent=0 // pred_region
    %v1148 = vld [vmem:[#allocation2] sm:$0xff]
    %v1149 = vld [vmem:[#allocation2 + $0x8] sm:$0xff]
    %1150 = vst [vmem:[%s3] sm:$0xff] %v1148
    %1151 = vst [vmem:[%s3 + $0x8] sm:$0xff] %v1149
  $region17: #{bottleneck_forward.6} parent=0 // pred_fallthru
    _
  // Predicated region
  $region18: #{bottleneck_forward.6} parent=0 // pred_check
    _
  $region19: #{bottleneck_forward.6} parent=0 // pred_check_branch
    %1153 = sbr.rel (0) target = $region21
  $region20: #{bottleneck_forward.6} parent=0 // pred_region
    _
  $region21: #{bottleneck_forward.6} parent=0 // pred_fallthru
    _
  // Predicated region
  $region22: #{bottleneck_forward.6} parent=0 // pred_check
    _
  $region23: #{bottleneck_forward.6} parent=0 // pred_check_branch
    %1155 = sbr.rel (0) target = $region25
  $region24: #{bottleneck_forward.6} parent=0 // pred_region
    _
  $region25: #{bottleneck_forward.6} parent=0 // pred_fallthru
    _
  // Predicated region
  $region26: #{bottleneck_forward.6} parent=0 // pred_check
    _
  $region27: #{bottleneck_forward.6} parent=0 // pred_check_branch
    %1157 = sbr.rel (0) target = $region29
  $region28: #{bottleneck_forward.6} parent=0 // pred_region
    _
  $region29: #{bottleneck_forward.6} parent=0 // pred_fallthru
    _
  // Predicated region
  $region30: #{bottleneck_forward.6} parent=0 // pred_check
    _
  $region31: #{bottleneck_forward.6} parent=0 // pred_check_branch
    %1159 = sbr.rel (0) target = $region33
  $region32: #{bottleneck_forward.6} parent=0 // pred_region
    _
  $region33: #{bottleneck_forward.6} parent=0 // pred_fallthru
    _

// kernel: bottleneck_forward.9
$region0: #{bottleneck_forward.9}
  #allocation0 [shape = 'u32[]', space=smem, size = 0x4, offset = 0x4, fixed_abs, tag = 'smem constant byte address 0x4 - core index']
  #allocation1 [shape = 'u32[144,128]{1,0:T(1,128)}', space=vmem, size = 0x12000, scoped, tag = 'internal scratch']
  #allocation2 [shape = 'f32[16,128]{1,0:T(8,128)}', space=vmem, size = 0x2000, scoped, tag = 'scratch operand']
  %s0 = inlined_call_operand.vmem [shape: bf16[128,128], index: 0, kind: input, shape index: {}]
  %s1 = inlined_call_operand.vmem [shape: f32[16,128], index: 1, kind: input, shape index: {}]
  %s2 = inlined_call_operand.vmem [shape: f32[1,128], index: 2, kind: input, shape index: {}]
  %s3 = inlined_call_operand.vmem [shape: f32[1,128], index: 3, kind: input, shape index: {}]
  %s4 = inlined_call_operand.vmem [shape: bf16[128,128], index: 4, kind: input, shape index: {}]
  %s5 = inlined_call_operand.vmem [shape: bf16[128,128], index: 5, kind: output, shape index: {0}]
  %s6 = inlined_call_operand.vmem [shape: f32[16,128], index: 6, kind: output, shape index: {1}]
  %7 = xla_tuple %s5, %s6
  %s8 = sld [smem:[#allocation0]]
  $region54: #{bottleneck_forward.9} parent=0
    _
  %s10 = ssub.s32 1, %s8
  %s11 = scalar_select 0, %s10, %s8
  // Predicated region
  $region2: #{bottleneck_forward.9} parent=0 // pred_check
    _
  $region3: #{bottleneck_forward.9} parent=0 // pred_check_branch
    %13 = sbr.rel (0) target = $region5
  $region4: #{bottleneck_forward.9} parent=0 // pred_region
    _
  $region5: #{bottleneck_forward.9} parent=0 // pred_fallthru
    _
  // Predicated region
  $region6: #{bottleneck_forward.9} parent=0 // pred_check
    _
  $region7: #{bottleneck_forward.9} parent=0 // pred_check_branch
    %15 = sbr.rel (0) target = $region9
  $region8: #{bottleneck_forward.9} parent=0 // pred_region
    _
  $region9: #{bottleneck_forward.9} parent=0 // pred_fallthru
    _
  // Predicated region
  $region10: #{bottleneck_forward.9} parent=0 // pred_check
    _
  $region11: #{bottleneck_forward.9} parent=0 // pred_check_branch
    %17 = sbr.rel (0) target = $region13
  $region12: #{bottleneck_forward.9} parent=0 // pred_region
    _
  $region13: #{bottleneck_forward.9} parent=0 // pred_fallthru
    _
  // Predicated region
  $region14: #{bottleneck_forward.9} parent=0 // pred_check
    _
  $region15: #{bottleneck_forward.9} parent=0 // pred_check_branch
    %19 = sbr.rel (0) target = $region17
  $region16: #{bottleneck_forward.9} parent=0 // pred_region
    _
  $region17: #{bottleneck_forward.9} parent=0 // pred_fallthru
    _
  // Predicated region
  $region18: #{bottleneck_forward.9} parent=0 // pred_check
    _
  $region19: #{bottleneck_forward.9} parent=0 // pred_check_branch
    %21 = sbr.rel (0) target = $region21
  $region20: #{bottleneck_forward.9} parent=0 // pred_region
    _
  $region21: #{bottleneck_forward.9} parent=0 // pred_fallthru
    _
  %p23 = scmp.eq.s32.totalorder 0, 0
  // Predicated region
  $region22: #{bottleneck_forward.9} parent=0 // pred_check
    %p24 = pneg %p23
  $region23: #{bottleneck_forward.9} parent=0 // pred_check_branch
    %26 = sbr.rel (%p24) target = $region25
  $region24: #{bottleneck_forward.9} parent=0 // pred_region
    %27 = vst [vmem:[#allocation2] sm:$0xff] 0.0
    %28 = vst [vmem:[#allocation2 + $0x8] sm:$0xff] 0.0
  $region25: #{bottleneck_forward.9} parent=0 // pred_fallthru
    _
  %v29 = vld [vmem:[%s1] sm:$0xff]
  %v30 = vld [vmem:[%s1 + $0x8] sm:$0xff]
  %v31 = vld [vmem:[%s2] sm:$0x1]
  %v32 = vld [vmem:[%s3] sm:$0x1]
  %v33 = vrot.slane %v29, 4
  %v34 = vadd.f32 %v29, %v33
  %v35 = vrot.slane %v34, 2
  %v36 = vadd.f32 %v34, %v35
  %v37 = vrot.slane %v36, 1
  %v38 = vadd.f32 %v36, %v37
  %v39 = vrot.slane %v30, 4
  %v40 = vadd.f32 %v30, %v39
  %v41 = vrot.slane %v40, 2
  %v42 = vadd.f32 %v40, %v41
  %v43 = vrot.slane %v42, 1
  %v44 = vadd.f32 %v42, %v43
  %v45 = vmul.f32 %v38, 0.0078125
  %v46 = vmul.f32 %v44, 0.0078125
  %v47 = vmul.f32 %v45, %v45
  %v48 = vsub.f32 %v46, %v47
  %v49 = vmax.f32 %v48, 0.0
  %v50 = vadd.f32 %v49, 1e-05
  %v51 = vrsqrt.pop %v50
  %v52 = vmul.f32 %v31, %v51
  %v53 = vmul.f32 %v45, %v52
  %v54 = vsub.f32 %v32, %v53
  %v55 = vld [vmem:[%s0] sm:$0xf]
  %v56 = vld [vmem:[%s0 + $0x4] sm:$0xf]
  %v57 = vld [vmem:[%s0 + $0x8] sm:$0xf]
  %v58 = vld [vmem:[%s0 + $0xc] sm:$0xf]
  %v59 = vld [vmem:[%s0 + $0x10] sm:$0xf]
  %v60 = vld [vmem:[%s0 + $0x14] sm:$0xf]
  %v61 = vld [vmem:[%s0 + $0x18] sm:$0xf]
  %v62 = vld [vmem:[%s0 + $0x1c] sm:$0xf]
  %v63 = vld [vmem:[%s0 + $0x20] sm:$0xf]
  %v64 = vld [vmem:[%s0 + $0x24] sm:$0xf]
  %v65 = vld [vmem:[%s0 + $0x28] sm:$0xf]
  %v66 = vld [vmem:[%s0 + $0x2c] sm:$0xf]
  %v67 = vld [vmem:[%s0 + $0x30] sm:$0xf]
  %v68 = vld [vmem:[%s0 + $0x34] sm:$0xf]
  %v69 = vld [vmem:[%s0 + $0x38] sm:$0xf]
  %v70 = vld [vmem:[%s0 + $0x3c] sm:$0xf]
  %v71 = vunpack.c.l.bf16 %v55
  %v72 = vunpack.c.l.bf16 %v56
  %v73 = vunpack.c.l.bf16 %v57
  %v74 = vunpack.c.l.bf16 %v58
  %v75 = vunpack.c.l.bf16 %v59
  %v76 = vunpack.c.l.bf16 %v60
  %v77 = vunpack.c.l.bf16 %v61
  %v78 = vunpack.c.l.bf16 %v62
  %v79 = vunpack.c.l.bf16 %v63
  %v80 = vunpack.c.l.bf16 %v64
  %v81 = vunpack.c.l.bf16 %v65
  %v82 = vunpack.c.l.bf16 %v66
  %v83 = vunpack.c.l.bf16 %v67
  %v84 = vunpack.c.l.bf16 %v68
  %v85 = vunpack.c.l.bf16 %v69
  %v86 = vunpack.c.l.bf16 %v70
  %v88 = vlaneseq
  %v89 = vshrl.u32 %v88, 7
  %v90 = vsub.s32 0, %v89
  %v91 = vrot.slane %v52, %v90
  %v93 = vmul.f32 %v71, %v91
  %v94 = vmul.f32 %v72, %v91
  %v95 = vmul.f32 %v73, %v91
  %v96 = vmul.f32 %v74, %v91
  %v97 = vmul.f32 %v75, %v91
  %v98 = vmul.f32 %v76, %v91
  %v99 = vmul.f32 %v77, %v91
  %v100 = vmul.f32 %v78, %v91
  %v101 = vmul.f32 %v79, %v91
  %v102 = vmul.f32 %v80, %v91
  %v103 = vmul.f32 %v81, %v91
  %v104 = vmul.f32 %v82, %v91
  %v105 = vmul.f32 %v83, %v91
  %v106 = vmul.f32 %v84, %v91
  %v107 = vmul.f32 %v85, %v91
  %v108 = vmul.f32 %v86, %v91
  %v110 = vlaneseq
  %v111 = vshrl.u32 %v110, 7
  %v112 = vsub.s32 0, %v111
  %v113 = vrot.slane %v54, %v112
  %v115 = vadd.f32 %v93, %v113
  %v116 = vadd.f32 %v94, %v113
  %v117 = vadd.f32 %v95, %v113
  %v118 = vadd.f32 %v96, %v113
  %v119 = vadd.f32 %v97, %v113
  %v120 = vadd.f32 %v98, %v113
  %v121 = vadd.f32 %v99, %v113
  %v122 = vadd.f32 %v100, %v113
  %v123 = vadd.f32 %v101, %v113
  %v124 = vadd.f32 %v102, %v113
  %v125 = vadd.f32 %v103, %v113
  %v126 = vadd.f32 %v104, %v113
  %v127 = vadd.f32 %v105, %v113
  %v128 = vadd.f32 %v106, %v113
  %v129 = vadd.f32 %v107, %v113
  %v130 = vadd.f32 %v108, %v113
  %v131 = vmax.f32 %v115, 0.0
  %v132 = vmax.f32 %v116, 0.0
  %v133 = vmax.f32 %v117, 0.0
  %v134 = vmax.f32 %v118, 0.0
  %v135 = vmax.f32 %v119, 0.0
  %v136 = vmax.f32 %v120, 0.0
  %v137 = vmax.f32 %v121, 0.0
  %v138 = vmax.f32 %v122, 0.0
  %v139 = vmax.f32 %v123, 0.0
  %v140 = vmax.f32 %v124, 0.0
  %v141 = vmax.f32 %v125, 0.0
  %v142 = vmax.f32 %v126, 0.0
  %v143 = vmax.f32 %v127, 0.0
  %v144 = vmax.f32 %v128, 0.0
  %v145 = vmax.f32 %v129, 0.0
  %v146 = vmax.f32 %v130, 0.0
  %v147 = vpack.c.bf16 %v132, %v131
  %v148 = vpack.c.bf16 %v134, %v133
  %v149 = vpack.c.bf16 %v136, %v135
  %v150 = vpack.c.bf16 %v138, %v137
  %v151 = vpack.c.bf16 %v140, %v139
  %v152 = vpack.c.bf16 %v142, %v141
  %v153 = vpack.c.bf16 %v144, %v143
  %v154 = vpack.c.bf16 %v146, %v145
  %v155 = vld [vmem:[%s4] sm:$0xf]
  %v156 = vld [vmem:[%s4 + $0x4] sm:$0xf]
  %v157 = vld [vmem:[%s4 + $0x8] sm:$0xf]
  %v158 = vld [vmem:[%s4 + $0xc] sm:$0xf]
  %v159 = vld [vmem:[%s4 + $0x10] sm:$0xf]
  %v160 = vld [vmem:[%s4 + $0x14] sm:$0xf]
  %v161 = vld [vmem:[%s4 + $0x18] sm:$0xf]
  %v162 = vld [vmem:[%s4 + $0x1c] sm:$0xf]
  %v163 = vld [vmem:[%s4 + $0x20] sm:$0xf]
  %v164 = vld [vmem:[%s4 + $0x24] sm:$0xf]
  %v165 = vld [vmem:[%s4 + $0x28] sm:$0xf]
  %v166 = vld [vmem:[%s4 + $0x2c] sm:$0xf]
  %v167 = vld [vmem:[%s4 + $0x30] sm:$0xf]
  %v168 = vld [vmem:[%s4 + $0x34] sm:$0xf]
  %v169 = vld [vmem:[%s4 + $0x38] sm:$0xf]
  %v170 = vld [vmem:[%s4 + $0x3c] sm:$0xf]
  %v187 = vunpack.c.l.b16 %v155
  %v188 = vunpack.c.l.b16 %v156
  %v189 = vunpack.c.l.b16 %v157
  %v190 = vunpack.c.l.b16 %v158
  %v191 = vunpack.c.l.b16 %v159
  %v192 = vunpack.c.l.b16 %v160
  %v193 = vunpack.c.l.b16 %v161
  %v194 = vunpack.c.l.b16 %v162
  %v195 = vunpack.c.l.b16 %v163
  %v196 = vunpack.c.l.b16 %v164
  %v197 = vunpack.c.l.b16 %v165
  %v198 = vunpack.c.l.b16 %v166
  %v199 = vunpack.c.l.b16 %v167
  %v200 = vunpack.c.l.b16 %v168
  %v201 = vunpack.c.l.b16 %v169
  %v202 = vunpack.c.l.b16 %v170
  %v203 = vpack.c.b16 %v188, %v187
  %v204 = vpack.c.b16 %v190, %v189
  %v205 = vpack.c.b16 %v192, %v191
  %v206 = vpack.c.b16 %v194, %v193
  %v207 = vpack.c.b16 %v196, %v195
  %v208 = vpack.c.b16 %v198, %v197
  %v209 = vpack.c.b16 %v200, %v199
  %v210 = vpack.c.b16 %v202, %v201
  %219 = vmatprep.subr.bf16.mxu0 0
  %220 = vmatpush1.bf16.msra.mxu0 %v203
  %221 = vmatprep.subr.bf16.mxu0 0
  %222 = vmatpush1.bf16.msra.mxu0 %v204
  %223 = vmatprep.subr.bf16.mxu0 0
  %224 = vmatpush1.bf16.msra.mxu0 %v205
  %225 = vmatprep.subr.bf16.mxu0 0
  %226 = vmatpush1.bf16.msra.mxu0 %v206
  %227 = vmatprep.subr.bf16.mxu0 0
  %228 = vmatpush1.bf16.msra.mxu0 %v207
  %229 = vmatprep.subr.bf16.mxu0 0
  %230 = vmatpush1.bf16.msra.mxu0 %v208
  %231 = vmatprep.subr.bf16.mxu0 0
  %232 = vmatpush1.bf16.msra.mxu0 %v209
  %233 = vmatprep.subr.bf16.mxu0 0
  %234 = vmatpush1.bf16.msra.mxu0 %v210
  %235 = vmatprep.subr.bf16.mxu0 0
  %236 = vmatpush1.bf16.msra.mxu0 0
  %237 = vmatprep.subr.bf16.mxu0 0
  %238 = vmatpush1.bf16.msra.mxu0 0
  %239 = vmatprep.subr.bf16.mxu0 0
  %240 = vmatpush1.bf16.msra.mxu0 0
  %241 = vmatprep.subr.bf16.mxu0 0
  %242 = vmatpush1.bf16.msra.mxu0 0
  %243 = vmatprep.subr.bf16.mxu0 0
  %244 = vmatpush1.bf16.msra.mxu0 0
  %245 = vmatprep.subr.bf16.mxu0 0
  %246 = vmatpush1.bf16.msra.mxu0 0
  %247 = vmatprep.subr.bf16.mxu0 0
  %248 = vmatpush1.bf16.msra.mxu0 0
  %249 = vmatprep.subr.bf16.mxu0 0
  %250 = vmatpush1.bf16.msra.mxu0 0
  %251 = vmatprep.mubr.bf16.mxu0 0
  %252 = vmatmul.mubr.bf16.gmra.mrb[0].mxu0 %v147
  %v253 = vpop.f32.mrb[0].mxu0
  %v254 = vadd.f32 0.0, %v253
  %v255 = vpop.f32.mrb[0].mxu0
  %v256 = vpop.f32.mrb[0].mxu0
  %v257 = vadd.f32 0.0, %v256
  %v258 = vpop.f32.mrb[0].mxu0
  %259 = vmatprep.mubr.bf16.mxu0 0
  %260 = vmatmul.mubr.bf16.gmra.mrb[0].mxu0 %v148
  %v261 = vpop.f32.mrb[0].mxu0
  %v262 = vadd.f32 0.0, %v261
  %v263 = vpop.f32.mrb[0].mxu0
  %v264 = vpop.f32.mrb[0].mxu0
  %v265 = vadd.f32 0.0, %v264
  %v266 = vpop.f32.mrb[0].mxu0
  %267 = vmatprep.mubr.bf16.mxu0 0
  %268 = vmatmul.mubr.bf16.gmra.mrb[0].mxu0 %v149
  %v269 = vpop.f32.mrb[0].mxu0
  %v270 = vadd.f32 0.0, %v269
  %v271 = vpop.f32.mrb[0].mxu0
  %v272 = vpop.f32.mrb[0].mxu0
  %v273 = vadd.f32 0.0, %v272
  %v274 = vpop.f32.mrb[0].mxu0
  %275 = vmatprep.mubr.bf16.mxu0 0
  %276 = vmatmul.mubr.bf16.gmra.mrb[0].mxu0 %v150
  %v277 = vpop.f32.mrb[0].mxu0
  %v278 = vadd.f32 0.0, %v277
  %v279 = vpop.f32.mrb[0].mxu0
  %v280 = vpop.f32.mrb[0].mxu0
  %v281 = vadd.f32 0.0, %v280
  %v282 = vpop.f32.mrb[0].mxu0
  %283 = vmatprep.mubr.bf16.mxu0 0
  %284 = vmatmul.mubr.bf16.gmra.mrb[0].mxu0 %v151
  %v285 = vpop.f32.mrb[0].mxu0
  %v286 = vadd.f32 0.0, %v285
  %v287 = vpop.f32.mrb[0].mxu0
  %v288 = vpop.f32.mrb[0].mxu0
  %v289 = vadd.f32 0.0, %v288
  %v290 = vpop.f32.mrb[0].mxu0
  %291 = vmatprep.mubr.bf16.mxu0 0
  %292 = vmatmul.mubr.bf16.gmra.mrb[0].mxu0 %v152
  %v293 = vpop.f32.mrb[0].mxu0
  %v294 = vadd.f32 0.0, %v293
  %v295 = vpop.f32.mrb[0].mxu0
  %v296 = vpop.f32.mrb[0].mxu0
  %v297 = vadd.f32 0.0, %v296
  %v298 = vpop.f32.mrb[0].mxu0
  %299 = vmatprep.mubr.bf16.mxu0 0
  %300 = vmatmul.mubr.bf16.gmra.mrb[0].mxu0 %v153
  %v301 = vpop.f32.mrb[0].mxu0
  %v302 = vadd.f32 0.0, %v301
  %v303 = vpop.f32.mrb[0].mxu0
  %v304 = vpop.f32.mrb[0].mxu0
  %v305 = vadd.f32 0.0, %v304
  %v306 = vpop.f32.mrb[0].mxu0
  %307 = vmatprep.mubr.bf16.mxu0 0
  %308 = vmatmul.mubr.bf16.gmra.mrb[0].mxu0 %v154
  %v309 = vpop.f32.mrb[0].mxu0
  %v310 = vadd.f32 0.0, %v309
  %v311 = vpop.f32.mrb[0].mxu0
  %v312 = vpop.f32.mrb[0].mxu0
  %v313 = vadd.f32 0.0, %v312
  %v314 = vpop.f32.mrb[0].mxu0
  %315 = vdwg.mxu0
  %v316 = vpack.c.bf16 %v257, %v254
  %v317 = vpack.c.bf16 %v265, %v262
  %v318 = vpack.c.bf16 %v273, %v270
  %v319 = vpack.c.bf16 %v281, %v278
  %v320 = vpack.c.bf16 %v289, %v286
  %v321 = vpack.c.bf16 %v297, %v294
  %v322 = vpack.c.bf16 %v305, %v302
  %v323 = vpack.c.bf16 %v313, %v310
  %v332 = vunpack.c.l.b16 %v316
  %v333 = vunpack.c.h.b16 %v316
  %v334 = vunpack.c.l.b16 %v317
  %v335 = vunpack.c.h.b16 %v317
  %v336 = vunpack.c.l.b16 %v318
  %v337 = vunpack.c.h.b16 %v318
  %v338 = vunpack.c.l.b16 %v319
  %v339 = vunpack.c.h.b16 %v319
  %v340 = vunpack.c.l.b16 %v320
  %v341 = vunpack.c.h.b16 %v320
  %v342 = vunpack.c.l.b16 %v321
  %v343 = vunpack.c.h.b16 %v321
  %v344 = vunpack.c.l.b16 %v322
  %v345 = vunpack.c.h.b16 %v322
  %v346 = vunpack.c.l.b16 %v323
  %v347 = vunpack.c.h.b16 %v323
  %v348 = vpack.c.b16 %v332, %v332
  %v349 = vpack.c.b16 %v333, %v333
  %v350 = vpack.c.b16 %v334, %v334
  %v351 = vpack.c.b16 %v335, %v335
  %v352 = vpack.c.b16 %v336, %v336
  %v353 = vpack.c.b16 %v337, %v337
  %v354 = vpack.c.b16 %v338, %v338
  %v355 = vpack.c.b16 %v339, %v339
  %v356 = vpack.c.b16 %v340, %v340
  %v357 = vpack.c.b16 %v341, %v341
  %v358 = vpack.c.b16 %v342, %v342
  %v359 = vpack.c.b16 %v343, %v343
  %v360 = vpack.c.b16 %v344, %v344
  %v361 = vpack.c.b16 %v345, %v345
  %v362 = vpack.c.b16 %v346, %v346
  %v363 = vpack.c.b16 %v347, %v347
  %380 = vst [vmem:[%s5] sm:$0xf] %v348
  %381 = vst [vmem:[%s5 + $0x4] sm:$0xf] %v349
  %382 = vst [vmem:[%s5 + $0x8] sm:$0xf] %v350
  %383 = vst [vmem:[%s5 + $0xc] sm:$0xf] %v351
  %384 = vst [vmem:[%s5 + $0x10] sm:$0xf] %v352
  %385 = vst [vmem:[%s5 + $0x14] sm:$0xf] %v353
  %386 = vst [vmem:[%s5 + $0x18] sm:$0xf] %v354
  %387 = vst [vmem:[%s5 + $0x1c] sm:$0xf] %v355
  %388 = vst [vmem:[%s5 + $0x20] sm:$0xf] %v356
  %389 = vst [vmem:[%s5 + $0x24] sm:$0xf] %v357
  %390 = vst [vmem:[%s5 + $0x28] sm:$0xf] %v358
  %391 = vst [vmem:[%s5 + $0x2c] sm:$0xf] %v359
  %392 = vst [vmem:[%s5 + $0x30] sm:$0xf] %v360
  %393 = vst [vmem:[%s5 + $0x34] sm:$0xf] %v361
  %394 = vst [vmem:[%s5 + $0x38] sm:$0xf] %v362
  %395 = vst [vmem:[%s5 + $0x3c] sm:$0xf] %v363
  %s396 = sadd.s32 0, 1
  %s397 = smul.u32 %s396, 128
  %p398 = scmp.le.s32.totalorder %s397, 128
  // Predicated region
  $region26: #{bottleneck_forward.9} parent=0 // pred_check
    %p399 = pneg %p398
  $region27: #{bottleneck_forward.9} parent=0 // pred_check_branch
    %401 = sbr.rel (%p399) target = $region29
  $region28: #{bottleneck_forward.9} parent=0 // pred_region
    %v402 = vld [vmem:[#allocation2] sm:$0xff]
    %v403 = vadd.f32 %v254, %v257
    %v404 = vadd.f32 %v403, %v262
    %v405 = vadd.f32 %v404, %v265
    %v406 = vadd.f32 %v405, %v270
    %v407 = vadd.f32 %v406, %v273
    %v408 = vadd.f32 %v407, %v278
    %v409 = vadd.f32 %v408, %v281
    %v410 = vadd.f32 %v409, %v286
    %v411 = vadd.f32 %v410, %v289
    %v412 = vadd.f32 %v411, %v294
    %v413 = vadd.f32 %v412, %v297
    %v414 = vadd.f32 %v413, %v302
    %v415 = vadd.f32 %v414, %v305
    %v416 = vadd.f32 %v415, %v310
    %v417 = vadd.f32 %v416, %v313
    %v418 = vadd.f32 %v402, %v417
    %419 = vst [vmem:[#allocation2] sm:$0xff] %v418
    %v420 = vld [vmem:[#allocation2 + $0x8] sm:$0xff]
    %v421 = vmul.f32 %v254, %v254
    %v422 = vmul.f32 %v257, %v257
    %v423 = vmul.f32 %v262, %v262
    %v424 = vmul.f32 %v265, %v265
    %v425 = vmul.f32 %v270, %v270
    %v426 = vmul.f32 %v273, %v273
    %v427 = vmul.f32 %v278, %v278
    %v428 = vmul.f32 %v281, %v281
    %v429 = vmul.f32 %v286, %v286
    %v430 = vmul.f32 %v289, %v289
    %v431 = vmul.f32 %v294, %v294
    %v432 = vmul.f32 %v297, %v297
    %v433 = vmul.f32 %v302, %v302
    %v434 = vmul.f32 %v305, %v305
    %v435 = vmul.f32 %v310, %v310
    %v436 = vmul.f32 %v313, %v313
    %v437 = vadd.f32 %v421, %v422
    %v438 = vadd.f32 %v437, %v423
    %v439 = vadd.f32 %v438, %v424
    %v440 = vadd.f32 %v439, %v425
    %v441 = vadd.f32 %v440, %v426
    %v442 = vadd.f32 %v441, %v427
    %v443 = vadd.f32 %v442, %v428
    %v444 = vadd.f32 %v443, %v429
    %v445 = vadd.f32 %v444, %v430
    %v446 = vadd.f32 %v445, %v431
    %v447 = vadd.f32 %v446, %v432
    %v448 = vadd.f32 %v447, %v433
    %v449 = vadd.f32 %v448, %v434
    %v450 = vadd.f32 %v449, %v435
    %v451 = vadd.f32 %v450, %v436
    %v452 = vadd.f32 %v420, %v451
    %453 = vst [vmem:[#allocation2 + $0x8] sm:$0xff] %v452
  $region29: #{bottleneck_forward.9} parent=0 // pred_fallthru
    _
  %p454 = scmp.gt.s32.totalorder %s397, 128
  // Predicated region
  $region30: #{bottleneck_forward.9} parent=0 // pred_check
    %p455 = pneg %p454
  $region31: #{bottleneck_forward.9} parent=0 // pred_check_branch
    %457 = sbr.rel (%p455) target = $region33
  $region32: #{bottleneck_forward.9} parent=0 // pred_region
    %s458 = smul.u32 0, 128
    %v459 = vlaneseq
    %v460 = vshrl.u32 %v459, 7
    %v461 = vadd.s32 %v460, 8
    %v462 = vadd.s32 %v460, 16
    %v463 = vadd.s32 %v460, 24
    %v464 = vadd.s32 %v460, 32
    %v465 = vadd.s32 %v460, 40
    %v466 = vadd.s32 %v460, 48
    %v467 = vadd.s32 %v460, 56
    %v468 = vadd.s32 %v460, 64
    %v469 = vadd.s32 %v460, 72
    %v470 = vadd.s32 %v460, 80
    %v471 = vadd.s32 %v460, 88
    %v472 = vadd.s32 %v460, 96
    %v473 = vadd.s32 %v460, 104
    %v474 = vadd.s32 %v460, 112
    %v475 = vadd.s32 %v460, 120
    %v476 = vstv %s458
    %v477 = vadd.s32 %v476, %v460
    %v478 = vadd.s32 %v476, %v461
    %v479 = vadd.s32 %v476, %v462
    %v480 = vadd.s32 %v476, %v463
    %v481 = vadd.s32 %v476, %v464
    %v482 = vadd.s32 %v476, %v465
    %v483 = vadd.s32 %v476, %v466
    %v484 = vadd.s32 %v476, %v467
    %v485 = vadd.s32 %v476, %v468
    %v486 = vadd.s32 %v476, %v469
    %v487 = vadd.s32 %v476, %v470
    %v488 = vadd.s32 %v476, %v471
    %v489 = vadd.s32 %v476, %v472
    %v490 = vadd.s32 %v476, %v473
    %v491 = vadd.s32 %v476, %v474
    %v492 = vadd.s32 %v476, %v475
    %vm493 = vcmp.lt.s32.totalorder %v477, 128
    %vm494 = vcmp.lt.s32.totalorder %v478, 128
    %vm495 = vcmp.lt.s32.totalorder %v479, 128
    %vm496 = vcmp.lt.s32.totalorder %v480, 128
    %vm497 = vcmp.lt.s32.totalorder %v481, 128
    %vm498 = vcmp.lt.s32.totalorder %v482, 128
    %vm499 = vcmp.lt.s32.totalorder %v483, 128
    %vm500 = vcmp.lt.s32.totalorder %v484, 128
    %vm501 = vcmp.lt.s32.totalorder %v485, 128
    %vm502 = vcmp.lt.s32.totalorder %v486, 128
    %vm503 = vcmp.lt.s32.totalorder %v487, 128
    %vm504 = vcmp.lt.s32.totalorder %v488, 128
    %vm505 = vcmp.lt.s32.totalorder %v489, 128
    %vm506 = vcmp.lt.s32.totalorder %v490, 128
    %vm507 = vcmp.lt.s32.totalorder %v491, 128
    %vm508 = vcmp.lt.s32.totalorder %v492, 128
    %v509 = vsel %vm493, 1, 0
    %v510 = vsel %vm494, 1, 0
    %v511 = vsel %vm495, 1, 0
    %v512 = vsel %vm496, 1, 0
    %v513 = vsel %vm497, 1, 0
    %v514 = vsel %vm498, 1, 0
    %v515 = vsel %vm499, 1, 0
    %v516 = vsel %vm500, 1, 0
    %v517 = vsel %vm501, 1, 0
    %v518 = vsel %vm502, 1, 0
    %v519 = vsel %vm503, 1, 0
    %v520 = vsel %vm504, 1, 0
    %v521 = vsel %vm505, 1, 0
    %v522 = vsel %vm506, 1, 0
    %v523 = vsel %vm507, 1, 0
    %v524 = vsel %vm508, 1, 0
    %vm525 = vcmp.eq.s32.totalorder %v509, 1
    %vm526 = vcmp.eq.s32.totalorder %v510, 1
    %vm527 = vcmp.eq.s32.totalorder %v511, 1
    %vm528 = vcmp.eq.s32.totalorder %v512, 1
    %vm529 = vcmp.eq.s32.totalorder %v513, 1
    %vm530 = vcmp.eq.s32.totalorder %v514, 1
    %vm531 = vcmp.eq.s32.totalorder %v515, 1
    %vm532 = vcmp.eq.s32.totalorder %v516, 1
    %vm533 = vcmp.eq.s32.totalorder %v517, 1
    %vm534 = vcmp.eq.s32.totalorder %v518, 1
    %vm535 = vcmp.eq.s32.totalorder %v519, 1
    %vm536 = vcmp.eq.s32.totalorder %v520, 1
    %vm537 = vcmp.eq.s32.totalorder %v521, 1
    %vm538 = vcmp.eq.s32.totalorder %v522, 1
    %vm539 = vcmp.eq.s32.totalorder %v523, 1
    %vm540 = vcmp.eq.s32.totalorder %v524, 1
    %v541 = vsel %vm525, %v254, 0.0
    %v542 = vsel %vm526, %v257, 0.0
    %v543 = vsel %vm527, %v262, 0.0
    %v544 = vsel %vm528, %v265, 0.0
    %v545 = vsel %vm529, %v270, 0.0
    %v546 = vsel %vm530, %v273, 0.0
    %v547 = vsel %vm531, %v278, 0.0
    %v548 = vsel %vm532, %v281, 0.0
    %v549 = vsel %vm533, %v286, 0.0
    %v550 = vsel %vm534, %v289, 0.0
    %v551 = vsel %vm535, %v294, 0.0
    %v552 = vsel %vm536, %v297, 0.0
    %v553 = vsel %vm537, %v302, 0.0
    %v554 = vsel %vm538, %v305, 0.0
    %v555 = vsel %vm539, %v310, 0.0
    %v556 = vsel %vm540, %v313, 0.0
    %v557 = vld [vmem:[#allocation2] sm:$0xff]
    %v558 = vadd.f32 %v541, %v542
    %v559 = vadd.f32 %v558, %v543
    %v560 = vadd.f32 %v559, %v544
    %v561 = vadd.f32 %v560, %v545
    %v562 = vadd.f32 %v561, %v546
    %v563 = vadd.f32 %v562, %v547
    %v564 = vadd.f32 %v563, %v548
    %v565 = vadd.f32 %v564, %v549
    %v566 = vadd.f32 %v565, %v550
    %v567 = vadd.f32 %v566, %v551
    %v568 = vadd.f32 %v567, %v552
    %v569 = vadd.f32 %v568, %v553
    %v570 = vadd.f32 %v569, %v554
    %v571 = vadd.f32 %v570, %v555
    %v572 = vadd.f32 %v571, %v556
    %v573 = vadd.f32 %v557, %v572
    %574 = vst [vmem:[#allocation2] sm:$0xff] %v573
    %v575 = vld [vmem:[#allocation2 + $0x8] sm:$0xff]
    %v576 = vmul.f32 %v541, %v541
    %v577 = vmul.f32 %v542, %v542
    %v578 = vmul.f32 %v543, %v543
    %v579 = vmul.f32 %v544, %v544
    %v580 = vmul.f32 %v545, %v545
    %v581 = vmul.f32 %v546, %v546
    %v582 = vmul.f32 %v547, %v547
    %v583 = vmul.f32 %v548, %v548
    %v584 = vmul.f32 %v549, %v549
    %v585 = vmul.f32 %v550, %v550
    %v586 = vmul.f32 %v551, %v551
    %v587 = vmul.f32 %v552, %v552
    %v588 = vmul.f32 %v553, %v553
    %v589 = vmul.f32 %v554, %v554
    %v590 = vmul.f32 %v555, %v555
    %v591 = vmul.f32 %v556, %v556
    %v592 = vadd.f32 %v576, %v577
    %v593 = vadd.f32 %v592, %v578
    %v594 = vadd.f32 %v593, %v579
    %v595 = vadd.f32 %v594, %v580
    %v596 = vadd.f32 %v595, %v581
    %v597 = vadd.f32 %v596, %v582
    %v598 = vadd.f32 %v597, %v583
    %v599 = vadd.f32 %v598, %v584
    %v600 = vadd.f32 %v599, %v585
    %v601 = vadd.f32 %v600, %v586
    %v602 = vadd.f32 %v601, %v587
    %v603 = vadd.f32 %v602, %v588
    %v604 = vadd.f32 %v603, %v589
    %v605 = vadd.f32 %v604, %v590
    %v606 = vadd.f32 %v605, %v591
    %v607 = vadd.f32 %v575, %v606
    %608 = vst [vmem:[#allocation2 + $0x8] sm:$0xff] %v607
  $region33: #{bottleneck_forward.9} parent=0 // pred_fallthru
    _
  // Predicated region
  $region34: #{bottleneck_forward.9} parent=0 // pred_check
    %p609 = pneg %p23
  $region35: #{bottleneck_forward.9} parent=0 // pred_check_branch
    %611 = sbr.rel (%p609) target = $region37
  $region36: #{bottleneck_forward.9} parent=0 // pred_region
    %v612 = vld [vmem:[#allocation2] sm:$0xff]
    %v613 = vld [vmem:[#allocation2 + $0x8] sm:$0xff]
    %614 = vst [vmem:[%s6] sm:$0xff] %v612
    %615 = vst [vmem:[%s6 + $0x8] sm:$0xff] %v613
  $region37: #{bottleneck_forward.9} parent=0 // pred_fallthru
    _
  // Predicated region
  $region38: #{bottleneck_forward.9} parent=0 // pred_check
    _
  $region39: #{bottleneck_forward.9} parent=0 // pred_check_branch
    %617 = sbr.rel (0) target = $region41
  $region40: #{bottleneck_forward.9} parent=0 // pred_region
    _
  $region41: #{bottleneck_forward.9} parent=0 // pred_fallthru
    _
  // Predicated region
  $region42: #{bottleneck_forward.9} parent=0 // pred_check
    _
  $region43: #{bottleneck_forward.9} parent=0 // pred_check_branch
    %619 = sbr.rel (0) target = $region45
  $region44: #{bottleneck_forward.9} parent=0 // pred_region
    _
  $region45: #{bottleneck_forward.9} parent=0 // pred_fallthru
    _
  // Predicated region
  $region46: #{bottleneck_forward.9} parent=0 // pred_check
    _
  $region47: #{bottleneck_forward.9} parent=0 // pred_check_branch
    %621 = sbr.rel (0) target = $region49
  $region48: #{bottleneck_forward.9} parent=0 // pred_region
    _
  $region49: #{bottleneck_forward.9} parent=0 // pred_fallthru
    _
  // Predicated region
  $region50: #{bottleneck_forward.9} parent=0 // pred_check
    _
  $region51: #{bottleneck_forward.9} parent=0 // pred_check_branch
    %623 = sbr.rel (0) target = $region53
  $region52: #{bottleneck_forward.9} parent=0 // pred_region
    _
  $region53: #{bottleneck_forward.9} parent=0 // pred_fallthru
    _

// kernel: bottleneck_forward.8
$region0: #{bottleneck_forward.8}
  #allocation0 [shape = 'u32[]', space=smem, size = 0x4, offset = 0x4, fixed_abs, tag = 'smem constant byte address 0x4 - core index']
  #allocation1 [shape = 'u32[144,128]{1,0:T(1,128)}', space=vmem, size = 0x12000, scoped, tag = 'internal scratch']
  #allocation2 [shape = 'f32[16,128]{1,0:T(8,128)}', space=vmem, size = 0x2000, scoped, tag = 'scratch operand']
  %s0 = inlined_call_operand.vmem [shape: bf16[128,1152], index: 0, kind: input, shape index: {}]
  %s1 = inlined_call_operand.vmem [shape: bf16[1152,128], index: 1, kind: input, shape index: {}]
  %s2 = inlined_call_operand.vmem [shape: bf16[128,128], index: 2, kind: output, shape index: {0}]
  %s3 = inlined_call_operand.vmem [shape: f32[16,128], index: 3, kind: output, shape index: {1}]
  %4 = xla_tuple %s2, %s3
  %s5 = sld [smem:[#allocation0]]
  $region34: #{bottleneck_forward.8} parent=0
    _
  %s7 = ssub.s32 1, %s5
  %s8 = scalar_select 0, %s7, %s5
  // Predicated region
  $region2: #{bottleneck_forward.8} parent=0 // pred_check
    _
  $region3: #{bottleneck_forward.8} parent=0 // pred_check_branch
    %10 = sbr.rel (0) target = $region5
  $region4: #{bottleneck_forward.8} parent=0 // pred_region
    _
  $region5: #{bottleneck_forward.8} parent=0 // pred_fallthru
    _
  // Predicated region
  $region6: #{bottleneck_forward.8} parent=0 // pred_check
    _
  $region7: #{bottleneck_forward.8} parent=0 // pred_check_branch
    %12 = sbr.rel (0) target = $region9
  $region8: #{bottleneck_forward.8} parent=0 // pred_region
    _
  $region9: #{bottleneck_forward.8} parent=0 // pred_fallthru
    _
  %p14 = scmp.eq.s32.totalorder 0, 0
  // Predicated region
  $region10: #{bottleneck_forward.8} parent=0 // pred_check
    %p15 = pneg %p14
  $region11: #{bottleneck_forward.8} parent=0 // pred_check_branch
    %17 = sbr.rel (%p15) target = $region13
  $region12: #{bottleneck_forward.8} parent=0 // pred_region
    %18 = vst [vmem:[#allocation2] sm:$0xff] 0.0
    %19 = vst [vmem:[#allocation2 + $0x8] sm:$0xff] 0.0
  $region13: #{bottleneck_forward.8} parent=0 // pred_fallthru
    _
  %v20 = vld [vmem:[%s0] sm:$0xff]
  %v21 = vld [vmem:[%s0 + $0x8] sm:$0xff]
  %v22 = vld [vmem:[%s0 + $0x10] sm:$0xff]
  %v23 = vld [vmem:[%s0 + $0x18] sm:$0xff]
  %v24 = vld [vmem:[%s0 + $0x20] sm:$0xf]
  %v25 = vld [vmem:[%s0 + $0x24] sm:$0xff]
  %v26 = vld [vmem:[%s0 + $0x2c] sm:$0xff]
  %v27 = vld [vmem:[%s0 + $0x34] sm:$0xff]
  %v28 = vld [vmem:[%s0 + $0x3c] sm:$0xff]
  %v29 = vld [vmem:[%s0 + $0x44] sm:$0xf]
  %v30 = vld [vmem:[%s0 + $0x48] sm:$0xff]
  %v31 = vld [vmem:[%s0 + $0x50] sm:$0xff]
  %v32 = vld [vmem:[%s0 + $0x58] sm:$0xff]
  %v33 = vld [vmem:[%s0 + $0x60] sm:$0xff]
  %v34 = vld [vmem:[%s0 + $0x68] sm:$0xf]
  %v35 = vld [vmem:[%s0 + $0x6c] sm:$0xff]
  %v36 = vld [vmem:[%s0 + $0x74] sm:$0xff]
  %v37 = vld [vmem:[%s0 + $0x7c] sm:$0xff]
  %v38 = vld [vmem:[%s0 + $0x84] sm:$0xff]
  %v39 = vld [vmem:[%s0 + $0x8c] sm:$0xf]
  %v40 = vld [vmem:[%s0 + $0x90] sm:$0xff]
  %v41 = vld [vmem:[%s0 + $0x98] sm:$0xff]
  %v42 = vld [vmem:[%s0 + $0xa0] sm:$0xff]
  %v43 = vld [vmem:[%s0 + $0xa8] sm:$0xff]
  %v44 = vld [vmem:[%s0 + $0xb0] sm:$0xf]
  %v45 = vld [vmem:[%s0 + $0xb4] sm:$0xff]
  %v46 = vld [vmem:[%s0 + $0xbc] sm:$0xff]
  %v47 = vld [vmem:[%s0 + $0xc4] sm:$0xff]
  %v48 = vld [vmem:[%s0 + $0xcc] sm:$0xff]
  %v49 = vld [vmem:[%s0 + $0xd4] sm:$0xf]
  %v50 = vld [vmem:[%s0 + $0xd8] sm:$0xff]
  %v51 = vld [vmem:[%s0 + $0xe0] sm:$0xff]
  %v52 = vld [vmem:[%s0 + $0xe8] sm:$0xff]
  %v53 = vld [vmem:[%s0 + $0xf0] sm:$0xff]
  %v54 = vld [vmem:[%s0 + $0xf8] sm:$0xf]
  %v55 = vld [vmem:[%s0 + $0xfc] sm:$0xff]
  %v56 = vld [vmem:[%s0 + $0x104] sm:$0xff]
  %v57 = vld [vmem:[%s0 + $0x10c] sm:$0xff]
  %v58 = vld [vmem:[%s0 + $0x114] sm:$0xff]
  %v59 = vld [vmem:[%s0 + $0x11c] sm:$0xf]
  %v60 = vld [vmem:[%s0 + $0x120] sm:$0xff]
  %v61 = vld [vmem:[%s0 + $0x128] sm:$0xff]
  %v62 = vld [vmem:[%s0 + $0x130] sm:$0xff]
  %v63 = vld [vmem:[%s0 + $0x138] sm:$0xff]
  %v64 = vld [vmem:[%s0 + $0x140] sm:$0xf]
  %v65 = vld [vmem:[%s0 + $0x144] sm:$0xff]
  %v66 = vld [vmem:[%s0 + $0x14c] sm:$0xff]
  %v67 = vld [vmem:[%s0 + $0x154] sm:$0xff]
  %v68 = vld [vmem:[%s0 + $0x15c] sm:$0xff]
  %v69 = vld [vmem:[%s0 + $0x164] sm:$0xf]
  %v70 = vld [vmem:[%s0 + $0x168] sm:$0xff]
  %v71 = vld [vmem:[%s0 + $0x170] sm:$0xff]
  %v72 = vld [vmem:[%s0 + $0x178] sm:$0xff]
  %v73 = vld [vmem:[%s0 + $0x180] sm:$0xff]
  %v74 = vld [vmem:[%s0 + $0x188] sm:$0xf]
  %v75 = vld [vmem:[%s0 + $0x18c] sm:$0xff]
  %v76 = vld [vmem:[%s0 + $0x194] sm:$0xff]
  %v77 = vld [vmem:[%s0 + $0x19c] sm:$0xff]
  %v78 = vld [vmem:[%s0 + $0x1a4] sm:$0xff]
  %v79 = vld [vmem:[%s0 + $0x1ac] sm:$0xf]
  %v80 = vld [vmem:[%s0 + $0x1b0] sm:$0xff]
  %v81 = vld [vmem:[%s0 + $0x1b8] sm:$0xff]
  %v82 = vld [vmem:[%s0 + $0x1c0] sm:$0xff]
  %v83 = vld [vmem:[%s0 + $0x1c8] sm:$0xff]
  %v84 = vld [vmem:[%s0 + $0x1d0] sm:$0xf]
  %v85 = vld [vmem:[%s0 + $0x1d4] sm:$0xff]
  %v86 = vld [vmem:[%s0 + $0x1dc] sm:$0xff]
  %v87 = vld [vmem:[%s0 + $0x1e4] sm:$0xff]
  %v88 = vld [vmem:[%s0 + $0x1ec] sm:$0xff]
  %v89 = vld [vmem:[%s0 + $0x1f4] sm:$0xf]
  %v90 = vld [vmem:[%s0 + $0x1f8] sm:$0xff]
  %v91 = vld [vmem:[%s0 + $0x200] sm:$0xff]
  %v92 = vld [vmem:[%s0 + $0x208] sm:$0xff]
  %v93 = vld [vmem:[%s0 + $0x210] sm:$0xff]
  %v94 = vld [vmem:[%s0 + $0x218] sm:$0xf]
  %v95 = vld [vmem:[%s0 + $0x21c] sm:$0xff]
  %v96 = vld [vmem:[%s0 + $0x224] sm:$0xff]
  %v97 = vld [vmem:[%s0 + $0x22c] sm:$0xff]
  %v98 = vld [vmem:[%s0 + $0x234] sm:$0xff]
  %v99 = vld [vmem:[%s0 + $0x23c] sm:$0xf]
  %v100 = vld [vmem:[%s1] sm:$0xf]
  %v101 = vld [vmem:[%s1 + $0x4] sm:$0xf]
  %v102 = vld [vmem:[%s1 + $0x8] sm:$0xf]
  %v103 = vld [vmem:[%s1 + $0xc] sm:$0xf]
  %v104 = vld [vmem:[%s1 + $0x10] sm:$0xf]
  %v105 = vld [vmem:[%s1 + $0x14] sm:$0xf]
  %v106 = vld [vmem:[%s1 + $0x18] sm:$0xf]
  %v107 = vld [vmem:[%s1 + $0x1c] sm:$0xf]
  %v108 = vld [vmem:[%s1 + $0x20] sm:$0xf]
  %v109 = vld [vmem:[%s1 + $0x24] sm:$0xf]
  %v110 = vld [vmem:[%s1 + $0x28] sm:$0xf]
  %v111 = vld [vmem:[%s1 + $0x2c] sm:$0xf]
  %v112 = vld [vmem:[%s1 + $0x30] sm:$0xf]
  %v113 = vld [vmem:[%s1 + $0x34] sm:$0xf]
  %v114 = vld [vmem:[%s1 + $0x38] sm:$0xf]
  %v115 = vld [vmem:[%s1 + $0x3c] sm:$0xf]
  %v116 = vld [vmem:[%s1 + $0x40] sm:$0xf]
  %v117 = vld [vmem:[%s1 + $0x44] sm:$0xf]
  %v118 = vld [vmem:[%s1 + $0x48] sm:$0xf]
  %v119 = vld [vmem:[%s1 + $0x4c] sm:$0xf]
  %v120 = vld [vmem:[%s1 + $0x50] sm:$0xf]
  %v121 = vld [vmem:[%s1 + $0x54] sm:$0xf]
  %v122 = vld [vmem:[%s1 + $0x58] sm:$0xf]
  %v123 = vld [vmem:[%s1 + $0x5c] sm:$0xf]
  %v124 = vld [vmem:[%s1 + $0x60] sm:$0xf]
  %v125 = vld [vmem:[%s1 + $0x64] sm:$0xf]
  %v126 = vld [vmem:[%s1 + $0x68] sm:$0xf]
  %v127 = vld [vmem:[%s1 + $0x6c] sm:$0xf]
  %v128 = vld [vmem:[%s1 + $0x70] sm:$0xf]
  %v129 = vld [vmem:[%s1 + $0x74] sm:$0xf]
  %v130 = vld [vmem:[%s1 + $0x78] sm:$0xf]
  %v131 = vld [vmem:[%s1 + $0x7c] sm:$0xf]
  %v132 = vld [vmem:[%s1 + $0x80] sm:$0xf]
  %v133 = vld [vmem:[%s1 + $0x84] sm:$0xf]
  %v134 = vld [vmem:[%s1 + $0x88] sm:$0xf]
  %v135 = vld [vmem:[%s1 + $0x8c] sm:$0xf]
  %v136 = vld [vmem:[%s1 + $0x90] sm:$0xf]
  %v137 = vld [vmem:[%s1 + $0x94] sm:$0xf]
  %v138 = vld [vmem:[%s1 + $0x98] sm:$0xf]
  %v139 = vld [vmem:[%s1 + $0x9c] sm:$0xf]
  %v140 = vld [vmem:[%s1 + $0xa0] sm:$0xf]
  %v141 = vld [vmem:[%s1 + $0xa4] sm:$0xf]
  %v142 = vld [vmem:[%s1 + $0xa8] sm:$0xf]
  %v143 = vld [vmem:[%s1 + $0xac] sm:$0xf]
  %v144 = vld [vmem:[%s1 + $0xb0] sm:$0xf]
  %v145 = vld [vmem:[%s1 + $0xb4] sm:$0xf]
  %v146 = vld [vmem:[%s1 + $0xb8] sm:$0xf]
  %v147 = vld [vmem:[%s1 + $0xbc] sm:$0xf]
  %v148 = vld [vmem:[%s1 + $0xc0] sm:$0xf]
  %v149 = vld [vmem:[%s1 + $0xc4] sm:$0xf]
  %v150 = vld [vmem:[%s1 + $0xc8] sm:$0xf]
  %v151 = vld [vmem:[%s1 + $0xcc] sm:$0xf]
  %v152 = vld [vmem:[%s1 + $0xd0] sm:$0xf]
  %v153 = vld [vmem:[%s1 + $0xd4] sm:$0xf]
  %v154 = vld [vmem:[%s1 + $0xd8] sm:$0xf]
  %v155 = vld [vmem:[%s1 + $0xdc] sm:$0xf]
  %v156 = vld [vmem:[%s1 + $0xe0] sm:$0xf]
  %v157 = vld [vmem:[%s1 + $0xe4] sm:$0xf]
  %v158 = vld [vmem:[%s1 + $0xe8] sm:$0xf]
  %v159 = vld [vmem:[%s1 + $0xec] sm:$0xf]
  %v160 = vld [vmem:[%s1 + $0xf0] sm:$0xf]
  %v161 = vld [vmem:[%s1 + $0xf4] sm:$0xf]
  %v162 = vld [vmem:[%s1 + $0xf8] sm:$0xf]
  %v163 = vld [vmem:[%s1 + $0xfc] sm:$0xf]
  %v164 = vld [vmem:[%s1 + $0x100] sm:$0xf]
  %v165 = vld [vmem:[%s1 + $0x104] sm:$0xf]
  %v166 = vld [vmem:[%s1 + $0x108] sm:$0xf]
  %v167 = vld [vmem:[%s1 + $0x10c] sm:$0xf]
  %v168 = vld [vmem:[%s1 + $0x110] sm:$0xf]
  %v169 = vld [vmem:[%s1 + $0x114] sm:$0xf]
  %v170 = vld [vmem:[%s1 + $0x118] sm:$0xf]
  %v171 = vld [vmem:[%s1 + $0x11c] sm:$0xf]
  %v172 = vld [vmem:[%s1 + $0x120] sm:$0xf]
  %v173 = vld [vmem:[%s1 + $0x124] sm:$0xf]
  %v174 = vld [vmem:[%s1 + $0x128] sm:$0xf]
  %v175 = vld [vmem:[%s1 + $0x12c] sm:$0xf]
  %v176 = vld [vmem:[%s1 + $0x130] sm:$0xf]
  %v177 = vld [vmem:[%s1 + $0x134] sm:$0xf]
  %v178 = vld [vmem:[%s1 + $0x138] sm:$0xf]
  %v179 = vld [vmem:[%s1 + $0x13c] sm:$0xf]
  %v180 = vld [vmem:[%s1 + $0x140] sm:$0xf]
  %v181 = vld [vmem:[%s1 + $0x144] sm:$0xf]
  %v182 = vld [vmem:[%s1 + $0x148] sm:$0xf]
  %v183 = vld [vmem:[%s1 + $0x14c] sm:$0xf]
  %v184 = vld [vmem:[%s1 + $0x150] sm:$0xf]
  %v185 = vld [vmem:[%s1 + $0x154] sm:$0xf]
  %v186 = vld [vmem:[%s1 + $0x158] sm:$0xf]
  %v187 = vld [vmem:[%s1 + $0x15c] sm:$0xf]
  %v188 = vld [vmem:[%s1 + $0x160] sm:$0xf]
  %v189 = vld [vmem:[%s1 + $0x164] sm:$0xf]
  %v190 = vld [vmem:[%s1 + $0x168] sm:$0xf]
  %v191 = vld [vmem:[%s1 + $0x16c] sm:$0xf]
  %v192 = vld [vmem:[%s1 + $0x170] sm:$0xf]
  %v193 = vld [vmem:[%s1 + $0x174] sm:$0xf]
  %v194 = vld [vmem:[%s1 + $0x178] sm:$0xf]
  %v195 = vld [vmem:[%s1 + $0x17c] sm:$0xf]
  %v196 = vld [vmem:[%s1 + $0x180] sm:$0xf]
  %v197 = vld [vmem:[%s1 + $0x184] sm:$0xf]
  %v198 = vld [vmem:[%s1 + $0x188] sm:$0xf]
  %v199 = vld [vmem:[%s1 + $0x18c] sm:$0xf]
  %v200 = vld [vmem:[%s1 + $0x190] sm:$0xf]
  %v201 = vld [vmem:[%s1 + $0x194] sm:$0xf]
  %v202 = vld [vmem:[%s1 + $0x198] sm:$0xf]
  %v203 = vld [vmem:[%s1 + $0x19c] sm:$0xf]
  %v204 = vld [vmem:[%s1 + $0x1a0] sm:$0xf]
  %v205 = vld [vmem:[%s1 + $0x1a4] sm:$0xf]
  %v206 = vld [vmem:[%s1 + $0x1a8] sm:$0xf]
  %v207 = vld [vmem:[%s1 + $0x1ac] sm:$0xf]
  %v208 = vld [vmem:[%s1 + $0x1b0] sm:$0xf]
  %v209 = vld [vmem:[%s1 + $0x1b4] sm:$0xf]
  %v210 = vld [vmem:[%s1 + $0x1b8] sm:$0xf]
  %v211 = vld [vmem:[%s1 + $0x1bc] sm:$0xf]
  %v212 = vld [vmem:[%s1 + $0x1c0] sm:$0xf]
  %v213 = vld [vmem:[%s1 + $0x1c4] sm:$0xf]
  %v214 = vld [vmem:[%s1 + $0x1c8] sm:$0xf]
  %v215 = vld [vmem:[%s1 + $0x1cc] sm:$0xf]
  %v216 = vld [vmem:[%s1 + $0x1d0] sm:$0xf]
  %v217 = vld [vmem:[%s1 + $0x1d4] sm:$0xf]
  %v218 = vld [vmem:[%s1 + $0x1d8] sm:$0xf]
  %v219 = vld [vmem:[%s1 + $0x1dc] sm:$0xf]
  %v220 = vld [vmem:[%s1 + $0x1e0] sm:$0xf]
  %v221 = vld [vmem:[%s1 + $0x1e4] sm:$0xf]
  %v222 = vld [vmem:[%s1 + $0x1e8] sm:$0xf]
  %v223 = vld [vmem:[%s1 + $0x1ec] sm:$0xf]
  %v224 = vld [vmem:[%s1 + $0x1f0] sm:$0xf]
  %v225 = vld [vmem:[%s1 + $0x1f4] sm:$0xf]
  %v226 = vld [vmem:[%s1 + $0x1f8] sm:$0xf]
  %v227 = vld [vmem:[%s1 + $0x1fc] sm:$0xf]
  %v228 = vld [vmem:[%s1 + $0x200] sm:$0xf]
  %v229 = vld [vmem:[%s1 + $0x204] sm:$0xf]
  %v230 = vld [vmem:[%s1 + $0x208] sm:$0xf]
  %v231 = vld [vmem:[%s1 + $0x20c] sm:$0xf]
  %v232 = vld [vmem:[%s1 + $0x210] sm:$0xf]
  %v233 = vld [vmem:[%s1 + $0x214] sm:$0xf]
  %v234 = vld [vmem:[%s1 + $0x218] sm:$0xf]
  %v235 = vld [vmem:[%s1 + $0x21c] sm:$0xf]
  %v236 = vld [vmem:[%s1 + $0x220] sm:$0xf]
  %v237 = vld [vmem:[%s1 + $0x224] sm:$0xf]
  %v238 = vld [vmem:[%s1 + $0x228] sm:$0xf]
  %v239 = vld [vmem:[%s1 + $0x22c] sm:$0xf]
  %v240 = vld [vmem:[%s1 + $0x230] sm:$0xf]
  %v241 = vld [vmem:[%s1 + $0x234] sm:$0xf]
  %v242 = vld [vmem:[%s1 + $0x238] sm:$0xf]
  %v243 = vld [vmem:[%s1 + $0x23c] sm:$0xf]
  %v324 = vunpack.c.l.b16 %v20
  %v325 = vunpack.c.h.b16 %v20
  %v326 = vunpack.c.l.b16 %v21
  %v327 = vunpack.c.h.b16 %v21
  %v328 = vunpack.c.l.b16 %v22
  %v329 = vunpack.c.h.b16 %v22
  %v330 = vunpack.c.l.b16 %v23
  %v331 = vunpack.c.h.b16 %v23
  %v332 = vunpack.c.l.b16 %v24
  %v333 = vunpack.c.l.b16 %v25
  %v334 = vunpack.c.h.b16 %v25
  %v335 = vunpack.c.l.b16 %v26
  %v336 = vunpack.c.h.b16 %v26
  %v337 = vunpack.c.l.b16 %v27
  %v338 = vunpack.c.h.b16 %v27
  %v339 = vunpack.c.l.b16 %v28
  %v340 = vunpack.c.h.b16 %v28
  %v341 = vunpack.c.l.b16 %v29
  %v342 = vunpack.c.l.b16 %v30
  %v343 = vunpack.c.h.b16 %v30
  %v344 = vunpack.c.l.b16 %v31
  %v345 = vunpack.c.h.b16 %v31
  %v346 = vunpack.c.l.b16 %v32
  %v347 = vunpack.c.h.b16 %v32
  %v348 = vunpack.c.l.b16 %v33
  %v349 = vunpack.c.h.b16 %v33
  %v350 = vunpack.c.l.b16 %v34
  %v351 = vunpack.c.l.b16 %v35
  %v352 = vunpack.c.h.b16 %v35
  %v353 = vunpack.c.l.b16 %v36
  %v354 = vunpack.c.h.b16 %v36
  %v355 = vunpack.c.l.b16 %v37
  %v356 = vunpack.c.h.b16 %v37
  %v357 = vunpack.c.l.b16 %v38
  %v358 = vunpack.c.h.b16 %v38
  %v359 = vunpack.c.l.b16 %v39
  %v360 = vunpack.c.l.b16 %v40
  %v361 = vunpack.c.h.b16 %v40
  %v362 = vunpack.c.l.b16 %v41
  %v363 = vunpack.c.h.b16 %v41
  %v364 = vunpack.c.l.b16 %v42
  %v365 = vunpack.c.h.b16 %v42
  %v366 = vunpack.c.l.b16 %v43
  %v367 = vunpack.c.h.b16 %v43
  %v368 = vunpack.c.l.b16 %v44
  %v369 = vunpack.c.l.b16 %v45
  %v370 = vunpack.c.h.b16 %v45
  %v371 = vunpack.c.l.b16 %v46
  %v372 = vunpack.c.h.b16 %v46
  %v373 = vunpack.c.l.b16 %v47
  %v374 = vunpack.c.h.b16 %v47
  %v375 = vunpack.c.l.b16 %v48
  %v376 = vunpack.c.h.b16 %v48
  %v377 = vunpack.c.l.b16 %v49
  %v378 = vunpack.c.l.b16 %v50
  %v379 = vunpack.c.h.b16 %v50
  %v380 = vunpack.c.l.b16 %v51
  %v381 = vunpack.c.h.b16 %v51
  %v382 = vunpack.c.l.b16 %v52
  %v383 = vunpack.c.h.b16 %v52
  %v384 = vunpack.c.l.b16 %v53
  %v385 = vunpack.c.h.b16 %v53
  %v386 = vunpack.c.l.b16 %v54
  %v387 = vunpack.c.l.b16 %v55
  %v388 = vunpack.c.h.b16 %v55
  %v389 = vunpack.c.l.b16 %v56
  %v390 = vunpack.c.h.b16 %v56
  %v391 = vunpack.c.l.b16 %v57
  %v392 = vunpack.c.h.b16 %v57
  %v393 = vunpack.c.l.b16 %v58
  %v394 = vunpack.c.h.b16 %v58
  %v395 = vunpack.c.l.b16 %v59
  %v396 = vunpack.c.l.b16 %v60
  %v397 = vunpack.c.h.b16 %v60
  %v398 = vunpack.c.l.b16 %v61
  %v399 = vunpack.c.h.b16 %v61
  %v400 = vunpack.c.l.b16 %v62
  %v401 = vunpack.c.h.b16 %v62
  %v402 = vunpack.c.l.b16 %v63
  %v403 = vunpack.c.h.b16 %v63
  %v404 = vunpack.c.l.b16 %v64
  %v405 = vunpack.c.l.b16 %v65
  %v406 = vunpack.c.h.b16 %v65
  %v407 = vunpack.c.l.b16 %v66
  %v408 = vunpack.c.h.b16 %v66
  %v409 = vunpack.c.l.b16 %v67
  %v410 = vunpack.c.h.b16 %v67
  %v411 = vunpack.c.l.b16 %v68
  %v412 = vunpack.c.h.b16 %v68
  %v413 = vunpack.c.l.b16 %v69
  %v414 = vunpack.c.l.b16 %v70
  %v415 = vunpack.c.h.b16 %v70
  %v416 = vunpack.c.l.b16 %v71
  %v417 = vunpack.c.h.b16 %v71
  %v418 = vunpack.c.l.b16 %v72
  %v419 = vunpack.c.h.b16 %v72
  %v420 = vunpack.c.l.b16 %v73
  %v421 = vunpack.c.h.b16 %v73
  %v422 = vunpack.c.l.b16 %v74
  %v423 = vunpack.c.l.b16 %v75
  %v424 = vunpack.c.h.b16 %v75
  %v425 = vunpack.c.l.b16 %v76
  %v426 = vunpack.c.h.b16 %v76
  %v427 = vunpack.c.l.b16 %v77
  %v428 = vunpack.c.h.b16 %v77
  %v429 = vunpack.c.l.b16 %v78
  %v430 = vunpack.c.h.b16 %v78
  %v431 = vunpack.c.l.b16 %v79
  %v432 = vunpack.c.l.b16 %v80
  %v433 = vunpack.c.h.b16 %v80
  %v434 = vunpack.c.l.b16 %v81
  %v435 = vunpack.c.h.b16 %v81
  %v436 = vunpack.c.l.b16 %v82
  %v437 = vunpack.c.h.b16 %v82
  %v438 = vunpack.c.l.b16 %v83
  %v439 = vunpack.c.h.b16 %v83
  %v440 = vunpack.c.l.b16 %v84
  %v441 = vunpack.c.l.b16 %v85
  %v442 = vunpack.c.h.b16 %v85
  %v443 = vunpack.c.l.b16 %v86
  %v444 = vunpack.c.h.b16 %v86
  %v445 = vunpack.c.l.b16 %v87
  %v446 = vunpack.c.h.b16 %v87
  %v447 = vunpack.c.l.b16 %v88
  %v448 = vunpack.c.h.b16 %v88
  %v449 = vunpack.c.l.b16 %v89
  %v450 = vunpack.c.l.b16 %v90
  %v451 = vunpack.c.h.b16 %v90
  %v452 = vunpack.c.l.b16 %v91
  %v453 = vunpack.c.h.b16 %v91
  %v454 = vunpack.c.l.b16 %v92
  %v455 = vunpack.c.h.b16 %v92
  %v456 = vunpack.c.l.b16 %v93
  %v457 = vunpack.c.h.b16 %v93
  %v458 = vunpack.c.l.b16 %v94
  %v459 = vunpack.c.l.b16 %v95
  %v460 = vunpack.c.h.b16 %v95
  %v461 = vunpack.c.l.b16 %v96
  %v462 = vunpack.c.h.b16 %v96
  %v463 = vunpack.c.l.b16 %v97
  %v464 = vunpack.c.h.b16 %v97
  %v465 = vunpack.c.l.b16 %v98
  %v466 = vunpack.c.h.b16 %v98
  %v467 = vunpack.c.l.b16 %v99
  %v468 = vpack.c.b16 %v333, %v324
  %v469 = vpack.c.b16 %v334, %v325
  %v470 = vpack.c.b16 %v335, %v326
  %v471 = vpack.c.b16 %v336, %v327
  %v472 = vpack.c.b16 %v337, %v328
  %v473 = vpack.c.b16 %v338, %v329
  %v474 = vpack.c.b16 %v339, %v330
  %v475 = vpack.c.b16 %v340, %v331
  %v476 = vpack.c.b16 %v341, %v332
  %v477 = vpack.c.b16 %v351, %v342
  %v478 = vpack.c.b16 %v352, %v343
  %v479 = vpack.c.b16 %v353, %v344
  %v480 = vpack.c.b16 %v354, %v345
  %v481 = vpack.c.b16 %v355, %v346
  %v482 = vpack.c.b16 %v356, %v347
  %v483 = vpack.c.b16 %v357, %v348
  %v484 = vpack.c.b16 %v358, %v349
  %v485 = vpack.c.b16 %v359, %v350
  %v486 = vpack.c.b16 %v369, %v360
  %v487 = vpack.c.b16 %v370, %v361
  %v488 = vpack.c.b16 %v371, %v362
  %v489 = vpack.c.b16 %v372, %v363
  %v490 = vpack.c.b16 %v373, %v364
  %v491 = vpack.c.b16 %v374, %v365
  %v492 = vpack.c.b16 %v375, %v366
  %v493 = vpack.c.b16 %v376, %v367
  %v494 = vpack.c.b16 %v377, %v368
  %v495 = vpack.c.b16 %v387, %v378
  %v496 = vpack.c.b16 %v388, %v379
  %v497 = vpack.c.b16 %v389, %v380
  %v498 = vpack.c.b16 %v390, %v381
  %v499 = vpack.c.b16 %v391, %v382
  %v500 = vpack.c.b16 %v392, %v383
  %v501 = vpack.c.b16 %v393, %v384
  %v502 = vpack.c.b16 %v394, %v385
  %v503 = vpack.c.b16 %v395, %v386
  %v504 = vpack.c.b16 %v405, %v396
  %v505 = vpack.c.b16 %v406, %v397
  %v506 = vpack.c.b16 %v407, %v398
  %v507 = vpack.c.b16 %v408, %v399
  %v508 = vpack.c.b16 %v409, %v400
  %v509 = vpack.c.b16 %v410, %v401
  %v510 = vpack.c.b16 %v411, %v402
  %v511 = vpack.c.b16 %v412, %v403
  %v512 = vpack.c.b16 %v413, %v404
  %v513 = vpack.c.b16 %v423, %v414
  %v514 = vpack.c.b16 %v424, %v415
  %v515 = vpack.c.b16 %v425, %v416
  %v516 = vpack.c.b16 %v426, %v417
  %v517 = vpack.c.b16 %v427, %v418
  %v518 = vpack.c.b16 %v428, %v419
  %v519 = vpack.c.b16 %v429, %v420
  %v520 = vpack.c.b16 %v430, %v421
  %v521 = vpack.c.b16 %v431, %v422
  %v522 = vpack.c.b16 %v441, %v432
  %v523 = vpack.c.b16 %v442, %v433
  %v524 = vpack.c.b16 %v443, %v434
  %v525 = vpack.c.b16 %v444, %v435
  %v526 = vpack.c.b16 %v445, %v436
  %v527 = vpack.c.b16 %v446, %v437
  %v528 = vpack.c.b16 %v447, %v438
  %v529 = vpack.c.b16 %v448, %v439
  %v530 = vpack.c.b16 %v449, %v440
  %v531 = vpack.c.b16 %v459, %v450
  %v532 = vpack.c.b16 %v460, %v451
  %v533 = vpack.c.b16 %v461, %v452
  %v534 = vpack.c.b16 %v462, %v453
  %v535 = vpack.c.b16 %v463, %v454
  %v536 = vpack.c.b16 %v464, %v455
  %v537 = vpack.c.b16 %v465, %v456
  %v538 = vpack.c.b16 %v466, %v457
  %v539 = vpack.c.b16 %v467, %v458
  %v756 = vunpack.c.l.b16 %v100
  %v757 = vunpack.c.l.b16 %v101
  %v758 = vunpack.c.l.b16 %v102
  %v759 = vunpack.c.l.b16 %v103
  %v760 = vunpack.c.l.b16 %v104
  %v761 = vunpack.c.l.b16 %v105
  %v762 = vunpack.c.l.b16 %v106
  %v763 = vunpack.c.l.b16 %v107
  %v764 = vunpack.c.l.b16 %v108
  %v765 = vunpack.c.l.b16 %v109
  %v766 = vunpack.c.l.b16 %v110
  %v767 = vunpack.c.l.b16 %v111
  %v768 = vunpack.c.l.b16 %v112
  %v769 = vunpack.c.l.b16 %v113
  %v770 = vunpack.c.l.b16 %v114
  %v771 = vunpack.c.l.b16 %v115
  %v772 = vunpack.c.l.b16 %v116
  %v773 = vunpack.c.l.b16 %v117
  %v774 = vunpack.c.l.b16 %v118
  %v775 = vunpack.c.l.b16 %v119
  %v776 = vunpack.c.l.b16 %v120
  %v777 = vunpack.c.l.b16 %v121
  %v778 = vunpack.c.l.b16 %v122
  %v779 = vunpack.c.l.b16 %v123
  %v780 = vunpack.c.l.b16 %v124
  %v781 = vunpack.c.l.b16 %v125
  %v782 = vunpack.c.l.b16 %v126
  %v783 = vunpack.c.l.b16 %v127
  %v784 = vunpack.c.l.b16 %v128
  %v785 = vunpack.c.l.b16 %v129
  %v786 = vunpack.c.l.b16 %v130
  %v787 = vunpack.c.l.b16 %v131
  %v788 = vunpack.c.l.b16 %v132
  %v789 = vunpack.c.l.b16 %v133
  %v790 = vunpack.c.l.b16 %v134
  %v791 = vunpack.c.l.b16 %v135
  %v792 = vunpack.c.l.b16 %v136
  %v793 = vunpack.c.l.b16 %v137
  %v794 = vunpack.c.l.b16 %v138
  %v795 = vunpack.c.l.b16 %v139
  %v796 = vunpack.c.l.b16 %v140
  %v797 = vunpack.c.l.b16 %v141
  %v798 = vunpack.c.l.b16 %v142
  %v799 = vunpack.c.l.b16 %v143
  %v800 = vunpack.c.l.b16 %v144
  %v801 = vunpack.c.l.b16 %v145
  %v802 = vunpack.c.l.b16 %v146
  %v803 = vunpack.c.l.b16 %v147
  %v804 = vunpack.c.l.b16 %v148
  %v805 = vunpack.c.l.b16 %v149
  %v806 = vunpack.c.l.b16 %v150
  %v807 = vunpack.c.l.b16 %v151
  %v808 = vunpack.c.l.b16 %v152
  %v809 = vunpack.c.l.b16 %v153
  %v810 = vunpack.c.l.b16 %v154
  %v811 = vunpack.c.l.b16 %v155
  %v812 = vunpack.c.l.b16 %v156
  %v813 = vunpack.c.l.b16 %v157
  %v814 = vunpack.c.l.b16 %v158
  %v815 = vunpack.c.l.b16 %v159
  %v816 = vunpack.c.l.b16 %v160
  %v817 = vunpack.c.l.b16 %v161
  %v818 = vunpack.c.l.b16 %v162
  %v819 = vunpack.c.l.b16 %v163
  %v820 = vunpack.c.l.b16 %v164
  %v821 = vunpack.c.l.b16 %v165
  %v822 = vunpack.c.l.b16 %v166
  %v823 = vunpack.c.l.b16 %v167
  %v824 = vunpack.c.l.b16 %v168
  %v825 = vunpack.c.l.b16 %v169
  %v826 = vunpack.c.l.b16 %v170
  %v827 = vunpack.c.l.b16 %v171
  %v828 = vunpack.c.l.b16 %v172
  %v829 = vunpack.c.l.b16 %v173
  %v830 = vunpack.c.l.b16 %v174
  %v831 = vunpack.c.l.b16 %v175
  %v832 = vunpack.c.l.b16 %v176
  %v833 = vunpack.c.l.b16 %v177
  %v834 = vunpack.c.l.b16 %v178
  %v835 = vunpack.c.l.b16 %v179
  %v836 = vunpack.c.l.b16 %v180
  %v837 = vunpack.c.l.b16 %v181
  %v838 = vunpack.c.l.b16 %v182
  %v839 = vunpack.c.l.b16 %v183
  %v840 = vunpack.c.l.b16 %v184
  %v841 = vunpack.c.l.b16 %v185
  %v842 = vunpack.c.l.b16 %v186
  %v843 = vunpack.c.l.b16 %v187
  %v844 = vunpack.c.l.b16 %v188
  %v845 = vunpack.c.l.b16 %v189
  %v846 = vunpack.c.l.b16 %v190
  %v847 = vunpack.c.l.b16 %v191
  %v848 = vunpack.c.l.b16 %v192
  %v849 = vunpack.c.l.b16 %v193
  %v850 = vunpack.c.l.b16 %v194
  %v851 = vunpack.c.l.b16 %v195
  %v852 = vunpack.c.l.b16 %v196
  %v853 = vunpack.c.l.b16 %v197
  %v854 = vunpack.c.l.b16 %v198
  %v855 = vunpack.c.l.b16 %v199
  %v856 = vunpack.c.l.b16 %v200
  %v857 = vunpack.c.l.b16 %v201
  %v858 = vunpack.c.l.b16 %v202
  %v859 = vunpack.c.l.b16 %v203
  %v860 = vunpack.c.l.b16 %v204
  %v861 = vunpack.c.l.b16 %v205
  %v862 = vunpack.c.l.b16 %v206
  %v863 = vunpack.c.l.b16 %v207
  %v864 = vunpack.c.l.b16 %v208
  %v865 = vunpack.c.l.b16 %v209
  %v866 = vunpack.c.l.b16 %v210
  %v867 = vunpack.c.l.b16 %v211
  %v868 = vunpack.c.l.b16 %v212
  %v869 = vunpack.c.l.b16 %v213
  %v870 = vunpack.c.l.b16 %v214
  %v871 = vunpack.c.l.b16 %v215
  %v872 = vunpack.c.l.b16 %v216
  %v873 = vunpack.c.l.b16 %v217
  %v874 = vunpack.c.l.b16 %v218
  %v875 = vunpack.c.l.b16 %v219
  %v876 = vunpack.c.l.b16 %v220
  %v877 = vunpack.c.l.b16 %v221
  %v878 = vunpack.c.l.b16 %v222
  %v879 = vunpack.c.l.b16 %v223
  %v880 = vunpack.c.l.b16 %v224
  %v881 = vunpack.c.l.b16 %v225
  %v882 = vunpack.c.l.b16 %v226
  %v883 = vunpack.c.l.b16 %v227
  %v884 = vunpack.c.l.b16 %v228
  %v885 = vunpack.c.l.b16 %v229
  %v886 = vunpack.c.l.b16 %v230
  %v887 = vunpack.c.l.b16 %v231
  %v888 = vunpack.c.l.b16 %v232
  %v889 = vunpack.c.l.b16 %v233
  %v890 = vunpack.c.l.b16 %v234
  %v891 = vunpack.c.l.b16 %v235
  %v892 = vunpack.c.l.b16 %v236
  %v893 = vunpack.c.l.b16 %v237
  %v894 = vunpack.c.l.b16 %v238
  %v895 = vunpack.c.l.b16 %v239
  %v896 = vunpack.c.l.b16 %v240
  %v897 = vunpack.c.l.b16 %v241
  %v898 = vunpack.c.l.b16 %v242
  %v899 = vunpack.c.l.b16 %v243
  %v900 = vpack.c.b16 %v757, %v756
  %v901 = vpack.c.b16 %v759, %v758
  %v902 = vpack.c.b16 %v761, %v760
  %v903 = vpack.c.b16 %v763, %v762
  %v904 = vpack.c.b16 %v765, %v764
  %v905 = vpack.c.b16 %v767, %v766
  %v906 = vpack.c.b16 %v769, %v768
  %v907 = vpack.c.b16 %v771, %v770
  %v908 = vpack.c.b16 %v773, %v772
  %v909 = vpack.c.b16 %v775, %v774
  %v910 = vpack.c.b16 %v777, %v776
  %v911 = vpack.c.b16 %v779, %v778
  %v912 = vpack.c.b16 %v781, %v780
  %v913 = vpack.c.b16 %v783, %v782
  %v914 = vpack.c.b16 %v785, %v784
  %v915 = vpack.c.b16 %v787, %v786
  %v916 = vpack.c.b16 %v789, %v788
  %v917 = vpack.c.b16 %v791, %v790
  %v918 = vpack.c.b16 %v793, %v792
  %v919 = vpack.c.b16 %v795, %v794
  %v920 = vpack.c.b16 %v797, %v796
  %v921 = vpack.c.b16 %v799, %v798
  %v922 = vpack.c.b16 %v801, %v800
  %v923 = vpack.c.b16 %v803, %v802
  %v924 = vpack.c.b16 %v805, %v804
  %v925 = vpack.c.b16 %v807, %v806
  %v926 = vpack.c.b16 %v809, %v808
  %v927 = vpack.c.b16 %v811, %v810
  %v928 = vpack.c.b16 %v813, %v812
  %v929 = vpack.c.b16 %v815, %v814
  %v930 = vpack.c.b16 %v817, %v816
  %v931 = vpack.c.b16 %v819, %v818
  %v932 = vpack.c.b16 %v821, %v820
  %v933 = vpack.c.b16 %v823, %v822
  %v934 = vpack.c.b16 %v825, %v824
  %v935 = vpack.c.b16 %v827, %v826
  %v936 = vpack.c.b16 %v829, %v828
  %v937 = vpack.c.b16 %v831, %v830
  %v938 = vpack.c.b16 %v833, %v832
  %v939 = vpack.c.b16 %v835, %v834
  %v940 = vpack.c.b16 %v837, %v836
  %v941 = vpack.c.b16 %v839, %v838
  %v942 = vpack.c.b16 %v841, %v840
  %v943 = vpack.c.b16 %v843, %v842
  %v944 = vpack.c.b16 %v845, %v844
  %v945 = vpack.c.b16 %v847, %v846
  %v946 = vpack.c.b16 %v849, %v848
  %v947 = vpack.c.b16 %v851, %v850
  %v948 = vpack.c.b16 %v853, %v852
  %v949 = vpack.c.b16 %v855, %v854
  %v950 = vpack.c.b16 %v857, %v856
  %v951 = vpack.c.b16 %v859, %v858
  %v952 = vpack.c.b16 %v861, %v860
  %v953 = vpack.c.b16 %v863, %v862
  %v954 = vpack.c.b16 %v865, %v864
  %v955 = vpack.c.b16 %v867, %v866
  %v956 = vpack.c.b16 %v869, %v868
  %v957 = vpack.c.b16 %v871, %v870
  %v958 = vpack.c.b16 %v873, %v872
  %v959 = vpack.c.b16 %v875, %v874
  %v960 = vpack.c.b16 %v877, %v876
  %v961 = vpack.c.b16 %v879, %v878
  %v962 = vpack.c.b16 %v881, %v880
  %v963 = vpack.c.b16 %v883, %v882
  %v964 = vpack.c.b16 %v885, %v884
  %v965 = vpack.c.b16 %v887, %v886
  %v966 = vpack.c.b16 %v889, %v888
  %v967 = vpack.c.b16 %v891, %v890
  %v968 = vpack.c.b16 %v893, %v892
  %v969 = vpack.c.b16 %v895, %v894
  %v970 = vpack.c.b16 %v897, %v896
  %v971 = vpack.c.b16 %v899, %v898
  %1044 = vmatprep.subr.bf16.mxu0 0
  %1045 = vmatpush1.bf16.msra.mxu0 %v900
  %1046 = vmatprep.subr.bf16.mxu0 0
  %1047 = vmatpush1.bf16.msra.mxu0 %v901
  %1048 = vmatprep.subr.bf16.mxu0 0
  %1049 = vmatpush1.bf16.msra.mxu0 %v902
  %1050 = vmatprep.subr.bf16.mxu0 0
  %1051 = vmatpush1.bf16.msra.mxu0 %v903
  %1052 = vmatprep.subr.bf16.mxu0 0
  %1053 = vmatpush1.bf16.msra.mxu0 %v904
  %1054 = vmatprep.subr.bf16.mxu0 0
  %1055 = vmatpush1.bf16.msra.mxu0 %v905
  %1056 = vmatprep.subr.bf16.mxu0 0
  %1057 = vmatpush1.bf16.msra.mxu0 %v906
  %1058 = vmatprep.subr.bf16.mxu0 0
  %1059 = vmatpush1.bf16.msra.mxu0 %v907
  %1060 = vmatprep.subr.bf16.mxu0 0
  %1061 = vmatpush1.bf16.msra.mxu0 %v908
  %1062 = vmatprep.subr.bf16.mxu0 0
  %1063 = vmatpush1.bf16.msra.mxu0 %v909
  %1064 = vmatprep.subr.bf16.mxu0 0
  %1065 = vmatpush1.bf16.msra.mxu0 %v910
  %1066 = vmatprep.subr.bf16.mxu0 0
  %1067 = vmatpush1.bf16.msra.mxu0 %v911
  %1068 = vmatprep.subr.bf16.mxu0 0
  %1069 = vmatpush1.bf16.msra.mxu0 %v912
  %1070 = vmatprep.subr.bf16.mxu0 0
  %1071 = vmatpush1.bf16.msra.mxu0 %v913
  %1072 = vmatprep.subr.bf16.mxu0 0
  %1073 = vmatpush1.bf16.msra.mxu0 %v914
  %1074 = vmatprep.subr.bf16.mxu0 0
  %1075 = vmatpush1.bf16.msra.mxu0 %v915
  %1076 = vmatprep.mubr.bf16.mxu0 %v469
  %1077 = vmatmul.mubr.bf16.gmra.mrb[0].mxu0 %v468
  %v1078 = vpop.f32.mrb[0].mxu0
  %v1079 = vadd.f32 0.0, %v1078
  %v1080 = vpop.f32.mrb[0].mxu0
  %v1081 = vpop.f32.mrb[0].mxu0
  %v1082 = vadd.f32 0.0, %v1081
  %v1083 = vpop.f32.mrb[0].mxu0
  %1084 = vmatprep.mubr.bf16.mxu0 %v478
  %1085 = vmatmul.mubr.bf16.gmra.mrb[0].mxu0 %v477
  %v1086 = vpop.f32.mrb[0].mxu0
  %v1087 = vadd.f32 0.0, %v1086
  %v1088 = vpop.f32.mrb[0].mxu0
  %v1089 = vpop.f32.mrb[0].mxu0
  %v1090 = vadd.f32 0.0, %v1089
  %v1091 = vpop.f32.mrb[0].mxu0
  %1092 = vmatprep.mubr.bf16.mxu0 %v487
  %1093 = vmatmul.mubr.bf16.gmra.mrb[0].mxu0 %v486
  %v1094 = vpop.f32.mrb[0].mxu0
  %v1095 = vadd.f32 0.0, %v1094
  %v1096 = vpop.f32.mrb[0].mxu0
  %v1097 = vpop.f32.mrb[0].mxu0
  %v1098 = vadd.f32 0.0, %v1097
  %v1099 = vpop.f32.mrb[0].mxu0
  %1100 = vmatprep.mubr.bf16.mxu0 %v496
  %1101 = vmatmul.mubr.bf16.gmra.mrb[0].mxu0 %v495
  %v1102 = vpop.f32.mrb[0].mxu0
  %v1103 = vadd.f32 0.0, %v1102
  %v1104 = vpop.f32.mrb[0].mxu0
  %v1105 = vpop.f32.mrb[0].mxu0
  %v1106 = vadd.f32 0.0, %v1105
  %v1107 = vpop.f32.mrb[0].mxu0
  %1108 = vmatprep.mubr.bf16.mxu0 %v505
  %1109 = vmatmul.mubr.bf16.gmra.mrb[0].mxu0 %v504
  %v1110 = vpop.f32.mrb[0].mxu0
  %v1111 = vadd.f32 0.0, %v1110
  %v1112 = vpop.f32.mrb[0].mxu0
  %v1113 = vpop.f32.mrb[0].mxu0
  %v1114 = vadd.f32 0.0, %v1113
  %v1115 = vpop.f32.mrb[0].mxu0
  %1116 = vmatprep.mubr.bf16.mxu0 %v514
  %1117 = vmatmul.mubr.bf16.gmra.mrb[0].mxu0 %v513
  %v1118 = vpop.f32.mrb[0].mxu0
  %v1119 = vadd.f32 0.0, %v1118
  %v1120 = vpop.f32.mrb[0].mxu0
  %v1121 = vpop.f32.mrb[0].mxu0
  %v1122 = vadd.f32 0.0, %v1121
  %v1123 = vpop.f32.mrb[0].mxu0
  %1124 = vmatprep.mubr.bf16.mxu0 %v523
  %1125 = vmatmul.mubr.bf16.gmra.mrb[0].mxu0 %v522
  %v1126 = vpop.f32.mrb[0].mxu0
  %v1127 = vadd.f32 0.0, %v1126
  %v1128 = vpop.f32.mrb[0].mxu0
  %v1129 = vpop.f32.mrb[0].mxu0
  %v1130 = vadd.f32 0.0, %v1129
  %v1131 = vpop.f32.mrb[0].mxu0
  %1132 = vmatprep.mubr.bf16.mxu0 %v532
  %1133 = vmatmul.mubr.bf16.gmra.mrb[0].mxu0 %v531
  %v1134 = vpop.f32.mrb[0].mxu0
  %v1135 = vadd.f32 0.0, %v1134
  %v1136 = vpop.f32.mrb[0].mxu0
  %v1137 = vpop.f32.mrb[0].mxu0
  %v1138 = vadd.f32 0.0, %v1137
  %v1139 = vpop.f32.mrb[0].mxu0
  %1140 = vdwg.mxu0
  %1141 = vmatprep.subr.bf16.mxu0 0
  %1142 = vmatpush1.bf16.msra.mxu0 %v916
  %1143 = vmatprep.subr.bf16.mxu0 0
  %1144 = vmatpush1.bf16.msra.mxu0 %v917
  %1145 = vmatprep.subr.bf16.mxu0 0
  %1146 = vmatpush1.bf16.msra.mxu0 %v918
  %1147 = vmatprep.subr.bf16.mxu0 0
  %1148 = vmatpush1.bf16.msra.mxu0 %v919
  %1149 = vmatprep.subr.bf16.mxu0 0
  %1150 = vmatpush1.bf16.msra.mxu0 %v920
  %1151 = vmatprep.subr.bf16.mxu0 0
  %1152 = vmatpush1.bf16.msra.mxu0 %v921
  %1153 = vmatprep.subr.bf16.mxu0 0
  %1154 = vmatpush1.bf16.msra.mxu0 %v922
  %1155 = vmatprep.subr.bf16.mxu0 0
  %1156 = vmatpush1.bf16.msra.mxu0 %v923
  %1157 = vmatprep.subr.bf16.mxu0 0
  %1158 = vmatpush1.bf16.msra.mxu0 %v924
  %1159 = vmatprep.subr.bf16.mxu0 0
  %1160 = vmatpush1.bf16.msra.mxu0 %v925
  %1161 = vmatprep.subr.bf16.mxu0 0
  %1162 = vmatpush1.bf16.msra.mxu0 %v926
  %1163 = vmatprep.subr.bf16.mxu0 0
  %1164 = vmatpush1.bf16.msra.mxu0 %v927
  %1165 = vmatprep.subr.bf16.mxu0 0
  %1166 = vmatpush1.bf16.msra.mxu0 %v928
  %1167 = vmatprep.subr.bf16.mxu0 0
  %1168 = vmatpush1.bf16.msra.mxu0 %v929
  %1169 = vmatprep.subr.bf16.mxu0 0
  %1170 = vmatpush1.bf16.msra.mxu0 %v930
  %1171 = vmatprep.subr.bf16.mxu0 0
  %1172 = vmatpush1.bf16.msra.mxu0 %v931
  %1173 = vmatprep.mubr.bf16.mxu0 %v471
  %1174 = vmatmul.mubr.bf16.gmra.mrb[0].mxu0 %v470
  %v1175 = vpop.f32.mrb[0].mxu0
  %v1176 = vadd.f32 %v1079, %v1175
  %v1177 = vpop.f32.mrb[0].mxu0
  %v1178 = vpop.f32.mrb[0].mxu0
  %v1179 = vadd.f32 %v1082, %v1178
  %v1180 = vpop.f32.mrb[0].mxu0
  %1181 = vmatprep.mubr.bf16.mxu0 %v480
  %1182 = vmatmul.mubr.bf16.gmra.mrb[0].mxu0 %v479
  %v1183 = vpop.f32.mrb[0].mxu0
  %v1184 = vadd.f32 %v1087, %v1183
  %v1185 = vpop.f32.mrb[0].mxu0
  %v1186 = vpop.f32.mrb[0].mxu0
  %v1187 = vadd.f32 %v1090, %v1186
  %v1188 = vpop.f32.mrb[0].mxu0
  %1189 = vmatprep.mubr.bf16.mxu0 %v489
  %1190 = vmatmul.mubr.bf16.gmra.mrb[0].mxu0 %v488
  %v1191 = vpop.f32.mrb[0].mxu0
  %v1192 = vadd.f32 %v1095, %v1191
  %v1193 = vpop.f32.mrb[0].mxu0
  %v1194 = vpop.f32.mrb[0].mxu0
  %v1195 = vadd.f32 %v1098, %v1194
  %v1196 = vpop.f32.mrb[0].mxu0
  %1197 = vmatprep.mubr.bf16.mxu0 %v498
  %1198 = vmatmul.mubr.bf16.gmra.mrb[0].mxu0 %v497
  %v1199 = vpop.f32.mrb[0].mxu0
  %v1200 = vadd.f32 %v1103, %v1199
  %v1201 = vpop.f32.mrb[0].mxu0
  %v1202 = vpop.f32.mrb[0].mxu0
  %v1203 = vadd.f32 %v1106, %v1202
  %v1204 = vpop.f32.mrb[0].mxu0
  %1205 = vmatprep.mubr.bf16.mxu0 %v507
  %1206 = vmatmul.mubr.bf16.gmra.mrb[0].mxu0 %v506
  %v1207 = vpop.f32.mrb[0].mxu0
  %v1208 = vadd.f32 %v1111, %v1207
  %v1209 = vpop.f32.mrb[0].mxu0
  %v1210 = vpop.f32.mrb[0].mxu0
  %v1211 = vadd.f32 %v1114, %v1210
  %v1212 = vpop.f32.mrb[0].mxu0
  %1213 = vmatprep.mubr.bf16.mxu0 %v516
  %1214 = vmatmul.mubr.bf16.gmra.mrb[0].mxu0 %v515
  %v1215 = vpop.f32.mrb[0].mxu0
  %v1216 = vadd.f32 %v1119, %v1215
  %v1217 = vpop.f32.mrb[0].mxu0
  %v1218 = vpop.f32.mrb[0].mxu0
  %v1219 = vadd.f32 %v1122, %v1218
  %v1220 = vpop.f32.mrb[0].mxu0
  %1221 = vmatprep.mubr.bf16.mxu0 %v525
  %1222 = vmatmul.mubr.bf16.gmra.mrb[0].mxu0 %v524
  %v1223 = vpop.f32.mrb[0].mxu0
  %v1224 = vadd.f32 %v1127, %v1223
  %v1225 = vpop.f32.mrb[0].mxu0
  %v1226 = vpop.f32.mrb[0].mxu0
  %v1227 = vadd.f32 %v1130, %v1226
  %v1228 = vpop.f32.mrb[0].mxu0
  %1229 = vmatprep.mubr.bf16.mxu0 %v534
  %1230 = vmatmul.mubr.bf16.gmra.mrb[0].mxu0 %v533
  %v1231 = vpop.f32.mrb[0].mxu0
  %v1232 = vadd.f32 %v1135, %v1231
  %v1233 = vpop.f32.mrb[0].mxu0
  %v1234 = vpop.f32.mrb[0].mxu0
  %v1235 = vadd.f32 %v1138, %v1234
  %v1236 = vpop.f32.mrb[0].mxu0
  %1237 = vdwg.mxu0
  %1238 = vmatprep.subr.bf16.mxu0 0
  %1239 = vmatpush1.bf16.msra.mxu0 %v932
  %1240 = vmatprep.subr.bf16.mxu0 0
  %1241 = vmatpush1.bf16.msra.mxu0 %v933
  %1242 = vmatprep.subr.bf16.mxu0 0
  %1243 = vmatpush1.bf16.msra.mxu0 %v934
  %1244 = vmatprep.subr.bf16.mxu0 0
  %1245 = vmatpush1.bf16.msra.mxu0 %v935
  %1246 = vmatprep.subr.bf16.mxu0 0
  %1247 = vmatpush1.bf16.msra.mxu0 %v936
  %1248 = vmatprep.subr.bf16.mxu0 0
  %1249 = vmatpush1.bf16.msra.mxu0 %v937
  %1250 = vmatprep.subr.bf16.mxu0 0
  %1251 = vmatpush1.bf16.msra.mxu0 %v938
  %1252 = vmatprep.subr.bf16.mxu0 0
  %1253 = vmatpush1.bf16.msra.mxu0 %v939
  %1254 = vmatprep.subr.bf16.mxu0 0
  %1255 = vmatpush1.bf16.msra.mxu0 %v940
  %1256 = vmatprep.subr.bf16.mxu0 0
  %1257 = vmatpush1.bf16.msra.mxu0 %v941
  %1258 = vmatprep.subr.bf16.mxu0 0
  %1259 = vmatpush1.bf16.msra.mxu0 %v942
  %1260 = vmatprep.subr.bf16.mxu0 0
  %1261 = vmatpush1.bf16.msra.mxu0 %v943
  %1262 = vmatprep.subr.bf16.mxu0 0
  %1263 = vmatpush1.bf16.msra.mxu0 %v944
  %1264 = vmatprep.subr.bf16.mxu0 0
  %1265 = vmatpush1.bf16.msra.mxu0 %v945
  %1266 = vmatprep.subr.bf16.mxu0 0
  %1267 = vmatpush1.bf16.msra.mxu0 %v946
  %1268 = vmatprep.subr.bf16.mxu0 0
  %1269 = vmatpush1.bf16.msra.mxu0 %v947
  %1270 = vmatprep.mubr.bf16.mxu0 %v473
  %1271 = vmatmul.mubr.bf16.gmra.mrb[0].mxu0 %v472
  %v1272 = vpop.f32.mrb[0].mxu0
  %v1273 = vadd.f32 %v1176, %v1272
  %v1274 = vpop.f32.mrb[0].mxu0
  %v1275 = vpop.f32.mrb[0].mxu0
  %v1276 = vadd.f32 %v1179, %v1275
  %v1277 = vpop.f32.mrb[0].mxu0
  %1278 = vmatprep.mubr.bf16.mxu0 %v482
  %1279 = vmatmul.mubr.bf16.gmra.mrb[0].mxu0 %v481
  %v1280 = vpop.f32.mrb[0].mxu0
  %v1281 = vadd.f32 %v1184, %v1280
  %v1282 = vpop.f32.mrb[0].mxu0
  %v1283 = vpop.f32.mrb[0].mxu0
  %v1284 = vadd.f32 %v1187, %v1283
  %v1285 = vpop.f32.mrb[0].mxu0
  %1286 = vmatprep.mubr.bf16.mxu0 %v491
  %1287 = vmatmul.mubr.bf16.gmra.mrb[0].mxu0 %v490
  %v1288 = vpop.f32.mrb[0].mxu0
  %v1289 = vadd.f32 %v1192, %v1288
  %v1290 = vpop.f32.mrb[0].mxu0
  %v1291 = vpop.f32.mrb[0].mxu0
  %v1292 = vadd.f32 %v1195, %v1291
  %v1293 = vpop.f32.mrb[0].mxu0
  %1294 = vmatprep.mubr.bf16.mxu0 %v500
  %1295 = vmatmul.mubr.bf16.gmra.mrb[0].mxu0 %v499
  %v1296 = vpop.f32.mrb[0].mxu0
  %v1297 = vadd.f32 %v1200, %v1296
  %v1298 = vpop.f32.mrb[0].mxu0
  %v1299 = vpop.f32.mrb[0].mxu0
  %v1300 = vadd.f32 %v1203, %v1299
  %v1301 = vpop.f32.mrb[0].mxu0
  %1302 = vmatprep.mubr.bf16.mxu0 %v509
  %1303 = vmatmul.mubr.bf16.gmra.mrb[0].mxu0 %v508
  %v1304 = vpop.f32.mrb[0].mxu0
  %v1305 = vadd.f32 %v1208, %v1304
  %v1306 = vpop.f32.mrb[0].mxu0
  %v1307 = vpop.f32.mrb[0].mxu0
  %v1308 = vadd.f32 %v1211, %v1307
  %v1309 = vpop.f32.mrb[0].mxu0
  %1310 = vmatprep.mubr.bf16.mxu0 %v518
  %1311 = vmatmul.mubr.bf16.gmra.mrb[0].mxu0 %v517
  %v1312 = vpop.f32.mrb[0].mxu0
  %v1313 = vadd.f32 %v1216, %v1312
  %v1314 = vpop.f32.mrb[0].mxu0
  %v1315 = vpop.f32.mrb[0].mxu0
  %v1316 = vadd.f32 %v1219, %v1315
  %v1317 = vpop.f32.mrb[0].mxu0
  %1318 = vmatprep.mubr.bf16.mxu0 %v527
  %1319 = vmatmul.mubr.bf16.gmra.mrb[0].mxu0 %v526
  %v1320 = vpop.f32.mrb[0].mxu0
  %v1321 = vadd.f32 %v1224, %v1320
  %v1322 = vpop.f32.mrb[0].mxu0
  %v1323 = vpop.f32.mrb[0].mxu0
  %v1324 = vadd.f32 %v1227, %v1323
  %v1325 = vpop.f32.mrb[0].mxu0
  %1326 = vmatprep.mubr.bf16.mxu0 %v536
  %1327 = vmatmul.mubr.bf16.gmra.mrb[0].mxu0 %v535
  %v1328 = vpop.f32.mrb[0].mxu0
  %v1329 = vadd.f32 %v1232, %v1328
  %v1330 = vpop.f32.mrb[0].mxu0
  %v1331 = vpop.f32.mrb[0].mxu0
  %v1332 = vadd.f32 %v1235, %v1331
  %v1333 = vpop.f32.mrb[0].mxu0
  %1334 = vdwg.mxu0
  %1335 = vmatprep.subr.bf16.mxu0 0
  %1336 = vmatpush1.bf16.msra.mxu0 %v948
  %1337 = vmatprep.subr.bf16.mxu0 0
  %1338 = vmatpush1.bf16.msra.mxu0 %v949
  %1339 = vmatprep.subr.bf16.mxu0 0
  %1340 = vmatpush1.bf16.msra.mxu0 %v950
  %1341 = vmatprep.subr.bf16.mxu0 0
  %1342 = vmatpush1.bf16.msra.mxu0 %v951
  %1343 = vmatprep.subr.bf16.mxu0 0
  %1344 = vmatpush1.bf16.msra.mxu0 %v952
  %1345 = vmatprep.subr.bf16.mxu0 0
  %1346 = vmatpush1.bf16.msra.mxu0 %v953
  %1347 = vmatprep.subr.bf16.mxu0 0
  %1348 = vmatpush1.bf16.msra.mxu0 %v954
  %1349 = vmatprep.subr.bf16.mxu0 0
  %1350 = vmatpush1.bf16.msra.mxu0 %v955
  %1351 = vmatprep.subr.bf16.mxu0 0
  %1352 = vmatpush1.bf16.msra.mxu0 %v956
  %1353 = vmatprep.subr.bf16.mxu0 0
  %1354 = vmatpush1.bf16.msra.mxu0 %v957
  %1355 = vmatprep.subr.bf16.mxu0 0
  %1356 = vmatpush1.bf16.msra.mxu0 %v958
  %1357 = vmatprep.subr.bf16.mxu0 0
  %1358 = vmatpush1.bf16.msra.mxu0 %v959
  %1359 = vmatprep.subr.bf16.mxu0 0
  %1360 = vmatpush1.bf16.msra.mxu0 %v960
  %1361 = vmatprep.subr.bf16.mxu0 0
  %1362 = vmatpush1.bf16.msra.mxu0 %v961
  %1363 = vmatprep.subr.bf16.mxu0 0
  %1364 = vmatpush1.bf16.msra.mxu0 %v962
  %1365 = vmatprep.subr.bf16.mxu0 0
  %1366 = vmatpush1.bf16.msra.mxu0 %v963
  %1367 = vmatprep.mubr.bf16.mxu0 %v475
  %1368 = vmatmul.mubr.bf16.gmra.mrb[0].mxu0 %v474
  %v1369 = vpop.f32.mrb[0].mxu0
  %v1370 = vadd.f32 %v1273, %v1369
  %v1371 = vpop.f32.mrb[0].mxu0
  %v1372 = vpop.f32.mrb[0].mxu0
  %v1373 = vadd.f32 %v1276, %v1372
  %v1374 = vpop.f32.mrb[0].mxu0
  %1375 = vmatprep.mubr.bf16.mxu0 %v484
  %1376 = vmatmul.mubr.bf16.gmra.mrb[0].mxu0 %v483
  %v1377 = vpop.f32.mrb[0].mxu0
  %v1378 = vadd.f32 %v1281, %v1377
  %v1379 = vpop.f32.mrb[0].mxu0
  %v1380 = vpop.f32.mrb[0].mxu0
  %v1381 = vadd.f32 %v1284, %v1380
  %v1382 = vpop.f32.mrb[0].mxu0
  %1383 = vmatprep.mubr.bf16.mxu0 %v493
  %1384 = vmatmul.mubr.bf16.gmra.mrb[0].mxu0 %v492
  %v1385 = vpop.f32.mrb[0].mxu0
  %v1386 = vadd.f32 %v1289, %v1385
  %v1387 = vpop.f32.mrb[0].mxu0
  %v1388 = vpop.f32.mrb[0].mxu0
  %v1389 = vadd.f32 %v1292, %v1388
  %v1390 = vpop.f32.mrb[0].mxu0
  %1391 = vmatprep.mubr.bf16.mxu0 %v502
  %1392 = vmatmul.mubr.bf16.gmra.mrb[0].mxu0 %v501
  %v1393 = vpop.f32.mrb[0].mxu0
  %v1394 = vadd.f32 %v1297, %v1393
  %v1395 = vpop.f32.mrb[0].mxu0
  %v1396 = vpop.f32.mrb[0].mxu0
  %v1397 = vadd.f32 %v1300, %v1396
  %v1398 = vpop.f32.mrb[0].mxu0
  %1399 = vmatprep.mubr.bf16.mxu0 %v511
  %1400 = vmatmul.mubr.bf16.gmra.mrb[0].mxu0 %v510
  %v1401 = vpop.f32.mrb[0].mxu0
  %v1402 = vadd.f32 %v1305, %v1401
  %v1403 = vpop.f32.mrb[0].mxu0
  %v1404 = vpop.f32.mrb[0].mxu0
  %v1405 = vadd.f32 %v1308, %v1404
  %v1406 = vpop.f32.mrb[0].mxu0
  %1407 = vmatprep.mubr.bf16.mxu0 %v520
  %1408 = vmatmul.mubr.bf16.gmra.mrb[0].mxu0 %v519
  %v1409 = vpop.f32.mrb[0].mxu0
  %v1410 = vadd.f32 %v1313, %v1409
  %v1411 = vpop.f32.mrb[0].mxu0
  %v1412 = vpop.f32.mrb[0].mxu0
  %v1413 = vadd.f32 %v1316, %v1412
  %v1414 = vpop.f32.mrb[0].mxu0
  %1415 = vmatprep.mubr.bf16.mxu0 %v529
  %1416 = vmatmul.mubr.bf16.gmra.mrb[0].mxu0 %v528
  %v1417 = vpop.f32.mrb[0].mxu0
  %v1418 = vadd.f32 %v1321, %v1417
  %v1419 = vpop.f32.mrb[0].mxu0
  %v1420 = vpop.f32.mrb[0].mxu0
  %v1421 = vadd.f32 %v1324, %v1420
  %v1422 = vpop.f32.mrb[0].mxu0
  %1423 = vmatprep.mubr.bf16.mxu0 %v538
  %1424 = vmatmul.mubr.bf16.gmra.mrb[0].mxu0 %v537
  %v1425 = vpop.f32.mrb[0].mxu0
  %v1426 = vadd.f32 %v1329, %v1425
  %v1427 = vpop.f32.mrb[0].mxu0
  %v1428 = vpop.f32.mrb[0].mxu0
  %v1429 = vadd.f32 %v1332, %v1428
  %v1430 = vpop.f32.mrb[0].mxu0
  %1431 = vdwg.mxu0
  %1432 = vmatprep.subr.bf16.mxu0 0
  %1433 = vmatpush1.bf16.msra.mxu0 %v964
  %1434 = vmatprep.subr.bf16.mxu0 0
  %1435 = vmatpush1.bf16.msra.mxu0 %v965
  %1436 = vmatprep.subr.bf16.mxu0 0
  %1437 = vmatpush1.bf16.msra.mxu0 %v966
  %1438 = vmatprep.subr.bf16.mxu0 0
  %1439 = vmatpush1.bf16.msra.mxu0 %v967
  %1440 = vmatprep.subr.bf16.mxu0 0
  %1441 = vmatpush1.bf16.msra.mxu0 %v968
  %1442 = vmatprep.subr.bf16.mxu0 0
  %1443 = vmatpush1.bf16.msra.mxu0 %v969
  %1444 = vmatprep.subr.bf16.mxu0 0
  %1445 = vmatpush1.bf16.msra.mxu0 %v970
  %1446 = vmatprep.subr.bf16.mxu0 0
  %1447 = vmatpush1.bf16.msra.mxu0 %v971
  %1448 = vmatprep.subr.bf16.mxu0 0
  %1449 = vmatpush1.bf16.msra.mxu0 0
  %1450 = vmatprep.subr.bf16.mxu0 0
  %1451 = vmatpush1.bf16.msra.mxu0 0
  %1452 = vmatprep.subr.bf16.mxu0 0
  %1453 = vmatpush1.bf16.msra.mxu0 0
  %1454 = vmatprep.subr.bf16.mxu0 0
  %1455 = vmatpush1.bf16.msra.mxu0 0
  %1456 = vmatprep.subr.bf16.mxu0 0
  %1457 = vmatpush1.bf16.msra.mxu0 0
  %1458 = vmatprep.subr.bf16.mxu0 0
  %1459 = vmatpush1.bf16.msra.mxu0 0
  %1460 = vmatprep.subr.bf16.mxu0 0
  %1461 = vmatpush1.bf16.msra.mxu0 0
  %1462 = vmatprep.subr.bf16.mxu0 0
  %1463 = vmatpush1.bf16.msra.mxu0 0
  %1464 = vmatprep.mubr.bf16.mxu0 0
  %1465 = vmatmul.mubr.bf16.gmra.mrb[0].mxu0 %v476
  %v1466 = vpop.f32.mrb[0].mxu0
  %v1467 = vadd.f32 %v1370, %v1466
  %v1468 = vpop.f32.mrb[0].mxu0
  %v1469 = vpop.f32.mrb[0].mxu0
  %v1470 = vadd.f32 %v1373, %v1469
  %v1471 = vpop.f32.mrb[0].mxu0
  %1472 = vmatprep.mubr.bf16.mxu0 0
  %1473 = vmatmul.mubr.bf16.gmra.mrb[0].mxu0 %v485
  %v1474 = vpop.f32.mrb[0].mxu0
  %v1475 = vadd.f32 %v1378, %v1474
  %v1476 = vpop.f32.mrb[0].mxu0
  %v1477 = vpop.f32.mrb[0].mxu0
  %v1478 = vadd.f32 %v1381, %v1477
  %v1479 = vpop.f32.mrb[0].mxu0
  %1480 = vmatprep.mubr.bf16.mxu0 0
  %1481 = vmatmul.mubr.bf16.gmra.mrb[0].mxu0 %v494
  %v1482 = vpop.f32.mrb[0].mxu0
  %v1483 = vadd.f32 %v1386, %v1482
  %v1484 = vpop.f32.mrb[0].mxu0
  %v1485 = vpop.f32.mrb[0].mxu0
  %v1486 = vadd.f32 %v1389, %v1485
  %v1487 = vpop.f32.mrb[0].mxu0
  %1488 = vmatprep.mubr.bf16.mxu0 0
  %1489 = vmatmul.mubr.bf16.gmra.mrb[0].mxu0 %v503
  %v1490 = vpop.f32.mrb[0].mxu0
  %v1491 = vadd.f32 %v1394, %v1490
  %v1492 = vpop.f32.mrb[0].mxu0
  %v1493 = vpop.f32.mrb[0].mxu0
  %v1494 = vadd.f32 %v1397, %v1493
  %v1495 = vpop.f32.mrb[0].mxu0
  %1496 = vmatprep.mubr.bf16.mxu0 0
  %1497 = vmatmul.mubr.bf16.gmra.mrb[0].mxu0 %v512
  %v1498 = vpop.f32.mrb[0].mxu0
  %v1499 = vadd.f32 %v1402, %v1498
  %v1500 = vpop.f32.mrb[0].mxu0
  %v1501 = vpop.f32.mrb[0].mxu0
  %v1502 = vadd.f32 %v1405, %v1501
  %v1503 = vpop.f32.mrb[0].mxu0
  %1504 = vmatprep.mubr.bf16.mxu0 0
  %1505 = vmatmul.mubr.bf16.gmra.mrb[0].mxu0 %v521
  %v1506 = vpop.f32.mrb[0].mxu0
  %v1507 = vadd.f32 %v1410, %v1506
  %v1508 = vpop.f32.mrb[0].mxu0
  %v1509 = vpop.f32.mrb[0].mxu0
  %v1510 = vadd.f32 %v1413, %v1509
  %v1511 = vpop.f32.mrb[0].mxu0
  %1512 = vmatprep.mubr.bf16.mxu0 0
  %1513 = vmatmul.mubr.bf16.gmra.mrb[0].mxu0 %v530
  %v1514 = vpop.f32.mrb[0].mxu0
  %v1515 = vadd.f32 %v1418, %v1514
  %v1516 = vpop.f32.mrb[0].mxu0
  %v1517 = vpop.f32.mrb[0].mxu0
  %v1518 = vadd.f32 %v1421, %v1517
  %v1519 = vpop.f32.mrb[0].mxu0
  %1520 = vmatprep.mubr.bf16.mxu0 0
  %1521 = vmatmul.mubr.bf16.gmra.mrb[0].mxu0 %v539
  %v1522 = vpop.f32.mrb[0].mxu0
  %v1523 = vadd.f32 %v1426, %v1522
  %v1524 = vpop.f32.mrb[0].mxu0
  %v1525 = vpop.f32.mrb[0].mxu0
  %v1526 = vadd.f32 %v1429, %v1525
  %v1527 = vpop.f32.mrb[0].mxu0
  %1528 = vdwg.mxu0
  %v1529 = vpack.c.bf16 %v1470, %v1467
  %v1530 = vpack.c.bf16 %v1478, %v1475
  %v1531 = vpack.c.bf16 %v1486, %v1483
  %v1532 = vpack.c.bf16 %v1494, %v1491
  %v1533 = vpack.c.bf16 %v1502, %v1499
  %v1534 = vpack.c.bf16 %v1510, %v1507
  %v1535 = vpack.c.bf16 %v1518, %v1515
  %v1536 = vpack.c.bf16 %v1526, %v1523
  %v1545 = vunpack.c.l.b16 %v1529
  %v1546 = vunpack.c.h.b16 %v1529
  %v1547 = vunpack.c.l.b16 %v1530
  %v1548 = vunpack.c.h.b16 %v1530
  %v1549 = vunpack.c.l.b16 %v1531
  %v1550 = vunpack.c.h.b16 %v1531
  %v1551 = vunpack.c.l.b16 %v1532
  %v1552 = vunpack.c.h.b16 %v1532
  %v1553 = vunpack.c.l.b16 %v1533
  %v1554 = vunpack.c.h.b16 %v1533
  %v1555 = vunpack.c.l.b16 %v1534
  %v1556 = vunpack.c.h.b16 %v1534
  %v1557 = vunpack.c.l.b16 %v1535
  %v1558 = vunpack.c.h.b16 %v1535
  %v1559 = vunpack.c.l.b16 %v1536
  %v1560 = vunpack.c.h.b16 %v1536
  %v1561 = vpack.c.b16 %v1545, %v1545
  %v1562 = vpack.c.b16 %v1546, %v1546
  %v1563 = vpack.c.b16 %v1547, %v1547
  %v1564 = vpack.c.b16 %v1548, %v1548
  %v1565 = vpack.c.b16 %v1549, %v1549
  %v1566 = vpack.c.b16 %v1550, %v1550
  %v1567 = vpack.c.b16 %v1551, %v1551
  %v1568 = vpack.c.b16 %v1552, %v1552
  %v1569 = vpack.c.b16 %v1553, %v1553
  %v1570 = vpack.c.b16 %v1554, %v1554
  %v1571 = vpack.c.b16 %v1555, %v1555
  %v1572 = vpack.c.b16 %v1556, %v1556
  %v1573 = vpack.c.b16 %v1557, %v1557
  %v1574 = vpack.c.b16 %v1558, %v1558
  %v1575 = vpack.c.b16 %v1559, %v1559
  %v1576 = vpack.c.b16 %v1560, %v1560
  %1593 = vst [vmem:[%s2] sm:$0xf] %v1561
  %1594 = vst [vmem:[%s2 + $0x4] sm:$0xf] %v1562
  %1595 = vst [vmem:[%s2 + $0x8] sm:$0xf] %v1563
  %1596 = vst [vmem:[%s2 + $0xc] sm:$0xf] %v1564
  %1597 = vst [vmem:[%s2 + $0x10] sm:$0xf] %v1565
  %1598 = vst [vmem:[%s2 + $0x14] sm:$0xf] %v1566
  %1599 = vst [vmem:[%s2 + $0x18] sm:$0xf] %v1567
  %1600 = vst [vmem:[%s2 + $0x1c] sm:$0xf] %v1568
  %1601 = vst [vmem:[%s2 + $0x20] sm:$0xf] %v1569
  %1602 = vst [vmem:[%s2 + $0x24] sm:$0xf] %v1570
  %1603 = vst [vmem:[%s2 + $0x28] sm:$0xf] %v1571
  %1604 = vst [vmem:[%s2 + $0x2c] sm:$0xf] %v1572
  %1605 = vst [vmem:[%s2 + $0x30] sm:$0xf] %v1573
  %1606 = vst [vmem:[%s2 + $0x34] sm:$0xf] %v1574
  %1607 = vst [vmem:[%s2 + $0x38] sm:$0xf] %v1575
  %1608 = vst [vmem:[%s2 + $0x3c] sm:$0xf] %v1576
  %v1609 = vld [vmem:[#allocation2] sm:$0xff]
  %v1610 = vadd.f32 %v1467, %v1470
  %v1611 = vadd.f32 %v1610, %v1475
  %v1612 = vadd.f32 %v1611, %v1478
  %v1613 = vadd.f32 %v1612, %v1483
  %v1614 = vadd.f32 %v1613, %v1486
  %v1615 = vadd.f32 %v1614, %v1491
  %v1616 = vadd.f32 %v1615, %v1494
  %v1617 = vadd.f32 %v1616, %v1499
  %v1618 = vadd.f32 %v1617, %v1502
  %v1619 = vadd.f32 %v1618, %v1507
  %v1620 = vadd.f32 %v1619, %v1510
  %v1621 = vadd.f32 %v1620, %v1515
  %v1622 = vadd.f32 %v1621, %v1518
  %v1623 = vadd.f32 %v1622, %v1523
  %v1624 = vadd.f32 %v1623, %v1526
  %v1625 = vadd.f32 %v1609, %v1624
  %1626 = vst [vmem:[#allocation2] sm:$0xff] %v1625
  %v1627 = vld [vmem:[#allocation2 + $0x8] sm:$0xff]
  %v1628 = vmul.f32 %v1467, %v1467
  %v1629 = vmul.f32 %v1470, %v1470
  %v1630 = vmul.f32 %v1475, %v1475
  %v1631 = vmul.f32 %v1478, %v1478
  %v1632 = vmul.f32 %v1483, %v1483
  %v1633 = vmul.f32 %v1486, %v1486
  %v1634 = vmul.f32 %v1491, %v1491
  %v1635 = vmul.f32 %v1494, %v1494
  %v1636 = vmul.f32 %v1499, %v1499
  %v1637 = vmul.f32 %v1502, %v1502
  %v1638 = vmul.f32 %v1507, %v1507
  %v1639 = vmul.f32 %v1510, %v1510
  %v1640 = vmul.f32 %v1515, %v1515
  %v1641 = vmul.f32 %v1518, %v1518
  %v1642 = vmul.f32 %v1523, %v1523
  %v1643 = vmul.f32 %v1526, %v1526
  %v1644 = vadd.f32 %v1628, %v1629
  %v1645 = vadd.f32 %v1644, %v1630
  %v1646 = vadd.f32 %v1645, %v1631
  %v1647 = vadd.f32 %v1646, %v1632
  %v1648 = vadd.f32 %v1647, %v1633
  %v1649 = vadd.f32 %v1648, %v1634
  %v1650 = vadd.f32 %v1649, %v1635
  %v1651 = vadd.f32 %v1650, %v1636
  %v1652 = vadd.f32 %v1651, %v1637
  %v1653 = vadd.f32 %v1652, %v1638
  %v1654 = vadd.f32 %v1653, %v1639
  %v1655 = vadd.f32 %v1654, %v1640
  %v1656 = vadd.f32 %v1655, %v1641
  %v1657 = vadd.f32 %v1656, %v1642
  %v1658 = vadd.f32 %v1657, %v1643
  %v1659 = vadd.f32 %v1627, %v1658
  %1660 = vst [vmem:[#allocation2 + $0x8] sm:$0xff] %v1659
  // Predicated region
  $region14: #{bottleneck_forward.8} parent=0 // pred_check
    %p1661 = pneg %p14
  $region15: #{bottleneck_forward.8} parent=0 // pred_check_branch
    %1663 = sbr.rel (%p1661) target = $region17
  $region16: #{bottleneck_forward.8} parent=0 // pred_region
    %v1664 = vld [vmem:[#allocation2] sm:$0xff]
    %v1665 = vld [vmem:[#allocation2 + $0x8] sm:$0xff]
    %1666 = vst [vmem:[%s3] sm:$0xff] %v1664
    %1667 = vst [vmem:[%s3 + $0x8] sm:$0xff] %v1665
  $region17: #{bottleneck_forward.8} parent=0 // pred_fallthru
    _
  // Predicated region
  $region18: #{bottleneck_forward.8} parent=0 // pred_check
    _
  $region19: #{bottleneck_forward.8} parent=0 // pred_check_branch
    %1669 = sbr.rel (0) target = $region21
  $region20: #{bottleneck_forward.8} parent=0 // pred_region
    _
  $region21: #{bottleneck_forward.8} parent=0 // pred_fallthru
    _
  // Predicated region
  $region22: #{bottleneck_forward.8} parent=0 // pred_check
    _
  $region23: #{bottleneck_forward.8} parent=0 // pred_check_branch
    %1671 = sbr.rel (0) target = $region25
  $region24: #{bottleneck_forward.8} parent=0 // pred_region
    _
  $region25: #{bottleneck_forward.8} parent=0 // pred_fallthru
    _
  // Predicated region
  $region26: #{bottleneck_forward.8} parent=0 // pred_check
    _
  $region27: #{bottleneck_forward.8} parent=0 // pred_check_branch
    %1673 = sbr.rel (0) target = $region29
  $region28: #{bottleneck_forward.8} parent=0 // pred_region
    _
  $region29: #{bottleneck_forward.8} parent=0 // pred_fallthru
    _
  // Predicated region
  $region30: #{bottleneck_forward.8} parent=0 // pred_check
    _
  $region31: #{bottleneck_forward.8} parent=0 // pred_check_branch
    %1675 = sbr.rel (0) target = $region33
  $region32: #{bottleneck_forward.8} parent=0 // pred_region
    _
  $region33: #{bottleneck_forward.8} parent=0 // pred_fallthru
    _

// kernel: bottleneck_forward.10
$region0: #{bottleneck_forward.10}
  #allocation0 [shape = 'u32[]', space=smem, size = 0x4, offset = 0x4, fixed_abs, tag = 'smem constant byte address 0x4 - core index']
  #allocation1 [shape = 'u32[144,128]{1,0:T(1,128)}', space=vmem, size = 0x12000, scoped, tag = 'internal scratch']
  #allocation2 [shape = 'f32[16,128]{1,0:T(8,128)}', space=vmem, size = 0x2000, scoped, tag = 'scratch operand']
  %s0 = inlined_call_operand.vmem [shape: bf16[128,128], index: 0, kind: input, shape index: {}]
  %s1 = inlined_call_operand.vmem [shape: bf16[128,128], index: 1, kind: input, shape index: {}]
  %s2 = inlined_call_operand.vmem [shape: bf16[128,128], index: 2, kind: output, shape index: {0}]
  %s3 = inlined_call_operand.vmem [shape: f32[16,128], index: 3, kind: output, shape index: {1}]
  %4 = xla_tuple %s2, %s3
  %s5 = sld [smem:[#allocation0]]
  $region34: #{bottleneck_forward.10} parent=0
    _
  %s7 = ssub.s32 1, %s5
  %s8 = scalar_select 0, %s7, %s5
  // Predicated region
  $region2: #{bottleneck_forward.10} parent=0 // pred_check
    _
  $region3: #{bottleneck_forward.10} parent=0 // pred_check_branch
    %10 = sbr.rel (0) target = $region5
  $region4: #{bottleneck_forward.10} parent=0 // pred_region
    _
  $region5: #{bottleneck_forward.10} parent=0 // pred_fallthru
    _
  // Predicated region
  $region6: #{bottleneck_forward.10} parent=0 // pred_check
    _
  $region7: #{bottleneck_forward.10} parent=0 // pred_check_branch
    %12 = sbr.rel (0) target = $region9
  $region8: #{bottleneck_forward.10} parent=0 // pred_region
    _
  $region9: #{bottleneck_forward.10} parent=0 // pred_fallthru
    _
  %p14 = scmp.eq.s32.totalorder 0, 0
  // Predicated region
  $region10: #{bottleneck_forward.10} parent=0 // pred_check
    %p15 = pneg %p14
  $region11: #{bottleneck_forward.10} parent=0 // pred_check_branch
    %17 = sbr.rel (%p15) target = $region13
  $region12: #{bottleneck_forward.10} parent=0 // pred_region
    %18 = vst [vmem:[#allocation2] sm:$0xff] 0.0
    %19 = vst [vmem:[#allocation2 + $0x8] sm:$0xff] 0.0
  $region13: #{bottleneck_forward.10} parent=0 // pred_fallthru
    _
  %v20 = vld [vmem:[%s0] sm:$0xf]
  %v21 = vld [vmem:[%s0 + $0x4] sm:$0xf]
  %v22 = vld [vmem:[%s0 + $0x8] sm:$0xf]
  %v23 = vld [vmem:[%s0 + $0xc] sm:$0xf]
  %v24 = vld [vmem:[%s0 + $0x10] sm:$0xf]
  %v25 = vld [vmem:[%s0 + $0x14] sm:$0xf]
  %v26 = vld [vmem:[%s0 + $0x18] sm:$0xf]
  %v27 = vld [vmem:[%s0 + $0x1c] sm:$0xf]
  %v28 = vld [vmem:[%s0 + $0x20] sm:$0xf]
  %v29 = vld [vmem:[%s0 + $0x24] sm:$0xf]
  %v30 = vld [vmem:[%s0 + $0x28] sm:$0xf]
  %v31 = vld [vmem:[%s0 + $0x2c] sm:$0xf]
  %v32 = vld [vmem:[%s0 + $0x30] sm:$0xf]
  %v33 = vld [vmem:[%s0 + $0x34] sm:$0xf]
  %v34 = vld [vmem:[%s0 + $0x38] sm:$0xf]
  %v35 = vld [vmem:[%s0 + $0x3c] sm:$0xf]
  %v36 = vld [vmem:[%s1] sm:$0xf]
  %v37 = vld [vmem:[%s1 + $0x4] sm:$0xf]
  %v38 = vld [vmem:[%s1 + $0x8] sm:$0xf]
  %v39 = vld [vmem:[%s1 + $0xc] sm:$0xf]
  %v40 = vld [vmem:[%s1 + $0x10] sm:$0xf]
  %v41 = vld [vmem:[%s1 + $0x14] sm:$0xf]
  %v42 = vld [vmem:[%s1 + $0x18] sm:$0xf]
  %v43 = vld [vmem:[%s1 + $0x1c] sm:$0xf]
  %v44 = vld [vmem:[%s1 + $0x20] sm:$0xf]
  %v45 = vld [vmem:[%s1 + $0x24] sm:$0xf]
  %v46 = vld [vmem:[%s1 + $0x28] sm:$0xf]
  %v47 = vld [vmem:[%s1 + $0x2c] sm:$0xf]
  %v48 = vld [vmem:[%s1 + $0x30] sm:$0xf]
  %v49 = vld [vmem:[%s1 + $0x34] sm:$0xf]
  %v50 = vld [vmem:[%s1 + $0x38] sm:$0xf]
  %v51 = vld [vmem:[%s1 + $0x3c] sm:$0xf]
  %v68 = vunpack.c.l.b16 %v20
  %v69 = vunpack.c.l.b16 %v21
  %v70 = vunpack.c.l.b16 %v22
  %v71 = vunpack.c.l.b16 %v23
  %v72 = vunpack.c.l.b16 %v24
  %v73 = vunpack.c.l.b16 %v25
  %v74 = vunpack.c.l.b16 %v26
  %v75 = vunpack.c.l.b16 %v27
  %v76 = vunpack.c.l.b16 %v28
  %v77 = vunpack.c.l.b16 %v29
  %v78 = vunpack.c.l.b16 %v30
  %v79 = vunpack.c.l.b16 %v31
  %v80 = vunpack.c.l.b16 %v32
  %v81 = vunpack.c.l.b16 %v33
  %v82 = vunpack.c.l.b16 %v34
  %v83 = vunpack.c.l.b16 %v35
  %v84 = vpack.c.b16 %v69, %v68
  %v85 = vpack.c.b16 %v71, %v70
  %v86 = vpack.c.b16 %v73, %v72
  %v87 = vpack.c.b16 %v75, %v74
  %v88 = vpack.c.b16 %v77, %v76
  %v89 = vpack.c.b16 %v79, %v78
  %v90 = vpack.c.b16 %v81, %v80
  %v91 = vpack.c.b16 %v83, %v82
  %v116 = vunpack.c.l.b16 %v36
  %v117 = vunpack.c.l.b16 %v37
  %v118 = vunpack.c.l.b16 %v38
  %v119 = vunpack.c.l.b16 %v39
  %v120 = vunpack.c.l.b16 %v40
  %v121 = vunpack.c.l.b16 %v41
  %v122 = vunpack.c.l.b16 %v42
  %v123 = vunpack.c.l.b16 %v43
  %v124 = vunpack.c.l.b16 %v44
  %v125 = vunpack.c.l.b16 %v45
  %v126 = vunpack.c.l.b16 %v46
  %v127 = vunpack.c.l.b16 %v47
  %v128 = vunpack.c.l.b16 %v48
  %v129 = vunpack.c.l.b16 %v49
  %v130 = vunpack.c.l.b16 %v50
  %v131 = vunpack.c.l.b16 %v51
  %v132 = vpack.c.b16 %v117, %v116
  %v133 = vpack.c.b16 %v119, %v118
  %v134 = vpack.c.b16 %v121, %v120
  %v135 = vpack.c.b16 %v123, %v122
  %v136 = vpack.c.b16 %v125, %v124
  %v137 = vpack.c.b16 %v127, %v126
  %v138 = vpack.c.b16 %v129, %v128
  %v139 = vpack.c.b16 %v131, %v130
  %148 = vmatprep.subr.bf16.mxu0 0
  %149 = vmatpush1.bf16.msra.mxu0 %v132
  %150 = vmatprep.subr.bf16.mxu0 0
  %151 = vmatpush1.bf16.msra.mxu0 %v133
  %152 = vmatprep.subr.bf16.mxu0 0
  %153 = vmatpush1.bf16.msra.mxu0 %v134
  %154 = vmatprep.subr.bf16.mxu0 0
  %155 = vmatpush1.bf16.msra.mxu0 %v135
  %156 = vmatprep.subr.bf16.mxu0 0
  %157 = vmatpush1.bf16.msra.mxu0 %v136
  %158 = vmatprep.subr.bf16.mxu0 0
  %159 = vmatpush1.bf16.msra.mxu0 %v137
  %160 = vmatprep.subr.bf16.mxu0 0
  %161 = vmatpush1.bf16.msra.mxu0 %v138
  %162 = vmatprep.subr.bf16.mxu0 0
  %163 = vmatpush1.bf16.msra.mxu0 %v139
  %164 = vmatprep.subr.bf16.mxu0 0
  %165 = vmatpush1.bf16.msra.mxu0 0
  %166 = vmatprep.subr.bf16.mxu0 0
  %167 = vmatpush1.bf16.msra.mxu0 0
  %168 = vmatprep.subr.bf16.mxu0 0
  %169 = vmatpush1.bf16.msra.mxu0 0
  %170 = vmatprep.subr.bf16.mxu0 0
  %171 = vmatpush1.bf16.msra.mxu0 0
  %172 = vmatprep.subr.bf16.mxu0 0
  %173 = vmatpush1.bf16.msra.mxu0 0
  %174 = vmatprep.subr.bf16.mxu0 0
  %175 = vmatpush1.bf16.msra.mxu0 0
  %176 = vmatprep.subr.bf16.mxu0 0
  %177 = vmatpush1.bf16.msra.mxu0 0
  %178 = vmatprep.subr.bf16.mxu0 0
  %179 = vmatpush1.bf16.msra.mxu0 0
  %180 = vmatprep.mubr.bf16.mxu0 0
  %181 = vmatmul.mubr.bf16.gmra.mrb[0].mxu0 %v84
  %v182 = vpop.f32.mrb[0].mxu0
  %v183 = vadd.f32 0.0, %v182
  %v184 = vpop.f32.mrb[0].mxu0
  %v185 = vpop.f32.mrb[0].mxu0
  %v186 = vadd.f32 0.0, %v185
  %v187 = vpop.f32.mrb[0].mxu0
  %188 = vmatprep.mubr.bf16.mxu0 0
  %189 = vmatmul.mubr.bf16.gmra.mrb[0].mxu0 %v85
  %v190 = vpop.f32.mrb[0].mxu0
  %v191 = vadd.f32 0.0, %v190
  %v192 = vpop.f32.mrb[0].mxu0
  %v193 = vpop.f32.mrb[0].mxu0
  %v194 = vadd.f32 0.0, %v193
  %v195 = vpop.f32.mrb[0].mxu0
  %196 = vmatprep.mubr.bf16.mxu0 0
  %197 = vmatmul.mubr.bf16.gmra.mrb[0].mxu0 %v86
  %v198 = vpop.f32.mrb[0].mxu0
  %v199 = vadd.f32 0.0, %v198
  %v200 = vpop.f32.mrb[0].mxu0
  %v201 = vpop.f32.mrb[0].mxu0
  %v202 = vadd.f32 0.0, %v201
  %v203 = vpop.f32.mrb[0].mxu0
  %204 = vmatprep.mubr.bf16.mxu0 0
  %205 = vmatmul.mubr.bf16.gmra.mrb[0].mxu0 %v87
  %v206 = vpop.f32.mrb[0].mxu0
  %v207 = vadd.f32 0.0, %v206
  %v208 = vpop.f32.mrb[0].mxu0
  %v209 = vpop.f32.mrb[0].mxu0
  %v210 = vadd.f32 0.0, %v209
  %v211 = vpop.f32.mrb[0].mxu0
  %212 = vmatprep.mubr.bf16.mxu0 0
  %213 = vmatmul.mubr.bf16.gmra.mrb[0].mxu0 %v88
  %v214 = vpop.f32.mrb[0].mxu0
  %v215 = vadd.f32 0.0, %v214
  %v216 = vpop.f32.mrb[0].mxu0
  %v217 = vpop.f32.mrb[0].mxu0
  %v218 = vadd.f32 0.0, %v217
  %v219 = vpop.f32.mrb[0].mxu0
  %220 = vmatprep.mubr.bf16.mxu0 0
  %221 = vmatmul.mubr.bf16.gmra.mrb[0].mxu0 %v89
  %v222 = vpop.f32.mrb[0].mxu0
  %v223 = vadd.f32 0.0, %v222
  %v224 = vpop.f32.mrb[0].mxu0
  %v225 = vpop.f32.mrb[0].mxu0
  %v226 = vadd.f32 0.0, %v225
  %v227 = vpop.f32.mrb[0].mxu0
  %228 = vmatprep.mubr.bf16.mxu0 0
  %229 = vmatmul.mubr.bf16.gmra.mrb[0].mxu0 %v90
  %v230 = vpop.f32.mrb[0].mxu0
  %v231 = vadd.f32 0.0, %v230
  %v232 = vpop.f32.mrb[0].mxu0
  %v233 = vpop.f32.mrb[0].mxu0
  %v234 = vadd.f32 0.0, %v233
  %v235 = vpop.f32.mrb[0].mxu0
  %236 = vmatprep.mubr.bf16.mxu0 0
  %237 = vmatmul.mubr.bf16.gmra.mrb[0].mxu0 %v91
  %v238 = vpop.f32.mrb[0].mxu0
  %v239 = vadd.f32 0.0, %v238
  %v240 = vpop.f32.mrb[0].mxu0
  %v241 = vpop.f32.mrb[0].mxu0
  %v242 = vadd.f32 0.0, %v241
  %v243 = vpop.f32.mrb[0].mxu0
  %244 = vdwg.mxu0
  %v245 = vpack.c.bf16 %v186, %v183
  %v246 = vpack.c.bf16 %v194, %v191
  %v247 = vpack.c.bf16 %v202, %v199
  %v248 = vpack.c.bf16 %v210, %v207
  %v249 = vpack.c.bf16 %v218, %v215
  %v250 = vpack.c.bf16 %v226, %v223
  %v251 = vpack.c.bf16 %v234, %v231
  %v252 = vpack.c.bf16 %v242, %v239
  %v261 = vunpack.c.l.b16 %v245
  %v262 = vunpack.c.h.b16 %v245
  %v263 = vunpack.c.l.b16 %v246
  %v264 = vunpack.c.h.b16 %v246
  %v265 = vunpack.c.l.b16 %v247
  %v266 = vunpack.c.h.b16 %v247
  %v267 = vunpack.c.l.b16 %v248
  %v268 = vunpack.c.h.b16 %v248
  %v269 = vunpack.c.l.b16 %v249
  %v270 = vunpack.c.h.b16 %v249
  %v271 = vunpack.c.l.b16 %v250
  %v272 = vunpack.c.h.b16 %v250
  %v273 = vunpack.c.l.b16 %v251
  %v274 = vunpack.c.h.b16 %v251
  %v275 = vunpack.c.l.b16 %v252
  %v276 = vunpack.c.h.b16 %v252
  %v277 = vpack.c.b16 %v261, %v261
  %v278 = vpack.c.b16 %v262, %v262
  %v279 = vpack.c.b16 %v263, %v263
  %v280 = vpack.c.b16 %v264, %v264
  %v281 = vpack.c.b16 %v265, %v265
  %v282 = vpack.c.b16 %v266, %v266
  %v283 = vpack.c.b16 %v267, %v267
  %v284 = vpack.c.b16 %v268, %v268
  %v285 = vpack.c.b16 %v269, %v269
  %v286 = vpack.c.b16 %v270, %v270
  %v287 = vpack.c.b16 %v271, %v271
  %v288 = vpack.c.b16 %v272, %v272
  %v289 = vpack.c.b16 %v273, %v273
  %v290 = vpack.c.b16 %v274, %v274
  %v291 = vpack.c.b16 %v275, %v275
  %v292 = vpack.c.b16 %v276, %v276
  %309 = vst [vmem:[%s2] sm:$0xf] %v277
  %310 = vst [vmem:[%s2 + $0x4] sm:$0xf] %v278
  %311 = vst [vmem:[%s2 + $0x8] sm:$0xf] %v279
  %312 = vst [vmem:[%s2 + $0xc] sm:$0xf] %v280
  %313 = vst [vmem:[%s2 + $0x10] sm:$0xf] %v281
  %314 = vst [vmem:[%s2 + $0x14] sm:$0xf] %v282
  %315 = vst [vmem:[%s2 + $0x18] sm:$0xf] %v283
  %316 = vst [vmem:[%s2 + $0x1c] sm:$0xf] %v284
  %317 = vst [vmem:[%s2 + $0x20] sm:$0xf] %v285
  %318 = vst [vmem:[%s2 + $0x24] sm:$0xf] %v286
  %319 = vst [vmem:[%s2 + $0x28] sm:$0xf] %v287
  %320 = vst [vmem:[%s2 + $0x2c] sm:$0xf] %v288
  %321 = vst [vmem:[%s2 + $0x30] sm:$0xf] %v289
  %322 = vst [vmem:[%s2 + $0x34] sm:$0xf] %v290
  %323 = vst [vmem:[%s2 + $0x38] sm:$0xf] %v291
  %324 = vst [vmem:[%s2 + $0x3c] sm:$0xf] %v292
  %v325 = vld [vmem:[#allocation2] sm:$0xff]
  %v326 = vadd.f32 %v183, %v186
  %v327 = vadd.f32 %v326, %v191
  %v328 = vadd.f32 %v327, %v194
  %v329 = vadd.f32 %v328, %v199
  %v330 = vadd.f32 %v329, %v202
  %v331 = vadd.f32 %v330, %v207
  %v332 = vadd.f32 %v331, %v210
  %v333 = vadd.f32 %v332, %v215
  %v334 = vadd.f32 %v333, %v218
  %v335 = vadd.f32 %v334, %v223
  %v336 = vadd.f32 %v335, %v226
  %v337 = vadd.f32 %v336, %v231
  %v338 = vadd.f32 %v337, %v234
  %v339 = vadd.f32 %v338, %v239
  %v340 = vadd.f32 %v339, %v242
  %v341 = vadd.f32 %v325, %v340
  %342 = vst [vmem:[#allocation2] sm:$0xff] %v341
  %v343 = vld [vmem:[#allocation2 + $0x8] sm:$0xff]
  %v344 = vmul.f32 %v183, %v183
  %v345 = vmul.f32 %v186, %v186
  %v346 = vmul.f32 %v191, %v191
  %v347 = vmul.f32 %v194, %v194
  %v348 = vmul.f32 %v199, %v199
  %v349 = vmul.f32 %v202, %v202
  %v350 = vmul.f32 %v207, %v207
  %v351 = vmul.f32 %v210, %v210
  %v352 = vmul.f32 %v215, %v215
  %v353 = vmul.f32 %v218, %v218
  %v354 = vmul.f32 %v223, %v223
  %v355 = vmul.f32 %v226, %v226
  %v356 = vmul.f32 %v231, %v231
  %v357 = vmul.f32 %v234, %v234
  %v358 = vmul.f32 %v239, %v239
  %v359 = vmul.f32 %v242, %v242
  %v360 = vadd.f32 %v344, %v345
  %v361 = vadd.f32 %v360, %v346
  %v362 = vadd.f32 %v361, %v347
  %v363 = vadd.f32 %v362, %v348
  %v364 = vadd.f32 %v363, %v349
  %v365 = vadd.f32 %v364, %v350
  %v366 = vadd.f32 %v365, %v351
  %v367 = vadd.f32 %v366, %v352
  %v368 = vadd.f32 %v367, %v353
  %v369 = vadd.f32 %v368, %v354
  %v370 = vadd.f32 %v369, %v355
  %v371 = vadd.f32 %v370, %v356
  %v372 = vadd.f32 %v371, %v357
  %v373 = vadd.f32 %v372, %v358
  %v374 = vadd.f32 %v373, %v359
  %v375 = vadd.f32 %v343, %v374
  %376 = vst [vmem:[#allocation2 + $0x8] sm:$0xff] %v375
  // Predicated region
  $region14: #{bottleneck_forward.10} parent=0 // pred_check
    %p377 = pneg %p14
  $region15: #{bottleneck_forward.10} parent=0 // pred_check_branch
    %379 = sbr.rel (%p377) target = $region17
  $region16: #{bottleneck_forward.10} parent=0 // pred_region
    %v380 = vld [vmem:[#allocation2] sm:$0xff]
    %v381 = vld [vmem:[#allocation2 + $0x8] sm:$0xff]
    %382 = vst [vmem:[%s3] sm:$0xff] %v380
    %383 = vst [vmem:[%s3 + $0x8] sm:$0xff] %v381
  $region17: #{bottleneck_forward.10} parent=0 // pred_fallthru
    _
  // Predicated region
  $region18: #{bottleneck_forward.10} parent=0 // pred_check
    _
  $region19: #{bottleneck_forward.10} parent=0 // pred_check_branch
    %385 = sbr.rel (0) target = $region21
  $region20: #{bottleneck_forward.10} parent=0 // pred_region
    _
  $region21: #{bottleneck_forward.10} parent=0 // pred_fallthru
    _
  // Predicated region
  $region22: #{bottleneck_forward.10} parent=0 // pred_check
    _
  $region23: #{bottleneck_forward.10} parent=0 // pred_check_branch
    %387 = sbr.rel (0) target = $region25
  $region24: #{bottleneck_forward.10} parent=0 // pred_region
    _
  $region25: #{bottleneck_forward.10} parent=0 // pred_fallthru
    _
  // Predicated region
  $region26: #{bottleneck_forward.10} parent=0 // pred_check
    _
  $region27: #{bottleneck_forward.10} parent=0 // pred_check_branch
    %389 = sbr.rel (0) target = $region29
  $region28: #{bottleneck_forward.10} parent=0 // pred_region
    _
  $region29: #{bottleneck_forward.10} parent=0 // pred_fallthru
    _
  // Predicated region
  $region30: #{bottleneck_forward.10} parent=0 // pred_check
    _
  $region31: #{bottleneck_forward.10} parent=0 // pred_check_branch
    %391 = sbr.rel (0) target = $region33
  $region32: #{bottleneck_forward.10} parent=0 // pred_region
    _
  $region33: #{bottleneck_forward.10} parent=0 // pred_fallthru
    _

// kernel: bottleneck_forward.11
$region0: #{bottleneck_forward.11}
  #allocation0 [shape = 'u32[]', space=smem, size = 0x4, offset = 0x4, fixed_abs, tag = 'smem constant byte address 0x4 - core index']
  #allocation1 [shape = 'u32[144,128]{1,0:T(1,128)}', space=vmem, size = 0x12000, scoped, tag = 'internal scratch']
  %s0 = inlined_call_operand.vmem [shape: bf16[128,128], index: 0, kind: input, shape index: {}]
  %s1 = inlined_call_operand.vmem [shape: f32[16,128], index: 1, kind: input, shape index: {}]
  %s2 = inlined_call_operand.vmem [shape: f32[1,128], index: 2, kind: input, shape index: {}]
  %s3 = inlined_call_operand.vmem [shape: f32[1,128], index: 3, kind: input, shape index: {}]
  %s4 = inlined_call_operand.vmem [shape: bf16[128,128], index: 4, kind: input, shape index: {}]
  %s5 = inlined_call_operand.vmem [shape: f32[16,128], index: 5, kind: input, shape index: {}]
  %s6 = inlined_call_operand.vmem [shape: f32[1,128], index: 6, kind: input, shape index: {}]
  %s7 = inlined_call_operand.vmem [shape: f32[1,128], index: 7, kind: input, shape index: {}]
  %s8 = inlined_call_operand.hbm [shape: f32[128,128], index: 8, kind: output, shape index: {}]
  %s9 = sld [smem:[#allocation0]]
  $region42: #{bottleneck_forward.11} parent=0
    _
  %s11 = ssub.s32 1, %s9
  %s12 = scalar_select 0, %s11, %s9
  $region1: #{bottleneck_forward.11} parent=0
    #allocation2 [shape = 'u8[65536]{0}', space=vmem, size = 0x10000, scoped, tag = 'output window, operand 0, single buffered']
    #allocation3 [shape = 's32[1]{0}', space=sflag, size = 0x4, scoped, tag = 'scoped memory for bottleneck_forward.11']
    %13 = vsyncpa [#allocation3], 0
    // Predicated region
    $region2: #{bottleneck_forward.11} parent=1 // pred_check
      _
    $region3: #{bottleneck_forward.11} parent=1 // pred_check_branch
      %15 = sbr.rel (0) target = $region5
    $region4: #{bottleneck_forward.11} parent=1 // pred_region
      _
    $region5: #{bottleneck_forward.11} parent=1 // pred_fallthru
      _
    // Predicated region
    $region6: #{bottleneck_forward.11} parent=1 // pred_check
      _
    $region7: #{bottleneck_forward.11} parent=1 // pred_check_branch
      %17 = sbr.rel (0) target = $region9
    $region8: #{bottleneck_forward.11} parent=1 // pred_region
      _
    $region9: #{bottleneck_forward.11} parent=1 // pred_fallthru
      _
    // Predicated region
    $region10: #{bottleneck_forward.11} parent=1 // pred_check
      _
    $region11: #{bottleneck_forward.11} parent=1 // pred_check_branch
      %19 = sbr.rel (0) target = $region13
    $region12: #{bottleneck_forward.11} parent=1 // pred_region
      _
    $region13: #{bottleneck_forward.11} parent=1 // pred_fallthru
      _
    // Predicated region
    $region14: #{bottleneck_forward.11} parent=1 // pred_check
      _
    $region15: #{bottleneck_forward.11} parent=1 // pred_check_branch
      %21 = sbr.rel (0) target = $region17
    $region16: #{bottleneck_forward.11} parent=1 // pred_region
      _
    $region17: #{bottleneck_forward.11} parent=1 // pred_fallthru
      _
    // Predicated region
    $region18: #{bottleneck_forward.11} parent=1 // pred_check
      _
    $region19: #{bottleneck_forward.11} parent=1 // pred_check_branch
      %23 = sbr.rel (0) target = $region21
    $region20: #{bottleneck_forward.11} parent=1 // pred_region
      _
    $region21: #{bottleneck_forward.11} parent=1 // pred_fallthru
      _
    // Predicated region
    $region22: #{bottleneck_forward.11} parent=1 // pred_check
      _
    $region23: #{bottleneck_forward.11} parent=1 // pred_check_branch
      %25 = sbr.rel (0) target = $region25
    $region24: #{bottleneck_forward.11} parent=1 // pred_region
      _
    $region25: #{bottleneck_forward.11} parent=1 // pred_fallthru
      _
    // Predicated region
    $region26: #{bottleneck_forward.11} parent=1 // pred_check
      _
    $region27: #{bottleneck_forward.11} parent=1 // pred_check_branch
      %27 = sbr.rel (0) target = $region29
    $region28: #{bottleneck_forward.11} parent=1 // pred_region
      _
    $region29: #{bottleneck_forward.11} parent=1 // pred_fallthru
      _
    // Predicated region
    $region30: #{bottleneck_forward.11} parent=1 // pred_check
      _
    $region31: #{bottleneck_forward.11} parent=1 // pred_check_branch
      %29 = sbr.rel (0) target = $region33
    $region32: #{bottleneck_forward.11} parent=1 // pred_region
      _
    $region33: #{bottleneck_forward.11} parent=1 // pred_fallthru
      _
    %v30 = vld [vmem:[%s1] sm:$0xff]
    %v31 = vld [vmem:[%s1 + $0x8] sm:$0xff]
    %v32 = vld [vmem:[%s2] sm:$0x1]
    %v33 = vld [vmem:[%s3] sm:$0x1]
    %v34 = vrot.slane %v30, 4
    %v35 = vadd.f32 %v30, %v34
    %v36 = vrot.slane %v35, 2
    %v37 = vadd.f32 %v35, %v36
    %v38 = vrot.slane %v37, 1
    %v39 = vadd.f32 %v37, %v38
    %v40 = vrot.slane %v31, 4
    %v41 = vadd.f32 %v31, %v40
    %v42 = vrot.slane %v41, 2
    %v43 = vadd.f32 %v41, %v42
    %v44 = vrot.slane %v43, 1
    %v45 = vadd.f32 %v43, %v44
    %v46 = vmul.f32 %v39, 0.0078125
    %v47 = vmul.f32 %v45, 0.0078125
    %v48 = vmul.f32 %v46, %v46
    %v49 = vsub.f32 %v47, %v48
    %v50 = vmax.f32 %v49, 0.0
    %v51 = vadd.f32 %v50, 1e-05
    %v52 = vrsqrt.pop %v51
    %v53 = vmul.f32 %v32, %v52
    %v54 = vmul.f32 %v46, %v53
    %v55 = vsub.f32 %v33, %v54
    %v56 = vld [vmem:[%s5] sm:$0xff]
    %v57 = vld [vmem:[%s5 + $0x8] sm:$0xff]
    %v58 = vld [vmem:[%s6] sm:$0x1]
    %v59 = vld [vmem:[%s7] sm:$0x1]
    %v60 = vrot.slane %v56, 4
    %v61 = vadd.f32 %v56, %v60
    %v62 = vrot.slane %v61, 2
    %v63 = vadd.f32 %v61, %v62
    %v64 = vrot.slane %v63, 1
    %v65 = vadd.f32 %v63, %v64
    %v66 = vrot.slane %v57, 4
    %v67 = vadd.f32 %v57, %v66
    %v68 = vrot.slane %v67, 2
    %v69 = vadd.f32 %v67, %v68
    %v70 = vrot.slane %v69, 1
    %v71 = vadd.f32 %v69, %v70
    %v72 = vmul.f32 %v65, 0.0078125
    %v73 = vmul.f32 %v71, 0.0078125
    %v74 = vmul.f32 %v72, %v72
    %v75 = vsub.f32 %v73, %v74
    %v76 = vmax.f32 %v75, 0.0
    %v77 = vadd.f32 %v76, 1e-05
    %v78 = vrsqrt.pop %v77
    %v79 = vmul.f32 %v58, %v78
    %v80 = vmul.f32 %v72, %v79
    %v81 = vsub.f32 %v59, %v80
    %v82 = vld [vmem:[%s0] sm:$0xf]
    %v83 = vld [vmem:[%s0 + $0x4] sm:$0xf]
    %v84 = vld [vmem:[%s0 + $0x8] sm:$0xf]
    %v85 = vld [vmem:[%s0 + $0xc] sm:$0xf]
    %v86 = vld [vmem:[%s0 + $0x10] sm:$0xf]
    %v87 = vld [vmem:[%s0 + $0x14] sm:$0xf]
    %v88 = vld [vmem:[%s0 + $0x18] sm:$0xf]
    %v89 = vld [vmem:[%s0 + $0x1c] sm:$0xf]
    %v90 = vld [vmem:[%s0 + $0x20] sm:$0xf]
    %v91 = vld [vmem:[%s0 + $0x24] sm:$0xf]
    %v92 = vld [vmem:[%s0 + $0x28] sm:$0xf]
    %v93 = vld [vmem:[%s0 + $0x2c] sm:$0xf]
    %v94 = vld [vmem:[%s0 + $0x30] sm:$0xf]
    %v95 = vld [vmem:[%s0 + $0x34] sm:$0xf]
    %v96 = vld [vmem:[%s0 + $0x38] sm:$0xf]
    %v97 = vld [vmem:[%s0 + $0x3c] sm:$0xf]
    %v98 = vunpack.c.l.bf16 %v82
    %v99 = vunpack.c.l.bf16 %v83
    %v100 = vunpack.c.l.bf16 %v84
    %v101 = vunpack.c.l.bf16 %v85
    %v102 = vunpack.c.l.bf16 %v86
    %v103 = vunpack.c.l.bf16 %v87
    %v104 = vunpack.c.l.bf16 %v88
    %v105 = vunpack.c.l.bf16 %v89
    %v106 = vunpack.c.l.bf16 %v90
    %v107 = vunpack.c.l.bf16 %v91
    %v108 = vunpack.c.l.bf16 %v92
    %v109 = vunpack.c.l.bf16 %v93
    %v110 = vunpack.c.l.bf16 %v94
    %v111 = vunpack.c.l.bf16 %v95
    %v112 = vunpack.c.l.bf16 %v96
    %v113 = vunpack.c.l.bf16 %v97
    %v115 = vlaneseq
    %v116 = vshrl.u32 %v115, 7
    %v117 = vsub.s32 0, %v116
    %v118 = vrot.slane %v53, %v117
    %v120 = vmul.f32 %v98, %v118
    %v121 = vmul.f32 %v99, %v118
    %v122 = vmul.f32 %v100, %v118
    %v123 = vmul.f32 %v101, %v118
    %v124 = vmul.f32 %v102, %v118
    %v125 = vmul.f32 %v103, %v118
    %v126 = vmul.f32 %v104, %v118
    %v127 = vmul.f32 %v105, %v118
    %v128 = vmul.f32 %v106, %v118
    %v129 = vmul.f32 %v107, %v118
    %v130 = vmul.f32 %v108, %v118
    %v131 = vmul.f32 %v109, %v118
    %v132 = vmul.f32 %v110, %v118
    %v133 = vmul.f32 %v111, %v118
    %v134 = vmul.f32 %v112, %v118
    %v135 = vmul.f32 %v113, %v118
    %v137 = vlaneseq
    %v138 = vshrl.u32 %v137, 7
    %v139 = vsub.s32 0, %v138
    %v140 = vrot.slane %v55, %v139
    %v142 = vadd.f32 %v120, %v140
    %v143 = vadd.f32 %v121, %v140
    %v144 = vadd.f32 %v122, %v140
    %v145 = vadd.f32 %v123, %v140
    %v146 = vadd.f32 %v124, %v140
    %v147 = vadd.f32 %v125, %v140
    %v148 = vadd.f32 %v126, %v140
    %v149 = vadd.f32 %v127, %v140
    %v150 = vadd.f32 %v128, %v140
    %v151 = vadd.f32 %v129, %v140
    %v152 = vadd.f32 %v130, %v140
    %v153 = vadd.f32 %v131, %v140
    %v154 = vadd.f32 %v132, %v140
    %v155 = vadd.f32 %v133, %v140
    %v156 = vadd.f32 %v134, %v140
    %v157 = vadd.f32 %v135, %v140
    %v158 = vld [vmem:[%s4] sm:$0xf]
    %v159 = vld [vmem:[%s4 + $0x4] sm:$0xf]
    %v160 = vld [vmem:[%s4 + $0x8] sm:$0xf]
    %v161 = vld [vmem:[%s4 + $0xc] sm:$0xf]
    %v162 = vld [vmem:[%s4 + $0x10] sm:$0xf]
    %v163 = vld [vmem:[%s4 + $0x14] sm:$0xf]
    %v164 = vld [vmem:[%s4 + $0x18] sm:$0xf]
    %v165 = vld [vmem:[%s4 + $0x1c] sm:$0xf]
    %v166 = vld [vmem:[%s4 + $0x20] sm:$0xf]
    %v167 = vld [vmem:[%s4 + $0x24] sm:$0xf]
    %v168 = vld [vmem:[%s4 + $0x28] sm:$0xf]
    %v169 = vld [vmem:[%s4 + $0x2c] sm:$0xf]
    %v170 = vld [vmem:[%s4 + $0x30] sm:$0xf]
    %v171 = vld [vmem:[%s4 + $0x34] sm:$0xf]
    %v172 = vld [vmem:[%s4 + $0x38] sm:$0xf]
    %v173 = vld [vmem:[%s4 + $0x3c] sm:$0xf]
    %v174 = vunpack.c.l.bf16 %v158
    %v175 = vunpack.c.l.bf16 %v159
    %v176 = vunpack.c.l.bf16 %v160
    %v177 = vunpack.c.l.bf16 %v161
    %v178 = vunpack.c.l.bf16 %v162
    %v179 = vunpack.c.l.bf16 %v163
    %v180 = vunpack.c.l.bf16 %v164
    %v181 = vunpack.c.l.bf16 %v165
    %v182 = vunpack.c.l.bf16 %v166
    %v183 = vunpack.c.l.bf16 %v167
    %v184 = vunpack.c.l.bf16 %v168
    %v185 = vunpack.c.l.bf16 %v169
    %v186 = vunpack.c.l.bf16 %v170
    %v187 = vunpack.c.l.bf16 %v171
    %v188 = vunpack.c.l.bf16 %v172
    %v189 = vunpack.c.l.bf16 %v173
    %v191 = vlaneseq
    %v192 = vshrl.u32 %v191, 7
    %v193 = vsub.s32 0, %v192
    %v194 = vrot.slane %v79, %v193
    %v196 = vmul.f32 %v174, %v194
    %v197 = vmul.f32 %v175, %v194
    %v198 = vmul.f32 %v176, %v194
    %v199 = vmul.f32 %v177, %v194
    %v200 = vmul.f32 %v178, %v194
    %v201 = vmul.f32 %v179, %v194
    %v202 = vmul.f32 %v180, %v194
    %v203 = vmul.f32 %v181, %v194
    %v204 = vmul.f32 %v182, %v194
    %v205 = vmul.f32 %v183, %v194
    %v206 = vmul.f32 %v184, %v194
    %v207 = vmul.f32 %v185, %v194
    %v208 = vmul.f32 %v186, %v194
    %v209 = vmul.f32 %v187, %v194
    %v210 = vmul.f32 %v188, %v194
    %v211 = vmul.f32 %v189, %v194
    %v213 = vlaneseq
    %v214 = vshrl.u32 %v213, 7
    %v215 = vsub.s32 0, %v214
    %v216 = vrot.slane %v81, %v215
    %v218 = vadd.f32 %v196, %v216
    %v219 = vadd.f32 %v197, %v216
    %v220 = vadd.f32 %v198, %v216
    %v221 = vadd.f32 %v199, %v216
    %v222 = vadd.f32 %v200, %v216
    %v223 = vadd.f32 %v201, %v216
    %v224 = vadd.f32 %v202, %v216
    %v225 = vadd.f32 %v203, %v216
    %v226 = vadd.f32 %v204, %v216
    %v227 = vadd.f32 %v205, %v216
    %v228 = vadd.f32 %v206, %v216
    %v229 = vadd.f32 %v207, %v216
    %v230 = vadd.f32 %v208, %v216
    %v231 = vadd.f32 %v209, %v216
    %v232 = vadd.f32 %v210, %v216
    %v233 = vadd.f32 %v211, %v216
    %v234 = vadd.f32 %v142, %v218
    %v235 = vadd.f32 %v143, %v219
    %v236 = vadd.f32 %v144, %v220
    %v237 = vadd.f32 %v145, %v221
    %v238 = vadd.f32 %v146, %v222
    %v239 = vadd.f32 %v147, %v223
    %v240 = vadd.f32 %v148, %v224
    %v241 = vadd.f32 %v149, %v225
    %v242 = vadd.f32 %v150, %v226
    %v243 = vadd.f32 %v151, %v227
    %v244 = vadd.f32 %v152, %v228
    %v245 = vadd.f32 %v153, %v229
    %v246 = vadd.f32 %v154, %v230
    %v247 = vadd.f32 %v155, %v231
    %v248 = vadd.f32 %v156, %v232
    %v249 = vadd.f32 %v157, %v233
    %v250 = vmax.f32 %v234, 0.0
    %v251 = vmax.f32 %v235, 0.0
    %v252 = vmax.f32 %v236, 0.0
    %v253 = vmax.f32 %v237, 0.0
    %v254 = vmax.f32 %v238, 0.0
    %v255 = vmax.f32 %v239, 0.0
    %v256 = vmax.f32 %v240, 0.0
    %v257 = vmax.f32 %v241, 0.0
    %v258 = vmax.f32 %v242, 0.0
    %v259 = vmax.f32 %v243, 0.0
    %v260 = vmax.f32 %v244, 0.0
    %v261 = vmax.f32 %v245, 0.0
    %v262 = vmax.f32 %v246, 0.0
    %v263 = vmax.f32 %v247, 0.0
    %v264 = vmax.f32 %v248, 0.0
    %v265 = vmax.f32 %v249, 0.0
    %266 = vst [vmem:[#allocation2] sm:$0xff] %v250
    %267 = vst [vmem:[#allocation2 + $0x8] sm:$0xff] %v251
    %268 = vst [vmem:[#allocation2 + $0x10] sm:$0xff] %v252
    %269 = vst [vmem:[#allocation2 + $0x18] sm:$0xff] %v253
    %270 = vst [vmem:[#allocation2 + $0x20] sm:$0xff] %v254
    %271 = vst [vmem:[#allocation2 + $0x28] sm:$0xff] %v255
    %272 = vst [vmem:[#allocation2 + $0x30] sm:$0xff] %v256
    %273 = vst [vmem:[#allocation2 + $0x38] sm:$0xff] %v257
    %274 = vst [vmem:[#allocation2 + $0x40] sm:$0xff] %v258
    %275 = vst [vmem:[#allocation2 + $0x48] sm:$0xff] %v259
    %276 = vst [vmem:[#allocation2 + $0x50] sm:$0xff] %v260
    %277 = vst [vmem:[#allocation2 + $0x58] sm:$0xff] %v261
    %278 = vst [vmem:[#allocation2 + $0x60] sm:$0xff] %v262
    %279 = vst [vmem:[#allocation2 + $0x68] sm:$0xff] %v263
    %280 = vst [vmem:[#allocation2 + $0x70] sm:$0xff] %v264
    %281 = vst [vmem:[#allocation2 + $0x78] sm:$0xff] %v265
    // Predicated region
    $region34: #{bottleneck_forward.11} parent=1 // pred_check
      _
    $region35: #{bottleneck_forward.11} parent=1 // pred_check_branch
      %283 = sbr.rel (0) target = $region37
    $region36: #{bottleneck_forward.11} parent=1 // pred_region
      %s285 = ssub.s32 2048, 2048
      %286 = vsyncadd [#allocation3], %s285
      %s287 = sshll.u32 [#allocation2], 4
      %s288 = int_to_ptr.vmem [resolvable:$true] %s287
      %293 = dma.vmem_to_hbm [thread:$0]  %s288, 2048, %s8, [#allocation3], 128, 128, 8
    $region37: #{bottleneck_forward.11} parent=1 // pred_fallthru
      _
    // Predicated region
    $region38: #{bottleneck_forward.11} parent=1 // pred_check
      _
    $region39: #{bottleneck_forward.11} parent=1 // pred_check_branch
      %295 = sbr.rel (0) target = $region41
    $region40: #{bottleneck_forward.11} parent=1 // pred_region
      %296 = dma.done [#allocation3], 2048
    $region41: #{bottleneck_forward.11} parent=1 // pred_fallthru
      _
    %297 = vsyncpa [#allocation3], 1

</llo_original>
